<compile_context>
chip_gen: v6e
topology: v6e:2x2x1
jax: 0.10.0
libtpu: 0.0.40
codegen_flags: <defaults>
</compile_context>

<pallas_src>
import functools

import jax
import jax.numpy as jnp
from jax.experimental import pallas as pl
from jax.experimental.pallas import tpu as pltpu

_F32 = jnp.float32
_BF16 = jnp.bfloat16

# Explicit scoped-VMEM budget (defaults are 16 MiB on v5e / 32 MiB on v6e,
# physical 128/128/64 MiB); 48 MiB is safe on every generation incl. v7x.
_VMEM_LIMIT = 48 * 1024 * 1024


def _round_up(x, m):
    return ((x + m - 1) // m) * m


def _plan(extent, row_tile, k_tile):
    """Padded extent + contraction-tile for an axis used as rows and as K."""
    if extent > k_tile:
        padded = _round_up(extent, k_tile)
        return padded, k_tile
    padded = _round_up(extent, row_tile)
    return padded, padded            # full-extent contraction block


def _full(shape):
    """BlockSpec for a small, untiled, VMEM-resident operand (weights etc.)."""
    return pl.BlockSpec(shape, lambda *_: (0,) * len(shape))


def _mlp(x_bf16, w1_ref, b1_ref, w2_ref, b2_ref):
    """relu(x@W1+b1)@W2+b2 -- bf16 MXU operands, f32 accumulation, f32 biases."""
    h = jnp.maximum(
        jnp.dot(x_bf16, w1_ref[...], preferred_element_type=_F32) + b1_ref[...],
        0.0)
    return (jnp.dot(h.astype(_BF16), w2_ref[...], preferred_element_type=_F32)
            + b2_ref[...])


# ----------------------------------------------------------------------------
# Kernels
# ----------------------------------------------------------------------------
def _node_mlps_kernel(x_ref,
                      em2_w1, em2_b1, em2_w2, em2_b2,
                      em3_w1d, em3_w1s,
                      n2v_w1, n2v_b1, n2v_w2, n2v_b2,
                      tnd_ref, tns_ref, n2v_ref):
    """Per-node-row MLPs: tn_d, tn_s (reassociated edge_mlp3 layer-1) and n2v."""
    xb = x_ref[...].astype(_BF16)
    tn = _mlp(xb, em2_w1, em2_b1, em2_w2, em2_b2).astype(_BF16)
    tnd_ref[...] = jnp.dot(tn, em3_w1d[...],
                           preferred_element_type=_F32).astype(_BF16)
    tns_ref[...] = jnp.dot(tn, em3_w1s[...],
                           preferred_element_type=_F32).astype(_BF16)
    n2v_ref[...] = _mlp(xb, n2v_w1, n2v_b1, n2v_w2, n2v_b2).astype(_BF16)


def _edge_mlp_kernel(x_ref, w1, b1, w2, b2, te_ref):
    """Per-hyperedge-row MLP: te = node_mlp1(edge_features)."""
    te_ref[...] = _mlp(x_ref[...].astype(_BF16), w1, b1, w2, b2).astype(_BF16)


def _virtual_kernel(vnm_ref, n2v_ref, vn_ref, sup_ref,
                    hv2v_w1, hv2v_b1, hv2v_w2, hv2v_b2,
                    v2hv_w1, v2hv_b1, v2hv_w2, v2hv_b2,
                    v2n_w1, v2n_b1, v2n_w2, v2n_b2,
                    o_vn, o_sup, o_v2n):
    """Virtual-node path.  Grid = contraction over N ("arbitrary").

    The tiny once-only computations (super node, v2n, hv) are guarded with
    pl.when(k == 0); the vn accumulation into the resident output block runs
    every step.
    """
    k = pl.program_id(0)

    @pl.when(k == 0)
    def _():
        vn_bf = vn_ref[...].astype(_BF16)
        # super node: sum_v MLP(vn)_v == (sum_v relu(vn@W1+b1)) @ W2 + V*b2 (exact)
        hsum = jnp.sum(
            jnp.maximum(
                jnp.dot(vn_bf, v2hv_w1[...], preferred_element_type=_F32)
                + v2hv_b1[...], 0.0),
            axis=0, keepdims=True)
        o_sup[...] = (jnp.dot(hsum.astype(_BF16), v2hv_w2[...],
                              preferred_element_type=_F32)
                      + vn_ref.shape[0] * v2hv_b2[...])
        # virtual -> node features (consumed by the node-update kernel)
        o_v2n[...] = _mlp(vn_bf, v2n_w1, v2n_b1, v2n_w2, v2n_b2).astype(_BF16)
        # init the vn accumulator with higher_virtual_to_virtual(super_vn)
        hv = _mlp(sup_ref[...].astype(_BF16), hv2v_w1, hv2v_b1, hv2v_w2, hv2v_b2)
        o_vn[...] = jnp.broadcast_to(hv, o_vn.shape)

    o_vn[...] += jnp.dot(vnm_ref[...], n2v_ref[...],
                         preferred_element_type=_F32)


def _edge_update_kernel(drv_ref, snk_ref, tnd_ref, tns_ref,
                        em3_b1, em3_w2, em3_b2,
                        o_edge, acc_ref):
    """Edge update.  Grid = (E row tiles "parallel", N contraction "arbitrary")."""
    k = pl.program_id(1)

    @pl.when(k == 0)
    def _():
        acc_ref[...] = jnp.zeros_like(acc_ref)

    acc_ref[...] += (
        jnp.dot(drv_ref[...], tnd_ref[...], preferred_element_type=_F32)
        + jnp.dot(snk_ref[...], tns_ref[...], preferred_element_type=_F32))

    @pl.when(k == pl.num_programs(1) - 1)
    def _():
        h = jnp.maximum(acc_ref[...] + em3_b1[...], 0.0).astype(_BF16)
        o_edge[...] = (jnp.dot(h, em3_w2[...], preferred_element_type=_F32)
                       + em3_b2[...])


def _node_update_kernel(inc_ref, te_ref, vnt_ref, v2n_ref, o_node):
    """Node update.  Grid = (N row tiles "parallel", E contraction "arbitrary").

    The output block is resident across the contraction axis and is used
    directly as the f32 accumulator; vn_matrix is pre-transposed host-side so
    no in-kernel XLU transpose is needed.
    """
    k = pl.program_id(1)

    @pl.when(k == 0)
    def _():
        o_node[...] = jnp.dot(vnt_ref[...], v2n_ref[...],
                              preferred_element_type=_F32)

    o_node[...] += jnp.dot(inc_ref[...], te_ref[...],
                           preferred_element_type=_F32)


# ----------------------------------------------------------------------------
# Wrapper
# ----------------------------------------------------------------------------
def dehnn_forward(node_features, edge_features, vn_features, super_vn_features,
                  incidence, driver, sink, vn_matrix, params,
                  *, row_tile=256, k_tile=512):
    assert row_tile % 16 == 0, "bf16 sublane packing wants 16-row multiples"
    assert k_tile % 128 == 0 and k_tile % row_tile == 0

    N, Dn = node_features.shape
    E, De = edge_features.shape
    V, Dv = vn_features.shape
    H = params["node_mlp1"][0].shape[1]

    N_pad, ktN = _plan(N, row_tile, k_tile)
    E_pad, ktE = _plan(E, row_tile, k_tile)
    n_row, e_row = N_pad // row_tile, E_pad // row_tile
    kN, kE = N_pad // ktN, E_pad // ktE

    def pad2(a, r, c):
        return jnp.pad(a, ((0, r - a.shape[0]), (0, c - a.shape[1])))

    node_p = pad2(node_features.astype(_F32), N_pad, Dn)
    edge_p = pad2(edge_features.astype(_F32), E_pad, De)
    sup = super_vn_features.reshape(1, Dv).astype(_F32)

    # 0/1 connectivity (exact in bf16); vn_matrix additionally pre-transposed.
    inc_bf = pad2(incidence, N_pad, E_pad).astype(_BF16)
    drv_bf = pad2(driver, E_pad, N_pad).astype(_BF16)
    snk_bf = pad2(sink, E_pad, N_pad).astype(_BF16)
    vnm_bf = pad2(vn_matrix, V, N_pad).astype(_BF16)
    vnt_bf = pad2(vn_matrix.T, N_pad, V).astype(_BF16)

    def wb(w):                       # matmul weights -> bf16 (biases stay f32)
        return w.astype(_BF16)

    nm1_w1, nm1_b1, nm1_w2, nm1_b2 = params["node_mlp1"]
    em2_w1, em2_b1, em2_w2, em2_b2 = params["edge_mlp2"]
    em3_w1, em3_b1, em3_w2, em3_b2 = params["edge_mlp3"]
    n2v_w1, n2v_b1, n2v_w2, n2v_b2 = params["node_to_virtual_mlp"]
    v2hv_w1, v2hv_b1, v2hv_w2, v2hv_b2 = params["virtual_to_higher_virtual_mlp"]
    hv2v_w1, hv2v_b1, hv2v_w2, hv2v_b2 = params["higher_virtual_to_virtual_mlp"]
    v2n_w1, v2n_b1, v2n_w2, v2n_b2 = params["virtual_to_node_mlp"]
    em3_w1d, em3_w1s = em3_w1[:Dn], em3_w1[Dn:]   # pre-split: no in-kernel concat

    cp_rows = pltpu.CompilerParams(dimension_semantics=("parallel",),
                                   vmem_limit_bytes=_VMEM_LIMIT)
    cp_red = pltpu.CompilerParams(dimension_semantics=("arbitrary",),
                                  vmem_limit_bytes=_VMEM_LIMIT)
    cp_2d = pltpu.CompilerParams(dimension_semantics=("parallel", "arbitrary"),
                                 vmem_limit_bytes=_VMEM_LIMIT)

    # --- 1. node-row MLPs: tn_d, tn_s, n2v (bf16 to HBM) --------------------
    tnd, tns, n2v = pl.pallas_call(
        _node_mlps_kernel,
        grid=(n_row,),
        in_specs=[pl.BlockSpec((row_tile, Dn), lambda i: (i, 0)),
                  _full((Dn, H)), _full((1, H)), _full((H, Dn)), _full((1, Dn)),
                  _full((Dn, H)), _full((Dn, H)),
                  _full((Dn, H)), _full((1, H)), _full((H, Dv)), _full((1, Dv))],
        out_specs=(pl.BlockSpec((row_tile, H), lambda i: (i, 0)),
                   pl.BlockSpec((row_tile, H), lambda i: (i, 0)),
                   pl.BlockSpec((row_tile, Dv), lambda i: (i, 0))),
        out_shape=(jax.ShapeDtypeStruct((N_pad, H), _BF16),
                   jax.ShapeDtypeStruct((N_pad, H), _BF16),
                   jax.ShapeDtypeStruct((N_pad, Dv), _BF16)),
        compiler_params=cp_rows,
    )(node_p,
      wb(em2_w1), em2_b1, wb(em2_w2), em2_b2,
      wb(em3_w1d), wb(em3_w1s),
      wb(n2v_w1), n2v_b1, wb(n2v_w2), n2v_b2)

    # --- 2. edge-row MLP: te -------------------------------------------------
    te = pl.pallas_call(
        _edge_mlp_kernel,
        grid=(e_row,),
        in_specs=[pl.BlockSpec((row_tile, De), lambda i: (i, 0)),
                  _full((De, H)), _full((1, H)), _full((H, De)), _full((1, De))],
        out_specs=pl.BlockSpec((row_tile, De), lambda i: (i, 0)),
        out_shape=jax.ShapeDtypeStruct((E_pad, De), _BF16),
        compiler_params=cp_rows,
    )(edge_p, wb(nm1_w1), nm1_b1, wb(nm1_w2), nm1_b2)

    # --- 3. virtual-node path (vn update, super node, v2n) ------------------
    vn_upd, sup_upd, v2n = pl.pallas_call(
        _virtual_kernel,
        grid=(kN,),
        in_specs=[pl.BlockSpec((V, ktN), lambda k: (0, k)),
                  pl.BlockSpec((ktN, Dv), lambda k: (k, 0)),
                  _full((V, Dv)), _full((1, Dv)),
                  _full((Dv, H)), _full((1, H)), _full((H, Dv)), _full((1, Dv)),
                  _full((Dv, H)), _full((1, H)), _full((H, Dv)), _full((1, Dv)),
                  _full((Dv, H)), _full((1, H)), _full((H, De)), _full((1, De))],
        out_specs=(pl.BlockSpec((V, Dv), lambda k: (0, 0)),
                   pl.BlockSpec((1, Dv), lambda k: (0, 0)),
                   pl.BlockSpec((V, De), lambda k: (0, 0))),
        out_shape=(jax.ShapeDtypeStruct((V, Dv), _F32),
                   jax.ShapeDtypeStruct((1, Dv), _F32),
                   jax.ShapeDtypeStruct((V, De), _BF16)),
        compiler_params=cp_red,
    )(vnm_bf, n2v, vn_features.astype(_F32), sup,
      wb(hv2v_w1), hv2v_b1, wb(hv2v_w2), hv2v_b2,
      wb(v2hv_w1), v2hv_b1, wb(v2hv_w2), v2hv_b2,
      wb(v2n_w1), v2n_b1, wb(v2n_w2), v2n_b2)

    # --- 4. edge update (contraction over N, accumulator scratch) ------------
    edge_upd = pl.pallas_call(
        _edge_update_kernel,
        grid=(e_row, kN),
        in_specs=[pl.BlockSpec((row_tile, ktN), lambda i, k: (i, k)),
                  pl.BlockSpec((row_tile, ktN), lambda i, k: (i, k)),
                  pl.BlockSpec((ktN, H), lambda i, k: (k, 0)),
                  pl.BlockSpec((ktN, H), lambda i, k: (k, 0)),
                  _full((1, H)), _full((H, 2 * Dn)), _full((1, 2 * Dn))],
        out_specs=pl.BlockSpec((row_tile, 2 * Dn), lambda i, k: (i, 0)),
        out_shape=jax.ShapeDtypeStruct((E_pad, 2 * Dn), _F32),
        scratch_shapes=[pltpu.VMEM((row_tile, H), _F32)],
        compiler_params=cp_2d,
    )(drv_bf, snk_bf, tnd, tns, em3_b1, wb(em3_w2), em3_b2)

    # --- 5. node update (contraction over E, resident output accumulator) ----
    node_upd = pl.pallas_call(
        _node_update_kernel,
        grid=(n_row, kE),
        in_specs=[pl.BlockSpec((row_tile, ktE), lambda i, k: (i, k)),
                  pl.BlockSpec((ktE, De), lambda i, k: (k, 0)),
                  pl.BlockSpec((row_tile, V), lambda i, k: (i, 0)),
                  pl.BlockSpec((V, De), lambda i, k: (0, 0))],
        out_specs=pl.BlockSpec((row_tile, De), lambda i, k: (i, 0)),
        out_shape=jax.ShapeDtypeStruct((N_pad, De), _F32),
        compiler_params=cp_2d,
    )(inc_bf, te, vnt_bf, v2n)

    return node_upd[:N], edge_upd[:E], vn_upd, sup_upd.reshape(-1)


# ----------------------------------------------------------------------------
# Deterministic parameter init + pure-JAX f32 reference
# ----------------------------------------------------------------------------
def _init_linear(key, fan_in, fan_out):
    kw, kb = jax.random.split(key)
    bound = 1.0 / jnp.sqrt(jnp.float32(fan_in))
    w = jax.random.uniform(kw, (fan_in, fan_out), _F32, -bound, bound)
    b = jax.random.uniform(kb, (1, fan_out), _F32, -bound, bound)
    return w, b


def _init_mlp(key, d_in, d_hidden, d_out):
    k1, k2 = jax.random.split(key)
    w1, b1 = _init_linear(k1, d_in, d_hidden)
    w2, b2 = _init_linear(k2, d_hidden, d_out)
    return (w1, b1, w2, b2)


def _mlp_ref(x, p):
    w1, b1, w2, b2 = p
    return jnp.maximum(x @ w1 + b1, 0.0) @ w2 + b2


def reference_forward(node_features, edge_features, vn_features,
                      super_vn_features, incidence, driver, sink, vn_matrix,
                      params):
    te = _mlp_ref(edge_features, params["node_mlp1"])
    updated_node = incidence @ te
    tn = _mlp_ref(node_features, params["edge_mlp2"])
    drv = driver @ tn
    snk = sink @ tn
    updated_edge = _mlp_ref(jnp.concatenate([drv, snk], axis=1),
                            params["edge_mlp3"])
    n2v = _mlp_ref(node_features, params["node_to_virtual_mlp"])
    updated_vn = vn_matrix @ n2v
    updated_vn = updated_vn + _mlp_ref(super_vn_features.reshape(1, -1),
                                       params["higher_virtual_to_virtual_mlp"])
    v2hv = _mlp_ref(vn_features, params["virtual_to_higher_virtual_mlp"])
    updated_super = jnp.sum(v2hv, axis=0)
    v2n = _mlp_ref(vn_features, params["virtual_to_node_mlp"])
    updated_node = updated_node + vn_matrix.T @ v2n
    return updated_node, updated_edge, updated_vn, updated_super


# ----------------------------------------------------------------------------
if __name__ == "__main__":
    key = jax.random.PRNGKey(0)
    # Sizes chosen so the contraction grids have >1 step (exercises the
    # pl.when init / accumulate / finalize paths) while staying small.
    N, E, V = 192, 160, 5          # nodes, hyperedges, virtual nodes
    Dn, De, Dv, H = 16, 16, 8, 32  # node_in, edge_in, vn, hidden features

    keys = jax.random.split(key, 16)
    params = {
        "node_mlp1": _init_mlp(keys[0], De, H, De),
        "edge_mlp2": _init_mlp(keys[1], Dn, H, Dn),
        "edge_mlp3": _init_mlp(keys[2], 2 * Dn, H, 2 * Dn),
        "node_to_virtual_mlp": _init_mlp(keys[3], Dn, H, Dv),
        "virtual_to_higher_virtual_mlp": _init_mlp(keys[4], Dv, H, Dv),
        "higher_virtual_to_virtual_mlp": _init_mlp(keys[5], Dv, H, Dv),
        "virtual_to_node_mlp": _init_mlp(keys[6], Dv, H, De),
    }

    node_features = jax.random.normal(keys[7], (N, Dn), _F32)
    edge_features = jax.random.normal(keys[8], (E, De), _F32)
    vn_features = jax.random.normal(keys[9], (V, Dv), _F32)
    super_vn_features = jax.random.normal(keys[10], (Dv,), _F32)

    # dense 0/1 hypergraph connectivity matrices
    incidence = (jax.random.uniform(keys[11], (N, E)) < 0.3).astype(_F32)
    driver = (jax.random.uniform(keys[12], (E, N)) < 0.1).astype(_F32)
    sink = (jax.random.uniform(keys[13], (E, N)) < 0.3).astype(_F32)
    vn_matrix = (jax.random.uniform(keys[14], (V, N)) < 0.5).astype(_F32)

    # Small tiles here so the row grids and the contraction (k) grids have
    # multiple steps at toy scale; production defaults are 256 / 512.
    fwd = jax.jit(functools.partial(dehnn_forward, row_tile=16, k_tile=128))
    outs = fwd(node_features, edge_features, vn_features, super_vn_features,
               incidence, driver, sink, vn_matrix, params)
    outs = jax.block_until_ready(outs)

    refs = reference_forward(node_features, edge_features, vn_features,
                             super_vn_features, incidence, driver, sink,
                             vn_matrix, params)
    names = ["updated_node", "updated_edge", "updated_vn", "updated_super_vn"]
    # Tolerance accounts for bf16 MXU operands (weights, activations and 0/1
    # connectivity) with f32 accumulation everywhere.
    for name, o, r in zip(names, outs, refs):
        assert o.shape == r.shape, (name, o.shape, r.shape)
        assert jnp.allclose(o, r, atol=5e-2, rtol=5e-2), name

    print("KERNEL_OK")
</pallas_src>

<mosaic_0001>
module attributes {stable_mosaic.version = 11 : i64} {
  func.func @_edge_update_kernel(%arg0: i32, %arg1: i32, %arg2: memref<16x128xbf16, #tpu.memory_space<vmem>>, %arg3: memref<16x128xbf16, #tpu.memory_space<vmem>>, %arg4: memref<128x32xbf16, #tpu.memory_space<vmem>>, %arg5: memref<128x32xbf16, #tpu.memory_space<vmem>>, %arg6: memref<1x32xf32, #tpu.memory_space<vmem>>, %arg7: memref<32x32xbf16, #tpu.memory_space<vmem>>, %arg8: memref<1x32xf32, #tpu.memory_space<vmem>>, %arg9: memref<16x32xf32, #tpu.memory_space<vmem>>, %arg10: memref<16x32xf32, #tpu.memory_space<vmem>>) attributes {dimension_semantics = [#tpu.dimension_semantics<parallel>, #tpu.dimension_semantics<arbitrary>], iteration_bounds = array<i64: 16, 2>, scalar_prefetch = 0 : i64, scratch_operands = 1 : i64, tpu.core_type = #tpu.core_type<tc>, window_params = [{transform_indices = @transform_0, window_bounds = array<i64: 16, 128>}, {transform_indices = @transform_1, window_bounds = array<i64: 16, 128>}, {transform_indices = @transform_2, window_bounds = array<i64: 128, 32>}, {transform_indices = @transform_3, window_bounds = array<i64: 128, 32>}, {pipeline_mode = #tpu.pipeline_mode<synchronous>, transform_indices = @transform_4, window_bounds = array<i64: 1, 32>}, {pipeline_mode = #tpu.pipeline_mode<synchronous>, transform_indices = @transform_5, window_bounds = array<i64: 32, 32>}, {pipeline_mode = #tpu.pipeline_mode<synchronous>, transform_indices = @transform_6, window_bounds = array<i64: 1, 32>}, {transform_indices = @transform_7, window_bounds = array<i64: 16, 32>}]} {
    %c0_i32 = arith.constant 0 : i32
    %0 = arith.cmpi eq, %arg1, %c0_i32 : i32
    %1 = arith.extui %0 : i1 to i32
    %c0_i32_0 = arith.constant 0 : i32
    %2 = arith.cmpi ne, %1, %c0_i32_0 : i32
    scf.if %2 {
      %cst_14 = arith.constant 0.000000e+00 : f32
      %16 = vector.broadcast %cst_14 : f32 to vector<16x32xf32>
      %c0_15 = arith.constant 0 : index
      %c0_16 = arith.constant 0 : index
      %17 = vector.load %arg10[%c0_15, %c0_16] : memref<16x32xf32, #tpu.memory_space<vmem>>, vector<16x32xf32>
      tpu.vector_store %arg10[%c0_15, %c0_16], %16 {strides = array<i32>} : memref<16x32xf32, #tpu.memory_space<vmem>>, vector<16x32xf32>,
    } else {
    }
    %c0 = arith.constant 0 : index
    %c0_1 = arith.constant 0 : index
    %3 = vector.load %arg10[%c0, %c0_1] : memref<16x32xf32, #tpu.memory_space<vmem>>, vector<16x32xf32>
    %c0_2 = arith.constant 0 : index
    %c0_3 = arith.constant 0 : index
    %4 = vector.load %arg2[%c0_2, %c0_3] : memref<16x128xbf16, #tpu.memory_space<vmem>>, vector<16x128xbf16>
    %c0_4 = arith.constant 0 : index
    %c0_5 = arith.constant 0 : index
    %5 = vector.load %arg4[%c0_4, %c0_5] : memref<128x32xbf16, #tpu.memory_space<vmem>>, vector<128x32xbf16>
    %cst = arith.constant dense<0.000000e+00> : vector<16x32xf32>
    %6 = tpu.matmul %4, %5, %cst {dimension_numbers = #tpu.dot_dimension_numbers<[1], [0], [0], [1], [0, 0, 1, 1], [], []>} : vector<16x128xbf16>, vector<128x32xbf16>, vector<16x32xf32> -> vector<16x32xf32>
    %c0_6 = arith.constant 0 : index
    %c0_7 = arith.constant 0 : index
    %7 = vector.load %arg3[%c0_6, %c0_7] : memref<16x128xbf16, #tpu.memory_space<vmem>>, vector<16x128xbf16>
    %c0_8 = arith.constant 0 : index
    %c0_9 = arith.constant 0 : index
    %8 = vector.load %arg5[%c0_8, %c0_9] : memref<128x32xbf16, #tpu.memory_space<vmem>>, vector<128x32xbf16>
    %cst_10 = arith.constant dense<0.000000e+00> : vector<16x32xf32>
    %9 = tpu.matmul %7, %8, %cst_10 {dimension_numbers = #tpu.dot_dimension_numbers<[1], [0], [0], [1], [0, 0, 1, 1], [], []>} : vector<16x128xbf16>, vector<128x32xbf16>, vector<16x32xf32> -> vector<16x32xf32>
    %10 = arith.addf %6, %9 : vector<16x32xf32>
    %11 = arith.addf %3, %10 : vector<16x32xf32>
    %c0_11 = arith.constant 0 : index
    %c0_12 = arith.constant 0 : index
    %12 = vector.load %arg10[%c0_11, %c0_12] : memref<16x32xf32, #tpu.memory_space<vmem>>, vector<16x32xf32>
    tpu.vector_store %arg10[%c0_11, %c0_12], %11 {strides = array<i32>} : memref<16x32xf32, #tpu.memory_space<vmem>>, vector<16x32xf32>,
    %c1_i32 = arith.constant 1 : i32
    %13 = arith.cmpi eq, %arg1, %c1_i32 : i32
    %14 = arith.extui %13 : i1 to i32
    %c0_i32_13 = arith.constant 0 : i32
    %15 = arith.cmpi ne, %14, %c0_i32_13 : i32
    scf.if %15 {
      %c0_14 = arith.constant 0 : index
      %c0_15 = arith.constant 0 : index
      %16 = vector.load %arg10[%c0_14, %c0_15] : memref<16x32xf32, #tpu.memory_space<vmem>>, vector<16x32xf32>
      %c0_16 = arith.constant 0 : index
      %c0_17 = arith.constant 0 : index
      %17 = vector.load %arg6[%c0_16, %c0_17] : memref<1x32xf32, #tpu.memory_space<vmem>>, vector<1x32xf32>
      %18 = vector.broadcast %17 : vector<1x32xf32> to vector<16x32xf32>
      %19 = arith.addf %16, %18 : vector<16x32xf32>
      %cst_18 = arith.constant 0.000000e+00 : f32
      %20 = vector.broadcast %cst_18 : f32 to vector<16x32xf32>
      %21 = arith.maximumf %19, %20 : vector<16x32xf32>
      %22 = arith.truncf %21 : vector<16x32xf32> to vector<16x32xbf16>
      %c0_19 = arith.constant 0 : index
      %c0_20 = arith.constant 0 : index
      %23 = vector.load %arg7[%c0_19, %c0_20] : memref<32x32xbf16, #tpu.memory_space<vmem>>, vector<32x32xbf16>
      %cst_21 = arith.constant dense<0.000000e+00> : vector<16x32xf32>
      %24 = tpu.matmul %22, %23, %cst_21 {dimension_numbers = #tpu.dot_dimension_numbers<[1], [0], [0], [1], [0, 0, 1, 1], [], []>} : vector<16x32xbf16>, vector<32x32xbf16>, vector<16x32xf32> -> vector<16x32xf32>
      %c0_22 = arith.constant 0 : index
      %c0_23 = arith.constant 0 : index
      %25 = vector.load %arg8[%c0_22, %c0_23] : memref<1x32xf32, #tpu.memory_space<vmem>>, vector<1x32xf32>
      %26 = vector.broadcast %25 : vector<1x32xf32> to vector<16x32xf32>
      %27 = arith.addf %24, %26 : vector<16x32xf32>
      %c0_24 = arith.constant 0 : index
      %c0_25 = arith.constant 0 : index
      %28 = vector.load %arg9[%c0_24, %c0_25] : memref<16x32xf32, #tpu.memory_space<vmem>>, vector<16x32xf32>
      tpu.vector_store %arg9[%c0_24, %c0_25], %27 {strides = array<i32>} : memref<16x32xf32, #tpu.memory_space<vmem>>, vector<16x32xf32>,
    } else {
    }
    return
  }
  func.func @transform_0(%arg0: i32, %arg1: i32) -> (i32, i32) {
    %c0_i32 = arith.constant 0 : i32
    return %arg0, %arg1 : i32, i32
  }
  func.func @transform_1(%arg0: i32, %arg1: i32) -> (i32, i32) {
    %c0_i32 = arith.constant 0 : i32
    return %arg0, %arg1 : i32, i32
  }
  func.func @transform_2(%arg0: i32, %arg1: i32) -> (i32, i32) {
    %c0_i32 = arith.constant 0 : i32
    %c0_i32_0 = arith.constant 0 : i32
    return %arg1, %c0_i32 : i32, i32
  }
  func.func @transform_3(%arg0: i32, %arg1: i32) -> (i32, i32) {
    %c0_i32 = arith.constant 0 : i32
    %c0_i32_0 = arith.constant 0 : i32
    return %arg1, %c0_i32 : i32, i32
  }
  func.func @transform_4(%arg0: i32, %arg1: i32) -> (i32, i32) {
    %c0_i32 = arith.constant 0 : i32
    %c0_i32_0 = arith.constant 0 : i32
    %c0_i32_1 = arith.constant 0 : i32
    return %c0_i32, %c0_i32_0 : i32, i32
  }
  func.func @transform_5(%arg0: i32, %arg1: i32) -> (i32, i32) {
    %c0_i32 = arith.constant 0 : i32
    %c0_i32_0 = arith.constant 0 : i32
    %c0_i32_1 = arith.constant 0 : i32
    return %c0_i32, %c0_i32_0 : i32, i32
  }
  func.func @transform_6(%arg0: i32, %arg1: i32) -> (i32, i32) {
    %c0_i32 = arith.constant 0 : i32
    %c0_i32_0 = arith.constant 0 : i32
    %c0_i32_1 = arith.constant 0 : i32
    return %c0_i32, %c0_i32_0 : i32, i32
  }
  func.func @transform_7(%arg0: i32, %arg1: i32) -> (i32, i32) {
    %c0_i32 = arith.constant 0 : i32
    %c0_i32_0 = arith.constant 0 : i32
    return %arg0, %c0_i32 : i32, i32
  }
}

module attributes {stable_mosaic.version = 11 : i64} {
  func.func @_node_mlps_kernel(%arg0: i32, %arg1: memref<16x16xf32, #tpu.memory_space<vmem>>, %arg2: memref<16x32xbf16, #tpu.memory_space<vmem>>, %arg3: memref<1x32xf32, #tpu.memory_space<vmem>>, %arg4: memref<32x16xbf16, #tpu.memory_space<vmem>>, %arg5: memref<1x16xf32, #tpu.memory_space<vmem>>, %arg6: memref<16x32xbf16, #tpu.memory_space<vmem>>, %arg7: memref<16x32xbf16, #tpu.memory_space<vmem>>, %arg8: memref<16x32xbf16, #tpu.memory_space<vmem>>, %arg9: memref<1x32xf32, #tpu.memory_space<vmem>>, %arg10: memref<32x8xbf16, #tpu.memory_space<vmem>>, %arg11: memref<1x8xf32, #tpu.memory_space<vmem>>, %arg12: memref<16x32xbf16, #tpu.memory_space<vmem>>, %arg13: memref<16x32xbf16, #tpu.memory_space<vmem>>, %arg14: memref<16x8xbf16, #tpu.memory_space<vmem>>) attributes {dimension_semantics = [#tpu.dimension_semantics<parallel>], iteration_bounds = array<i64: 16>, scalar_prefetch = 0 : i64, scratch_operands = 0 : i64, tpu.core_type = #tpu.core_type<tc>, window_params = [{transform_indices = @transform_0, window_bounds = array<i64: 16, 16>}, {pipeline_mode = #tpu.pipeline_mode<synchronous>, transform_indices = @transform_1, window_bounds = array<i64: 16, 32>}, {pipeline_mode = #tpu.pipeline_mode<synchronous>, transform_indices = @transform_2, window_bounds = array<i64: 1, 32>}, {pipeline_mode = #tpu.pipeline_mode<synchronous>, transform_indices = @transform_3, window_bounds = array<i64: 32, 16>}, {pipeline_mode = #tpu.pipeline_mode<synchronous>, transform_indices = @transform_4, window_bounds = array<i64: 1, 16>}, {pipeline_mode = #tpu.pipeline_mode<synchronous>, transform_indices = @transform_5, window_bounds = array<i64: 16, 32>}, {pipeline_mode = #tpu.pipeline_mode<synchronous>, transform_indices = @transform_6, window_bounds = array<i64: 16, 32>}, {pipeline_mode = #tpu.pipeline_mode<synchronous>, transform_indices = @transform_7, window_bounds = array<i64: 16, 32>}, {pipeline_mode = #tpu.pipeline_mode<synchronous>, transform_indices = @transform_8, window_bounds = array<i64: 1, 32>}, {pipeline_mode = #tpu.pipeline_mode<synchronous>, transform_indices = @transform_9, window_bounds = array<i64: 32, 8>}, {pipeline_mode = #tpu.pipeline_mode<synchronous>, transform_indices = @transform_10, window_bounds = array<i64: 1, 8>}, {transform_indices = @transform_11, window_bounds = array<i64: 16, 32>}, {transform_indices = @transform_12, window_bounds = array<i64: 16, 32>}, {transform_indices = @transform_13, window_bounds = array<i64: 16, 8>}]} {
    %c0 = arith.constant 0 : index
    %c0_0 = arith.constant 0 : index
    %0 = vector.load %arg1[%c0, %c0_0] : memref<16x16xf32, #tpu.memory_space<vmem>>, vector<16x16xf32>
    %1 = arith.truncf %0 : vector<16x16xf32> to vector<16x16xbf16>
    %c0_1 = arith.constant 0 : index
    %c0_2 = arith.constant 0 : index
    %2 = vector.load %arg2[%c0_1, %c0_2] : memref<16x32xbf16, #tpu.memory_space<vmem>>, vector<16x32xbf16>
    %cst = arith.constant dense<0.000000e+00> : vector<16x32xf32>
    %3 = tpu.matmul %1, %2, %cst {dimension_numbers = #tpu.dot_dimension_numbers<[1], [0], [0], [1], [0, 0, 1, 1], [], []>} : vector<16x16xbf16>, vector<16x32xbf16>, vector<16x32xf32> -> vector<16x32xf32>
    %c0_3 = arith.constant 0 : index
    %c0_4 = arith.constant 0 : index
    %4 = vector.load %arg3[%c0_3, %c0_4] : memref<1x32xf32, #tpu.memory_space<vmem>>, vector<1x32xf32>
    %5 = vector.broadcast %4 : vector<1x32xf32> to vector<16x32xf32>
    %6 = arith.addf %3, %5 : vector<16x32xf32>
    %cst_5 = arith.constant 0.000000e+00 : f32
    %7 = vector.broadcast %cst_5 : f32 to vector<16x32xf32>
    %8 = arith.maximumf %6, %7 : vector<16x32xf32>
    %9 = arith.truncf %8 : vector<16x32xf32> to vector<16x32xbf16>
    %c0_6 = arith.constant 0 : index
    %c0_7 = arith.constant 0 : index
    %10 = vector.load %arg4[%c0_6, %c0_7] : memref<32x16xbf16, #tpu.memory_space<vmem>>, vector<32x16xbf16>
    %cst_8 = arith.constant dense<0.000000e+00> : vector<16x16xf32>
    %11 = tpu.matmul %9, %10, %cst_8 {dimension_numbers = #tpu.dot_dimension_numbers<[1], [0], [0], [1], [0, 0, 1, 1], [], []>} : vector<16x32xbf16>, vector<32x16xbf16>, vector<16x16xf32> -> vector<16x16xf32>
    %c0_9 = arith.constant 0 : index
    %c0_10 = arith.constant 0 : index
    %12 = vector.load %arg5[%c0_9, %c0_10] : memref<1x16xf32, #tpu.memory_space<vmem>>, vector<1x16xf32>
    %13 = vector.broadcast %12 : vector<1x16xf32> to vector<16x16xf32>
    %14 = arith.addf %11, %13 : vector<16x16xf32>
    %15 = arith.truncf %14 : vector<16x16xf32> to vector<16x16xbf16>
    %c0_11 = arith.constant 0 : index
    %c0_12 = arith.constant 0 : index
    %16 = vector.load %arg6[%c0_11, %c0_12] : memref<16x32xbf16, #tpu.memory_space<vmem>>, vector<16x32xbf16>
    %cst_13 = arith.constant dense<0.000000e+00> : vector<16x32xf32>
    %17 = tpu.matmul %15, %16, %cst_13 {dimension_numbers = #tpu.dot_dimension_numbers<[1], [0], [0], [1], [0, 0, 1, 1], [], []>} : vector<16x16xbf16>, vector<16x32xbf16>, vector<16x32xf32> -> vector<16x32xf32>
    %18 = arith.truncf %17 : vector<16x32xf32> to vector<16x32xbf16>
    %c0_14 = arith.constant 0 : index
    %c0_15 = arith.constant 0 : index
    %19 = vector.load %arg12[%c0_14, %c0_15] : memref<16x32xbf16, #tpu.memory_space<vmem>>, vector<16x32xbf16>
    tpu.vector_store %arg12[%c0_14, %c0_15], %18 {strides = array<i32>} : memref<16x32xbf16, #tpu.memory_space<vmem>>, vector<16x32xbf16>,
    %c0_16 = arith.constant 0 : index
    %c0_17 = arith.constant 0 : index
    %20 = vector.load %arg7[%c0_16, %c0_17] : memref<16x32xbf16, #tpu.memory_space<vmem>>, vector<16x32xbf16>
    %cst_18 = arith.constant dense<0.000000e+00> : vector<16x32xf32>
    %21 = tpu.matmul %15, %20, %cst_18 {dimension_numbers = #tpu.dot_dimension_numbers<[1], [0], [0], [1], [0, 0, 1, 1], [], []>} : vector<16x16xbf16>, vector<16x32xbf16>, vector<16x32xf32> -> vector<16x32xf32>
    %22 = arith.truncf %21 : vector<16x32xf32> to vector<16x32xbf16>
    %c0_19 = arith.constant 0 : index
    %c0_20 = arith.constant 0 : index
    %23 = vector.load %arg13[%c0_19, %c0_20] : memref<16x32xbf16, #tpu.memory_space<vmem>>, vector<16x32xbf16>
    tpu.vector_store %arg13[%c0_19, %c0_20], %22 {strides = array<i32>} : memref<16x32xbf16, #tpu.memory_space<vmem>>, vector<16x32xbf16>,
    %c0_21 = arith.constant 0 : index
    %c0_22 = arith.constant 0 : index
    %24 = vector.load %arg8[%c0_21, %c0_22] : memref<16x32xbf16, #tpu.memory_space<vmem>>, vector<16x32xbf16>
    %cst_23 = arith.constant dense<0.000000e+00> : vector<16x32xf32>
    %25 = tpu.matmul %1, %24, %cst_23 {dimension_numbers = #tpu.dot_dimension_numbers<[1], [0], [0], [1], [0, 0, 1, 1], [], []>} : vector<16x16xbf16>, vector<16x32xbf16>, vector<16x32xf32> -> vector<16x32xf32>
    %c0_24 = arith.constant 0 : index
    %c0_25 = arith.constant 0 : index
    %26 = vector.load %arg9[%c0_24, %c0_25] : memref<1x32xf32, #tpu.memory_space<vmem>>, vector<1x32xf32>
    %27 = vector.broadcast %26 : vector<1x32xf32> to vector<16x32xf32>
    %28 = arith.addf %25, %27 : vector<16x32xf32>
    %cst_26 = arith.constant 0.000000e+00 : f32
    %29 = vector.broadcast %cst_26 : f32 to vector<16x32xf32>
    %30 = arith.maximumf %28, %29 : vector<16x32xf32>
    %31 = arith.truncf %30 : vector<16x32xf32> to vector<16x32xbf16>
    %c0_27 = arith.constant 0 : index
    %c0_28 = arith.constant 0 : index
    %32 = vector.load %arg10[%c0_27, %c0_28] : memref<32x8xbf16, #tpu.memory_space<vmem>>, vector<32x8xbf16>
    %cst_29 = arith.constant dense<0.000000e+00> : vector<16x8xf32>
    %33 = tpu.matmul %31, %32, %cst_29 {dimension_numbers = #tpu.dot_dimension_numbers<[1], [0], [0], [1], [0, 0, 1, 1], [], []>} : vector<16x32xbf16>, vector<32x8xbf16>, vector<16x8xf32> -> vector<16x8xf32>
    %c0_30 = arith.constant 0 : index
    %c0_31 = arith.constant 0 : index
    %34 = vector.load %arg11[%c0_30, %c0_31] : memref<1x8xf32, #tpu.memory_space<vmem>>, vector<1x8xf32>
    %35 = vector.broadcast %34 : vector<1x8xf32> to vector<16x8xf32>
    %36 = arith.addf %33, %35 : vector<16x8xf32>
    %37 = arith.truncf %36 : vector<16x8xf32> to vector<16x8xbf16>
    %c0_32 = arith.constant 0 : index
    %c0_33 = arith.constant 0 : index
    %38 = vector.load %arg14[%c0_32, %c0_33] : memref<16x8xbf16, #tpu.memory_space<vmem>>, vector<16x8xbf16>
    tpu.vector_store %arg14[%c0_32, %c0_33], %37 {strides = array<i32>} : memref<16x8xbf16, #tpu.memory_space<vmem>>, vector<16x8xbf16>,
    return
  }
  func.func @transform_0(%arg0: i32) -> (i32, i32) {
    %c0_i32 = arith.constant 0 : i32
    %c0_i32_0 = arith.constant 0 : i32
    return %arg0, %c0_i32 : i32, i32
  }
  func.func @transform_1(%arg0: i32) -> (i32, i32) {
    %c0_i32 = arith.constant 0 : i32
    %c0_i32_0 = arith.constant 0 : i32
    %c0_i32_1 = arith.constant 0 : i32
    return %c0_i32, %c0_i32_0 : i32, i32
  }
  func.func @transform_2(%arg0: i32) -> (i32, i32) {
    %c0_i32 = arith.constant 0 : i32
    %c0_i32_0 = arith.constant 0 : i32
    %c0_i32_1 = arith.constant 0 : i32
    return %c0_i32, %c0_i32_0 : i32, i32
  }
  func.func @transform_3(%arg0: i32) -> (i32, i32) {
    %c0_i32 = arith.constant 0 : i32
    %c0_i32_0 = arith.constant 0 : i32
    %c0_i32_1 = arith.constant 0 : i32
    return %c0_i32, %c0_i32_0 : i32, i32
  }
  func.func @transform_4(%arg0: i32) -> (i32, i32) {
    %c0_i32 = arith.constant 0 : i32
    %c0_i32_0 = arith.constant 0 : i32
    %c0_i32_1 = arith.constant 0 : i32
    return %c0_i32, %c0_i32_0 : i32, i32
  }
  func.func @transform_5(%arg0: i32) -> (i32, i32) {
    %c0_i32 = arith.constant 0 : i32
    %c0_i32_0 = arith.constant 0 : i32
    %c0_i32_1 = arith.constant 0 : i32
    return %c0_i32, %c0_i32_0 : i32, i32
  }
  func.func @transform_6(%arg0: i32) -> (i32, i32) {
    %c0_i32 = arith.constant 0 : i32
    %c0_i32_0 = arith.constant 0 : i32
    %c0_i32_1 = arith.constant 0 : i32
    return %c0_i32, %c0_i32_0 : i32, i32
  }
  func.func @transform_7(%arg0: i32) -> (i32, i32) {
    %c0_i32 = arith.constant 0 : i32
    %c0_i32_0 = arith.constant 0 : i32
    %c0_i32_1 = arith.constant 0 : i32
    return %c0_i32, %c0_i32_0 : i32, i32
  }
  func.func @transform_8(%arg0: i32) -> (i32, i32) {
    %c0_i32 = arith.constant 0 : i32
    %c0_i32_0 = arith.constant 0 : i32
    %c0_i32_1 = arith.constant 0 : i32
    return %c0_i32, %c0_i32_0 : i32, i32
  }
  func.func @transform_9(%arg0: i32) -> (i32, i32) {
    %c0_i32 = arith.constant 0 : i32
    %c0_i32_0 = arith.constant 0 : i32
    %c0_i32_1 = arith.constant 0 : i32
    return %c0_i32, %c0_i32_0 : i32, i32
  }
  func.func @transform_10(%arg0: i32) -> (i32, i32) {
    %c0_i32 = arith.constant 0 : i32
    %c0_i32_0 = arith.constant 0 : i32
    %c0_i32_1 = arith.constant 0 : i32
    return %c0_i32, %c0_i32_0 : i32, i32
  }
  func.func @transform_11(%arg0: i32) -> (i32, i32) {
    %c0_i32 = arith.constant 0 : i32
    %c0_i32_0 = arith.constant 0 : i32
    return %arg0, %c0_i32 : i32, i32
  }
  func.func @transform_12(%arg0: i32) -> (i32, i32) {
    %c0_i32 = arith.constant 0 : i32
    %c0_i32_0 = arith.constant 0 : i32
    return %arg0, %c0_i32 : i32, i32
  }
  func.func @transform_13(%arg0: i32) -> (i32, i32) {
    %c0_i32 = arith.constant 0 : i32
    %c0_i32_0 = arith.constant 0 : i32
    return %arg0, %c0_i32 : i32, i32
  }
}

module attributes {stable_mosaic.version = 11 : i64} {
  func.func @_virtual_kernel(%arg0: i32, %arg1: memref<5x128xbf16, #tpu.memory_space<vmem>>, %arg2: memref<128x8xbf16, #tpu.memory_space<vmem>>, %arg3: memref<5x8xf32, #tpu.memory_space<vmem>>, %arg4: memref<1x8xf32, #tpu.memory_space<vmem>>, %arg5: memref<8x32xbf16, #tpu.memory_space<vmem>>, %arg6: memref<1x32xf32, #tpu.memory_space<vmem>>, %arg7: memref<32x8xbf16, #tpu.memory_space<vmem>>, %arg8: memref<1x8xf32, #tpu.memory_space<vmem>>, %arg9: memref<8x32xbf16, #tpu.memory_space<vmem>>, %arg10: memref<1x32xf32, #tpu.memory_space<vmem>>, %arg11: memref<32x8xbf16, #tpu.memory_space<vmem>>, %arg12: memref<1x8xf32, #tpu.memory_space<vmem>>, %arg13: memref<8x32xbf16, #tpu.memory_space<vmem>>, %arg14: memref<1x32xf32, #tpu.memory_space<vmem>>, %arg15: memref<32x16xbf16, #tpu.memory_space<vmem>>, %arg16: memref<1x16xf32, #tpu.memory_space<vmem>>, %arg17: memref<5x8xf32, #tpu.memory_space<vmem>>, %arg18: memref<1x8xf32, #tpu.memory_space<vmem>>, %arg19: memref<5x16xbf16, #tpu.memory_space<vmem>>) attributes {dimension_semantics = [#tpu.dimension_semantics<arbitrary>], iteration_bounds = array<i64: 2>, scalar_prefetch = 0 : i64, scratch_operands = 0 : i64, tpu.core_type = #tpu.core_type<tc>, window_params = [{transform_indices = @transform_0, window_bounds = array<i64: 5, 128>}, {transform_indices = @transform_1, window_bounds = array<i64: 128, 8>}, {pipeline_mode = #tpu.pipeline_mode<synchronous>, transform_indices = @transform_2, window_bounds = array<i64: 5, 8>}, {pipeline_mode = #tpu.pipeline_mode<synchronous>, transform_indices = @transform_3, window_bounds = array<i64: 1, 8>}, {pipeline_mode = #tpu.pipeline_mode<synchronous>, transform_indices = @transform_4, window_bounds = array<i64: 8, 32>}, {pipeline_mode = #tpu.pipeline_mode<synchronous>, transform_indices = @transform_5, window_bounds = array<i64: 1, 32>}, {pipeline_mode = #tpu.pipeline_mode<synchronous>, transform_indices = @transform_6, window_bounds = array<i64: 32, 8>}, {pipeline_mode = #tpu.pipeline_mode<synchronous>, transform_indices = @transform_7, window_bounds = array<i64: 1, 8>}, {pipeline_mode = #tpu.pipeline_mode<synchronous>, transform_indices = @transform_8, window_bounds = array<i64: 8, 32>}, {pipeline_mode = #tpu.pipeline_mode<synchronous>, transform_indices = @transform_9, window_bounds = array<i64: 1, 32>}, {pipeline_mode = #tpu.pipeline_mode<synchronous>, transform_indices = @transform_10, window_bounds = array<i64: 32, 8>}, {pipeline_mode = #tpu.pipeline_mode<synchronous>, transform_indices = @transform_11, window_bounds = array<i64: 1, 8>}, {pipeline_mode = #tpu.pipeline_mode<synchronous>, transform_indices = @transform_12, window_bounds = array<i64: 8, 32>}, {pipeline_mode = #tpu.pipeline_mode<synchronous>, transform_indices = @transform_13, window_bounds = array<i64: 1, 32>}, {pipeline_mode = #tpu.pipeline_mode<synchronous>, transform_indices = @transform_14, window_bounds = array<i64: 32, 16>}, {pipeline_mode = #tpu.pipeline_mode<synchronous>, transform_indices = @transform_15, window_bounds = array<i64: 1, 16>}, {pipeline_mode = #tpu.pipeline_mode<synchronous>, transform_indices = @transform_16, window_bounds = array<i64: 5, 8>}, {pipeline_mode = #tpu.pipeline_mode<synchronous>, transform_indices = @transform_17, window_bounds = array<i64: 1, 8>}, {pipeline_mode = #tpu.pipeline_mode<synchronous>, transform_indices = @transform_18, window_bounds = array<i64: 5, 16>}]} {
    %c0_i32 = arith.constant 0 : i32
    %0 = arith.cmpi eq, %arg0, %c0_i32 : i32
    %1 = arith.extui %0 : i1 to i32
    %c0_i32_0 = arith.constant 0 : i32
    %2 = arith.cmpi ne, %1, %c0_i32_0 : i32
    scf.if %2 {
      %c0_8 = arith.constant 0 : index
      %c0_9 = arith.constant 0 : index
      %9 = vector.load %arg3[%c0_8, %c0_9] : memref<5x8xf32, #tpu.memory_space<vmem>>, vector<5x8xf32>
      %10 = arith.truncf %9 : vector<5x8xf32> to vector<5x8xbf16>
      %c0_10 = arith.constant 0 : index
      %c0_11 = arith.constant 0 : index
      %11 = vector.load %arg9[%c0_10, %c0_11] : memref<8x32xbf16, #tpu.memory_space<vmem>>, vector<8x32xbf16>
      %cst_12 = arith.constant dense<0.000000e+00> : vector<5x32xf32>
      %12 = tpu.matmul %10, %11, %cst_12 {dimension_numbers = #tpu.dot_dimension_numbers<[1], [0], [0], [1], [0, 0, 1, 1], [], []>} : vector<5x8xbf16>, vector<8x32xbf16>, vector<5x32xf32> -> vector<5x32xf32>
      %c0_13 = arith.constant 0 : index
      %c0_14 = arith.constant 0 : index
      %13 = vector.load %arg10[%c0_13, %c0_14] : memref<1x32xf32, #tpu.memory_space<vmem>>, vector<1x32xf32>
      %14 = vector.broadcast %13 : vector<1x32xf32> to vector<5x32xf32>
      %15 = arith.addf %12, %14 : vector<5x32xf32>
      %cst_15 = arith.constant 0.000000e+00 : f32
      %16 = vector.broadcast %cst_15 : f32 to vector<5x32xf32>
      %17 = arith.maximumf %15, %16 : vector<5x32xf32>
      %cst_16 = arith.constant dense<0.000000e+00> : vector<32xf32>
      %18 = vector.multi_reduction <add>, %17, %cst_16 [0] : vector<5x32xf32> to vector<32xf32>
      %19 = vector.shape_cast %18 : vector<32xf32> to vector<1x32xf32>
      %20 = arith.truncf %19 : vector<1x32xf32> to vector<1x32xbf16>
      %c0_17 = arith.constant 0 : index
      %c0_18 = arith.constant 0 : index
      %21 = vector.load %arg11[%c0_17, %c0_18] : memref<32x8xbf16, #tpu.memory_space<vmem>>, vector<32x8xbf16>
      %cst_19 = arith.constant dense<0.000000e+00> : vector<1x8xf32>
      %22 = tpu.matmul %20, %21, %cst_19 {dimension_numbers = #tpu.dot_dimension_numbers<[1], [0], [0], [1], [0, 0, 1, 1], [], []>} : vector<1x32xbf16>, vector<32x8xbf16>, vector<1x8xf32> -> vector<1x8xf32>
      %c0_20 = arith.constant 0 : index
      %c0_21 = arith.constant 0 : index
      %23 = vector.load %arg12[%c0_20, %c0_21] : memref<1x8xf32, #tpu.memory_space<vmem>>, vector<1x8xf32>
      %cst_22 = arith.constant 5.000000e+00 : f32
      %24 = vector.broadcast %cst_22 : f32 to vector<1x8xf32>
      %25 = arith.mulf %24, %23 : vector<1x8xf32>
      %26 = arith.addf %22, %25 : vector<1x8xf32>
      %c0_23 = arith.constant 0 : index
      %c0_24 = arith.constant 0 : index
      %27 = vector.load %arg18[%c0_23, %c0_24] : memref<1x8xf32, #tpu.memory_space<vmem>>, vector<1x8xf32>
      tpu.vector_store %arg18[%c0_23, %c0_24], %26 {strides = array<i32>} : memref<1x8xf32, #tpu.memory_space<vmem>>, vector<1x8xf32>,
      %c0_25 = arith.constant 0 : index
      %c0_26 = arith.constant 0 : index
      %28 = vector.load %arg13[%c0_25, %c0_26] : memref<8x32xbf16, #tpu.memory_space<vmem>>, vector<8x32xbf16>
      %cst_27 = arith.constant dense<0.000000e+00> : vector<5x32xf32>
      %29 = tpu.matmul %10, %28, %cst_27 {dimension_numbers = #tpu.dot_dimension_numbers<[1], [0], [0], [1], [0, 0, 1, 1], [], []>} : vector<5x8xbf16>, vector<8x32xbf16>, vector<5x32xf32> -> vector<5x32xf32>
      %c0_28 = arith.constant 0 : index
      %c0_29 = arith.constant 0 : index
      %30 = vector.load %arg14[%c0_28, %c0_29] : memref<1x32xf32, #tpu.memory_space<vmem>>, vector<1x32xf32>
      %31 = vector.broadcast %30 : vector<1x32xf32> to vector<5x32xf32>
      %32 = arith.addf %29, %31 : vector<5x32xf32>
      %cst_30 = arith.constant 0.000000e+00 : f32
      %33 = vector.broadcast %cst_30 : f32 to vector<5x32xf32>
      %34 = arith.maximumf %32, %33 : vector<5x32xf32>
      %35 = arith.truncf %34 : vector<5x32xf32> to vector<5x32xbf16>
      %c0_31 = arith.constant 0 : index
      %c0_32 = arith.constant 0 : index
      %36 = vector.load %arg15[%c0_31, %c0_32] : memref<32x16xbf16, #tpu.memory_space<vmem>>, vector<32x16xbf16>
      %cst_33 = arith.constant dense<0.000000e+00> : vector<5x16xf32>
      %37 = tpu.matmul %35, %36, %cst_33 {dimension_numbers = #tpu.dot_dimension_numbers<[1], [0], [0], [1], [0, 0, 1, 1], [], []>} : vector<5x32xbf16>, vector<32x16xbf16>, vector<5x16xf32> -> vector<5x16xf32>
      %c0_34 = arith.constant 0 : index
      %c0_35 = arith.constant 0 : index
      %38 = vector.load %arg16[%c0_34, %c0_35] : memref<1x16xf32, #tpu.memory_space<vmem>>, vector<1x16xf32>
      %39 = vector.broadcast %38 : vector<1x16xf32> to vector<5x16xf32>
      %40 = arith.addf %37, %39 : vector<5x16xf32>
      %41 = arith.truncf %40 : vector<5x16xf32> to vector<5x16xbf16>
      %c0_36 = arith.constant 0 : index
      %c0_37 = arith.constant 0 : index
      %42 = vector.load %arg19[%c0_36, %c0_37] : memref<5x16xbf16, #tpu.memory_space<vmem>>, vector<5x16xbf16>
      tpu.vector_store %arg19[%c0_36, %c0_37], %41 {strides = array<i32>} : memref<5x16xbf16, #tpu.memory_space<vmem>>, vector<5x16xbf16>,
      %c0_38 = arith.constant 0 : index
      %c0_39 = arith.constant 0 : index
      %43 = vector.load %arg4[%c0_38, %c0_39] : memref<1x8xf32, #tpu.memory_space<vmem>>, vector<1x8xf32>
      %44 = arith.truncf %43 : vector<1x8xf32> to vector<1x8xbf16>
      %c0_40 = arith.constant 0 : index
      %c0_41 = arith.constant 0 : index
      %45 = vector.load %arg5[%c0_40, %c0_41] : memref<8x32xbf16, #tpu.memory_space<vmem>>, vector<8x32xbf16>
      %cst_42 = arith.constant dense<0.000000e+00> : vector<1x32xf32>
      %46 = tpu.matmul %44, %45, %cst_42 {dimension_numbers = #tpu.dot_dimension_numbers<[1], [0], [0], [1], [0, 0, 1, 1], [], []>} : vector<1x8xbf16>, vector<8x32xbf16>, vector<1x32xf32> -> vector<1x32xf32>
      %c0_43 = arith.constant 0 : index
      %c0_44 = arith.constant 0 : index
      %47 = vector.load %arg6[%c0_43, %c0_44] : memref<1x32xf32, #tpu.memory_space<vmem>>, vector<1x32xf32>
      %48 = arith.addf %46, %47 : vector<1x32xf32>
      %cst_45 = arith.constant 0.000000e+00 : f32
      %49 = vector.broadcast %cst_45 : f32 to vector<1x32xf32>
      %50 = arith.maximumf %48, %49 : vector<1x32xf32>
      %51 = arith.truncf %50 : vector<1x32xf32> to vector<1x32xbf16>
      %c0_46 = arith.constant 0 : index
      %c0_47 = arith.constant 0 : index
      %52 = vector.load %arg7[%c0_46, %c0_47] : memref<32x8xbf16, #tpu.memory_space<vmem>>, vector<32x8xbf16>
      %cst_48 = arith.constant dense<0.000000e+00> : vector<1x8xf32>
      %53 = tpu.matmul %51, %52, %cst_48 {dimension_numbers = #tpu.dot_dimension_numbers<[1], [0], [0], [1], [0, 0, 1, 1], [], []>} : vector<1x32xbf16>, vector<32x8xbf16>, vector<1x8xf32> -> vector<1x8xf32>
      %c0_49 = arith.constant 0 : index
      %c0_50 = arith.constant 0 : index
      %54 = vector.load %arg8[%c0_49, %c0_50] : memref<1x8xf32, #tpu.memory_space<vmem>>, vector<1x8xf32>
      %55 = arith.addf %53, %54 : vector<1x8xf32>
      %56 = vector.shape_cast %55 : vector<1x8xf32> to vector<1x8xf32>
      %57 = vector.broadcast %56 : vector<1x8xf32> to vector<5x8xf32>
      %c0_51 = arith.constant 0 : index
      %c0_52 = arith.constant 0 : index
      %58 = vector.load %arg17[%c0_51, %c0_52] : memref<5x8xf32, #tpu.memory_space<vmem>>, vector<5x8xf32>
      tpu.vector_store %arg17[%c0_51, %c0_52], %57 {strides = array<i32>} : memref<5x8xf32, #tpu.memory_space<vmem>>, vector<5x8xf32>,
    } else {
    }
    %c0 = arith.constant 0 : index
    %c0_1 = arith.constant 0 : index
    %3 = vector.load %arg17[%c0, %c0_1] : memref<5x8xf32, #tpu.memory_space<vmem>>, vector<5x8xf32>
    %c0_2 = arith.constant 0 : index
    %c0_3 = arith.constant 0 : index
    %4 = vector.load %arg1[%c0_2, %c0_3] : memref<5x128xbf16, #tpu.memory_space<vmem>>, vector<5x128xbf16>
    %c0_4 = arith.constant 0 : index
    %c0_5 = arith.constant 0 : index
    %5 = vector.load %arg2[%c0_4, %c0_5] : memref<128x8xbf16, #tpu.memory_space<vmem>>, vector<128x8xbf16>
    %cst = arith.constant dense<0.000000e+00> : vector<5x8xf32>
    %6 = tpu.matmul %4, %5, %cst {dimension_numbers = #tpu.dot_dimension_numbers<[1], [0], [0], [1], [0, 0, 1, 1], [], []>} : vector<5x128xbf16>, vector<128x8xbf16>, vector<5x8xf32> -> vector<5x8xf32>
    %7 = arith.addf %3, %6 : vector<5x8xf32>
    %c0_6 = arith.constant 0 : index
    %c0_7 = arith.constant 0 : index
    %8 = vector.load %arg17[%c0_6, %c0_7] : memref<5x8xf32, #tpu.memory_space<vmem>>, vector<5x8xf32>
    tpu.vector_store %arg17[%c0_6, %c0_7], %7 {strides = array<i32>} : memref<5x8xf32, #tpu.memory_space<vmem>>, vector<5x8xf32>,
    return
  }
  func.func @transform_0(%arg0: i32) -> (i32, i32) {
    %c0_i32 = arith.constant 0 : i32
    %c0_i32_0 = arith.constant 0 : i32
    return %c0_i32, %arg0 : i32, i32
  }
  func.func @transform_1(%arg0: i32) -> (i32, i32) {
    %c0_i32 = arith.constant 0 : i32
    %c0_i32_0 = arith.constant 0 : i32
    return %arg0, %c0_i32 : i32, i32
  }
  func.func @transform_2(%arg0: i32) -> (i32, i32) {
    %c0_i32 = arith.constant 0 : i32
    %c0_i32_0 = arith.constant 0 : i32
    %c0_i32_1 = arith.constant 0 : i32
    return %c0_i32, %c0_i32_0 : i32, i32
  }
  func.func @transform_3(%arg0: i32) -> (i32, i32) {
    %c0_i32 = arith.constant 0 : i32
    %c0_i32_0 = arith.constant 0 : i32
    %c0_i32_1 = arith.constant 0 : i32
    return %c0_i32, %c0_i32_0 : i32, i32
  }
  func.func @transform_4(%arg0: i32) -> (i32, i32) {
    %c0_i32 = arith.constant 0 : i32
    %c0_i32_0 = arith.constant 0 : i32
    %c0_i32_1 = arith.constant 0 : i32
    return %c0_i32, %c0_i32_0 : i32, i32
  }
  func.func @transform_5(%arg0: i32) -> (i32, i32) {
    %c0_i32 = arith.constant 0 : i32
    %c0_i32_0 = arith.constant 0 : i32
    %c0_i32_1 = arith.constant 0 : i32
    return %c0_i32, %c0_i32_0 : i32, i32
  }
  func.func @transform_6(%arg0: i32) -> (i32, i32) {
    %c0_i32 = arith.constant 0 : i32
    %c0_i32_0 = arith.constant 0 : i32
    %c0_i32_1 = arith.constant 0 : i32
    return %c0_i32, %c0_i32_0 : i32, i32
  }
  func.func @transform_7(%arg0: i32) -> (i32, i32) {
    %c0_i32 = arith.constant 0 : i32
    %c0_i32_0 = arith.constant 0 : i32
    %c0_i32_1 = arith.constant 0 : i32
    return %c0_i32, %c0_i32_0 : i32, i32
  }
  func.func @transform_8(%arg0: i32) -> (i32, i32) {
    %c0_i32 = arith.constant 0 : i32
    %c0_i32_0 = arith.constant 0 : i32
    %c0_i32_1 = arith.constant 0 : i32
    return %c0_i32, %c0_i32_0 : i32, i32
  }
  func.func @transform_9(%arg0: i32) -> (i32, i32) {
    %c0_i32 = arith.constant 0 : i32
    %c0_i32_0 = arith.constant 0 : i32
    %c0_i32_1 = arith.constant 0 : i32
    return %c0_i32, %c0_i32_0 : i32, i32
  }
  func.func @transform_10(%arg0: i32) -> (i32, i32) {
    %c0_i32 = arith.constant 0 : i32
    %c0_i32_0 = arith.constant 0 : i32
    %c0_i32_1 = arith.constant 0 : i32
    return %c0_i32, %c0_i32_0 : i32, i32
  }
  func.func @transform_11(%arg0: i32) -> (i32, i32) {
    %c0_i32 = arith.constant 0 : i32
    %c0_i32_0 = arith.constant 0 : i32
    %c0_i32_1 = arith.constant 0 : i32
    return %c0_i32, %c0_i32_0 : i32, i32
  }
  func.func @transform_12(%arg0: i32) -> (i32, i32) {
    %c0_i32 = arith.constant 0 : i32
    %c0_i32_0 = arith.constant 0 : i32
    %c0_i32_1 = arith.constant 0 : i32
    return %c0_i32, %c0_i32_0 : i32, i32
  }
  func.func @transform_13(%arg0: i32) -> (i32, i32) {
    %c0_i32 = arith.constant 0 : i32
    %c0_i32_0 = arith.constant 0 : i32
    %c0_i32_1 = arith.constant 0 : i32
    return %c0_i32, %c0_i32_0 : i32, i32
  }
  func.func @transform_14(%arg0: i32) -> (i32, i32) {
    %c0_i32 = arith.constant 0 : i32
    %c0_i32_0 = arith.constant 0 : i32
    %c0_i32_1 = arith.constant 0 : i32
    return %c0_i32, %c0_i32_0 : i32, i32
  }
  func.func @transform_15(%arg0: i32) -> (i32, i32) {
    %c0_i32 = arith.constant 0 : i32
    %c0_i32_0 = arith.constant 0 : i32
    %c0_i32_1 = arith.constant 0 : i32
    return %c0_i32, %c0_i32_0 : i32, i32
  }
  func.func @transform_16(%arg0: i32) -> (i32, i32) {
    %c0_i32 = arith.constant 0 : i32
    %c0_i32_0 = arith.constant 0 : i32
    %c0_i32_1 = arith.constant 0 : i32
    return %c0_i32, %c0_i32_0 : i32, i32
  }
  func.func @transform_17(%arg0: i32) -> (i32, i32) {
    %c0_i32 = arith.constant 0 : i32
    %c0_i32_0 = arith.constant 0 : i32
    %c0_i32_1 = arith.constant 0 : i32
    return %c0_i32, %c0_i32_0 : i32, i32
  }
  func.func @transform_18(%arg0: i32) -> (i32, i32) {
    %c0_i32 = arith.constant 0 : i32
    %c0_i32_0 = arith.constant 0 : i32
    %c0_i32_1 = arith.constant 0 : i32
    return %c0_i32, %c0_i32_0 : i32, i32
  }
}

module attributes {stable_mosaic.version = 11 : i64} {
  func.func @_edge_mlp_kernel(%arg0: i32, %arg1: memref<16x16xf32, #tpu.memory_space<vmem>>, %arg2: memref<16x32xbf16, #tpu.memory_space<vmem>>, %arg3: memref<1x32xf32, #tpu.memory_space<vmem>>, %arg4: memref<32x16xbf16, #tpu.memory_space<vmem>>, %arg5: memref<1x16xf32, #tpu.memory_space<vmem>>, %arg6: memref<16x16xbf16, #tpu.memory_space<vmem>>) attributes {dimension_semantics = [#tpu.dimension_semantics<parallel>], iteration_bounds = array<i64: 16>, scalar_prefetch = 0 : i64, scratch_operands = 0 : i64, tpu.core_type = #tpu.core_type<tc>, window_params = [{transform_indices = @transform_0, window_bounds = array<i64: 16, 16>}, {pipeline_mode = #tpu.pipeline_mode<synchronous>, transform_indices = @transform_1, window_bounds = array<i64: 16, 32>}, {pipeline_mode = #tpu.pipeline_mode<synchronous>, transform_indices = @transform_2, window_bounds = array<i64: 1, 32>}, {pipeline_mode = #tpu.pipeline_mode<synchronous>, transform_indices = @transform_3, window_bounds = array<i64: 32, 16>}, {pipeline_mode = #tpu.pipeline_mode<synchronous>, transform_indices = @transform_4, window_bounds = array<i64: 1, 16>}, {transform_indices = @transform_5, window_bounds = array<i64: 16, 16>}]} {
    %c0 = arith.constant 0 : index
    %c0_0 = arith.constant 0 : index
    %0 = vector.load %arg1[%c0, %c0_0] : memref<16x16xf32, #tpu.memory_space<vmem>>, vector<16x16xf32>
    %1 = arith.truncf %0 : vector<16x16xf32> to vector<16x16xbf16>
    %c0_1 = arith.constant 0 : index
    %c0_2 = arith.constant 0 : index
    %2 = vector.load %arg2[%c0_1, %c0_2] : memref<16x32xbf16, #tpu.memory_space<vmem>>, vector<16x32xbf16>
    %cst = arith.constant dense<0.000000e+00> : vector<16x32xf32>
    %3 = tpu.matmul %1, %2, %cst {dimension_numbers = #tpu.dot_dimension_numbers<[1], [0], [0], [1], [0, 0, 1, 1], [], []>} : vector<16x16xbf16>, vector<16x32xbf16>, vector<16x32xf32> -> vector<16x32xf32>
    %c0_3 = arith.constant 0 : index
    %c0_4 = arith.constant 0 : index
    %4 = vector.load %arg3[%c0_3, %c0_4] : memref<1x32xf32, #tpu.memory_space<vmem>>, vector<1x32xf32>
    %5 = vector.broadcast %4 : vector<1x32xf32> to vector<16x32xf32>
    %6 = arith.addf %3, %5 : vector<16x32xf32>
    %cst_5 = arith.constant 0.000000e+00 : f32
    %7 = vector.broadcast %cst_5 : f32 to vector<16x32xf32>
    %8 = arith.maximumf %6, %7 : vector<16x32xf32>
    %9 = arith.truncf %8 : vector<16x32xf32> to vector<16x32xbf16>
    %c0_6 = arith.constant 0 : index
    %c0_7 = arith.constant 0 : index
    %10 = vector.load %arg4[%c0_6, %c0_7] : memref<32x16xbf16, #tpu.memory_space<vmem>>, vector<32x16xbf16>
    %cst_8 = arith.constant dense<0.000000e+00> : vector<16x16xf32>
    %11 = tpu.matmul %9, %10, %cst_8 {dimension_numbers = #tpu.dot_dimension_numbers<[1], [0], [0], [1], [0, 0, 1, 1], [], []>} : vector<16x32xbf16>, vector<32x16xbf16>, vector<16x16xf32> -> vector<16x16xf32>
    %c0_9 = arith.constant 0 : index
    %c0_10 = arith.constant 0 : index
    %12 = vector.load %arg5[%c0_9, %c0_10] : memref<1x16xf32, #tpu.memory_space<vmem>>, vector<1x16xf32>
    %13 = vector.broadcast %12 : vector<1x16xf32> to vector<16x16xf32>
    %14 = arith.addf %11, %13 : vector<16x16xf32>
    %15 = arith.truncf %14 : vector<16x16xf32> to vector<16x16xbf16>
    %c0_11 = arith.constant 0 : index
    %c0_12 = arith.constant 0 : index
    %16 = vector.load %arg6[%c0_11, %c0_12] : memref<16x16xbf16, #tpu.memory_space<vmem>>, vector<16x16xbf16>
    tpu.vector_store %arg6[%c0_11, %c0_12], %15 {strides = array<i32>} : memref<16x16xbf16, #tpu.memory_space<vmem>>, vector<16x16xbf16>,
    return
  }
  func.func @transform_0(%arg0: i32) -> (i32, i32) {
    %c0_i32 = arith.constant 0 : i32
    %c0_i32_0 = arith.constant 0 : i32
    return %arg0, %c0_i32 : i32, i32
  }
  func.func @transform_1(%arg0: i32) -> (i32, i32) {
    %c0_i32 = arith.constant 0 : i32
    %c0_i32_0 = arith.constant 0 : i32
    %c0_i32_1 = arith.constant 0 : i32
    return %c0_i32, %c0_i32_0 : i32, i32
  }
  func.func @transform_2(%arg0: i32) -> (i32, i32) {
    %c0_i32 = arith.constant 0 : i32
    %c0_i32_0 = arith.constant 0 : i32
    %c0_i32_1 = arith.constant 0 : i32
    return %c0_i32, %c0_i32_0 : i32, i32
  }
  func.func @transform_3(%arg0: i32) -> (i32, i32) {
    %c0_i32 = arith.constant 0 : i32
    %c0_i32_0 = arith.constant 0 : i32
    %c0_i32_1 = arith.constant 0 : i32
    return %c0_i32, %c0_i32_0 : i32, i32
  }
  func.func @transform_4(%arg0: i32) -> (i32, i32) {
    %c0_i32 = arith.constant 0 : i32
    %c0_i32_0 = arith.constant 0 : i32
    %c0_i32_1 = arith.constant 0 : i32
    return %c0_i32, %c0_i32_0 : i32, i32
  }
  func.func @transform_5(%arg0: i32) -> (i32, i32) {
    %c0_i32 = arith.constant 0 : i32
    %c0_i32_0 = arith.constant 0 : i32
    return %arg0, %c0_i32 : i32, i32
  }
}

module attributes {stable_mosaic.version = 11 : i64} {
  func.func @_node_update_kernel(%arg0: i32, %arg1: i32, %arg2: memref<16x128xbf16, #tpu.memory_space<vmem>>, %arg3: memref<128x16xbf16, #tpu.memory_space<vmem>>, %arg4: memref<16x5xbf16, #tpu.memory_space<vmem>>, %arg5: memref<5x16xbf16, #tpu.memory_space<vmem>>, %arg6: memref<16x16xf32, #tpu.memory_space<vmem>>) attributes {dimension_semantics = [#tpu.dimension_semantics<parallel>, #tpu.dimension_semantics<arbitrary>], iteration_bounds = array<i64: 16, 2>, scalar_prefetch = 0 : i64, scratch_operands = 0 : i64, tpu.core_type = #tpu.core_type<tc>, window_params = [{transform_indices = @transform_0, window_bounds = array<i64: 16, 128>}, {transform_indices = @transform_1, window_bounds = array<i64: 128, 16>}, {transform_indices = @transform_2, window_bounds = array<i64: 16, 5>}, {pipeline_mode = #tpu.pipeline_mode<synchronous>, transform_indices = @transform_3, window_bounds = array<i64: 5, 16>}, {transform_indices = @transform_4, window_bounds = array<i64: 16, 16>}]} {
    %c0_i32 = arith.constant 0 : i32
    %0 = arith.cmpi eq, %arg1, %c0_i32 : i32
    %1 = arith.extui %0 : i1 to i32
    %c0_i32_0 = arith.constant 0 : i32
    %2 = arith.cmpi ne, %1, %c0_i32_0 : i32
    scf.if %2 {
      %c0_8 = arith.constant 0 : index
      %c0_9 = arith.constant 0 : index
      %9 = vector.load %arg4[%c0_8, %c0_9] : memref<16x5xbf16, #tpu.memory_space<vmem>>, vector<16x5xbf16>
      %c0_10 = arith.constant 0 : index
      %c0_11 = arith.constant 0 : index
      %10 = vector.load %arg5[%c0_10, %c0_11] : memref<5x16xbf16, #tpu.memory_space<vmem>>, vector<5x16xbf16>
      %cst_12 = arith.constant dense<0.000000e+00> : vector<16x16xf32>
      %11 = tpu.matmul %9, %10, %cst_12 {dimension_numbers = #tpu.dot_dimension_numbers<[1], [0], [0], [1], [0, 0, 1, 1], [], []>} : vector<16x5xbf16>, vector<5x16xbf16>, vector<16x16xf32> -> vector<16x16xf32>
      %c0_13 = arith.constant 0 : index
      %c0_14 = arith.constant 0 : index
      %12 = vector.load %arg6[%c0_13, %c0_14] : memref<16x16xf32, #tpu.memory_space<vmem>>, vector<16x16xf32>
      tpu.vector_store %arg6[%c0_13, %c0_14], %11 {strides = array<i32>} : memref<16x16xf32, #tpu.memory_space<vmem>>, vector<16x16xf32>,
    } else {
    }
    %c0 = arith.constant 0 : index
    %c0_1 = arith.constant 0 : index
    %3 = vector.load %arg6[%c0, %c0_1] : memref<16x16xf32, #tpu.memory_space<vmem>>, vector<16x16xf32>
    %c0_2 = arith.constant 0 : index
    %c0_3 = arith.constant 0 : index
    %4 = vector.load %arg2[%c0_2, %c0_3] : memref<16x128xbf16, #tpu.memory_space<vmem>>, vector<16x128xbf16>
    %c0_4 = arith.constant 0 : index
    %c0_5 = arith.constant 0 : index
    %5 = vector.load %arg3[%c0_4, %c0_5] : memref<128x16xbf16, #tpu.memory_space<vmem>>, vector<128x16xbf16>
    %cst = arith.constant dense<0.000000e+00> : vector<16x16xf32>
    %6 = tpu.matmul %4, %5, %cst {dimension_numbers = #tpu.dot_dimension_numbers<[1], [0], [0], [1], [0, 0, 1, 1], [], []>} : vector<16x128xbf16>, vector<128x16xbf16>, vector<16x16xf32> -> vector<16x16xf32>
    %7 = arith.addf %3, %6 : vector<16x16xf32>
    %c0_6 = arith.constant 0 : index
    %c0_7 = arith.constant 0 : index
    %8 = vector.load %arg6[%c0_6, %c0_7] : memref<16x16xf32, #tpu.memory_space<vmem>>, vector<16x16xf32>
    tpu.vector_store %arg6[%c0_6, %c0_7], %7 {strides = array<i32>} : memref<16x16xf32, #tpu.memory_space<vmem>>, vector<16x16xf32>,
    return
  }
  func.func @transform_0(%arg0: i32, %arg1: i32) -> (i32, i32) {
    %c0_i32 = arith.constant 0 : i32
    return %arg0, %arg1 : i32, i32
  }
  func.func @transform_1(%arg0: i32, %arg1: i32) -> (i32, i32) {
    %c0_i32 = arith.constant 0 : i32
    %c0_i32_0 = arith.constant 0 : i32
    return %arg1, %c0_i32 : i32, i32
  }
  func.func @transform_2(%arg0: i32, %arg1: i32) -> (i32, i32) {
    %c0_i32 = arith.constant 0 : i32
    %c0_i32_0 = arith.constant 0 : i32
    return %arg0, %c0_i32 : i32, i32
  }
  func.func @transform_3(%arg0: i32, %arg1: i32) -> (i32, i32) {
    %c0_i32 = arith.constant 0 : i32
    %c0_i32_0 = arith.constant 0 : i32
    %c0_i32_1 = arith.constant 0 : i32
    return %c0_i32, %c0_i32_0 : i32, i32
  }
  func.func @transform_4(%arg0: i32, %arg1: i32) -> (i32, i32) {
    %c0_i32 = arith.constant 0 : i32
    %c0_i32_0 = arith.constant 0 : i32
    return %arg0, %c0_i32 : i32, i32
  }
}

</mosaic_0001>

<llo_original>
// kernel: dehnn_forward.8
$region0: #{dehnn_forward.8}
  #allocation0 [shape = 'u32[]', space=smem, size = 0x4, offset = 0x4, fixed_abs, tag = 'smem constant byte address 0x4 - core index']
  #allocation1 [shape = 'u32[144,128]{1,0:T(1,128)}', space=vmem, size = 0x12000, scoped, tag = 'internal scratch']
  #allocation2 [shape = 'f32[16,32]{1,0:T(8,128)}', space=vmem, size = 0x2000, scoped, tag = 'scratch operand']
  %s0 = inlined_call_operand.vmem [shape: bf16[256,256], index: 0, kind: input, shape index: {}]
  %s1 = inlined_call_operand.vmem [shape: bf16[256,256], index: 1, kind: input, shape index: {}]
  %s2 = inlined_call_operand.vmem [shape: bf16[256,32], index: 2, kind: input, shape index: {}]
  %s3 = inlined_call_operand.vmem [shape: bf16[256,32], index: 3, kind: input, shape index: {}]
  %s4 = inlined_call_operand.vmem [shape: f32[1,32], index: 4, kind: input, shape index: {}]
  %s5 = inlined_call_operand.vmem [shape: bf16[32,32], index: 5, kind: input, shape index: {}]
  %s6 = inlined_call_operand.vmem [shape: f32[1,32], index: 6, kind: input, shape index: {}]
  %s7 = inlined_call_operand.vmem [shape: f32[256,32], index: 7, kind: output, shape index: {}]
  %s8 = sld [smem:[#allocation0]]
  $region151: #{dehnn_forward.8} parent=0
    _
  %s10 = ssub.s32 1, %s8
  %s11 = scalar_select 0, %s10, %s8
  $region1: #{dehnn_forward.8} parent=0
    #allocation3 [shape = 'u8[8192]{0}', space=vmem, size = 0x2000, scoped, tag = 'input window, operand 0']
    #allocation4 [shape = 'u8[8192]{0}', space=vmem, size = 0x2000, scoped, tag = 'input window, operand 1']
    loop: start=0, step=1, limit=34
    $region2: #{dehnn_forward.8} parent=1 // loop_pre_header
      _
    $region3: #{dehnn_forward.8} parent=1 // loop_header
      %s13 = sphi 0, %s17
      %p14 = scmp.ge.s32.totalorder %s13, 34
      %s20 = sphi 0, %s32
      %s21 = sphi 0, %s28
      %s22 = sphi 0, %s20
      %s23 = sphi 0, %s21
      %s24 = sphi 0, %s22
      %s25 = sphi 0, %s23
      %s37 = sphi 0, %s39
      %s40 = sphi 0, %s37
      %s41 = sphi 0, %s40
      %s57 = sphi 0, %s41
      %s65 = sphi 0, %s67
      %s68 = sphi 0, %s65
      %s69 = sphi 0, %s68
      %s85 = sphi 0, %s69
      %s91 = sphi 0, %s93
      %s94 = sphi 0, %s91
      %s95 = sphi 0, %s94
      %s111 = sphi 0, %s95
      %s117 = sphi 0, %s119
      %s120 = sphi 0, %s117
      %s121 = sphi 0, %s120
      %s137 = sphi 0, %s121
      %s141 = sphi 0, %s141
      %s143 = sphi 0, %s141
      %s144 = sphi 0, %s143
      %s158 = sphi 0, %s144
      %s162 = sphi 0, %s162
      %s164 = sphi 0, %s162
      %s165 = sphi 0, %s164
      %s179 = sphi 0, %s165
      %s183 = sphi 0, %s183
      %s185 = sphi 0, %s183
      %s186 = sphi 0, %s185
      %s200 = sphi 0, %s186
      %s206 = sphi 0, %s208
      %s209 = sphi 0, %s206
      %s210 = sphi 0, %s209
      %s226 = sphi 0, %s210
    $region4: #{dehnn_forward.8} parent=1 // loop_header_branch
      %16 = sbr.rel (%p14) target = $region8
    $region5: #{dehnn_forward.8} parent=1 // loop_body
      %s18 = ssub.s32 %s13, 1
      %s19 = ssub.s32 %s13, 2
      %s26 = sadd.s32 1, %s21
      %p27 = scmp.ge.s32.totalorder %s26, 2
      %s28 = scalar_select %p27, 0, %s26
      %s29 = sadd.s32 1, %s20
      %s30 = scalar_select %p27, %s29, %s20
      %p31 = scmp.ge.s32.totalorder %s30, 16
      %s32 = scalar_select %p31, 0, %s30
      %s33 = ssub.s32 %s20, %s32
      %s34 = ssub.s32 %s21, %s28
      %s35 = sor.u32 %s33, %s34
      %p36 = scmp.eq.s32.totalorder %s35, 0
      %s38 = sadd.s32 %s37, 1
      %s39 = scalar_select %p36, %s37, %s38
      %p42 = pneg %p36
      %p43 = scmp.eq.s32.totalorder %s13, 31
      %p44 = por %p42, %p43
      %p45 = scmp.ne.s32.totalorder %s37, %s40
      %p46 = scmp.eq.s32.totalorder %s13, 0
      %p47 = por %p45, %p46
      %p48 = scmp.ne.s32.totalorder %s37, %s40
      %p49 = scmp.eq.s32.totalorder %s18, 31
      %p50 = por %p48, %p49
      %p51 = scmp.ne.s32.totalorder %s40, %s41
      %p52 = scmp.eq.s32.totalorder %s18, 0
      %p53 = por %p51, %p52
      %p54 = scmp.ne.s32.totalorder %s40, %s41
      %p55 = scmp.eq.s32.totalorder %s19, 31
      %p56 = por %p54, %p55
      %p58 = scmp.ne.s32.totalorder %s41, %s57
      %p59 = scmp.eq.s32.totalorder %s19, 0
      %p60 = por %p58, %p59
      %s61 = ssub.s32 %s20, %s32
      %s62 = ssub.s32 %s21, %s28
      %s63 = sor.u32 %s61, %s62
      %p64 = scmp.eq.s32.totalorder %s63, 0
      %s66 = sadd.s32 %s65, 1
      %s67 = scalar_select %p64, %s65, %s66
      %p70 = pneg %p64
      %p71 = scmp.eq.s32.totalorder %s13, 31
      %p72 = por %p70, %p71
      %p73 = scmp.ne.s32.totalorder %s65, %s68
      %p74 = scmp.eq.s32.totalorder %s13, 0
      %p75 = por %p73, %p74
      %p76 = scmp.ne.s32.totalorder %s65, %s68
      %p77 = scmp.eq.s32.totalorder %s18, 31
      %p78 = por %p76, %p77
      %p79 = scmp.ne.s32.totalorder %s68, %s69
      %p80 = scmp.eq.s32.totalorder %s18, 0
      %p81 = por %p79, %p80
      %p82 = scmp.ne.s32.totalorder %s68, %s69
      %p83 = scmp.eq.s32.totalorder %s19, 31
      %p84 = por %p82, %p83
      %p86 = scmp.ne.s32.totalorder %s69, %s85
      %p87 = scmp.eq.s32.totalorder %s19, 0
      %p88 = por %p86, %p87
      %s89 = ssub.s32 %s21, %s28
      %p90 = scmp.eq.s32.totalorder %s89, 0
      %s92 = sadd.s32 %s91, 1
      %s93 = scalar_select %p90, %s91, %s92
      %p96 = pneg %p90
      %p97 = scmp.eq.s32.totalorder %s13, 31
      %p98 = por %p96, %p97
      %p99 = scmp.ne.s32.totalorder %s91, %s94
      %p100 = scmp.eq.s32.totalorder %s13, 0
      %p101 = por %p99, %p100
      %p102 = scmp.ne.s32.totalorder %s91, %s94
      %p103 = scmp.eq.s32.totalorder %s18, 31
      %p104 = por %p102, %p103
      %p105 = scmp.ne.s32.totalorder %s94, %s95
      %p106 = scmp.eq.s32.totalorder %s18, 0
      %p107 = por %p105, %p106
      %p108 = scmp.ne.s32.totalorder %s94, %s95
      %p109 = scmp.eq.s32.totalorder %s19, 31
      %p110 = por %p108, %p109
      %p112 = scmp.ne.s32.totalorder %s95, %s111
      %p113 = scmp.eq.s32.totalorder %s19, 0
      %p114 = por %p112, %p113
      %s115 = ssub.s32 %s21, %s28
      %p116 = scmp.eq.s32.totalorder %s115, 0
      %s118 = sadd.s32 %s117, 1
      %s119 = scalar_select %p116, %s117, %s118
      %p122 = pneg %p116
      %p123 = scmp.eq.s32.totalorder %s13, 31
      %p124 = por %p122, %p123
      %p125 = scmp.ne.s32.totalorder %s117, %s120
      %p126 = scmp.eq.s32.totalorder %s13, 0
      %p127 = por %p125, %p126
      %p128 = scmp.ne.s32.totalorder %s117, %s120
      %p129 = scmp.eq.s32.totalorder %s18, 31
      %p130 = por %p128, %p129
      %p131 = scmp.ne.s32.totalorder %s120, %s121
      %p132 = scmp.eq.s32.totalorder %s18, 0
      %p133 = por %p131, %p132
      %p134 = scmp.ne.s32.totalorder %s120, %s121
      %p135 = scmp.eq.s32.totalorder %s19, 31
      %p136 = por %p134, %p135
      %p138 = scmp.ne.s32.totalorder %s121, %s137
      %p139 = scmp.eq.s32.totalorder %s19, 0
      %p140 = por %p138, %p139
      %s142 = sadd.s32 %s141, 1
      %p145 = scmp.eq.s32.totalorder %s13, 31
      %p146 = scmp.ne.s32.totalorder %s141, %s143
      %p147 = scmp.eq.s32.totalorder %s13, 0
      %p148 = por %p146, %p147
      %p149 = scmp.ne.s32.totalorder %s141, %s143
      %p150 = scmp.eq.s32.totalorder %s18, 31
      %p151 = por %p149, %p150
      %p152 = scmp.ne.s32.totalorder %s143, %s144
      %p153 = scmp.eq.s32.totalorder %s18, 0
      %p154 = por %p152, %p153
      %p155 = scmp.ne.s32.totalorder %s143, %s144
      %p156 = scmp.eq.s32.totalorder %s19, 31
      %p157 = por %p155, %p156
      %p159 = scmp.ne.s32.totalorder %s144, %s158
      %p160 = scmp.eq.s32.totalorder %s19, 0
      %p161 = por %p159, %p160
      %s163 = sadd.s32 %s162, 1
      %p166 = scmp.eq.s32.totalorder %s13, 31
      %p167 = scmp.ne.s32.totalorder %s162, %s164
      %p168 = scmp.eq.s32.totalorder %s13, 0
      %p169 = por %p167, %p168
      %p170 = scmp.ne.s32.totalorder %s162, %s164
      %p171 = scmp.eq.s32.totalorder %s18, 31
      %p172 = por %p170, %p171
      %p173 = scmp.ne.s32.totalorder %s164, %s165
      %p174 = scmp.eq.s32.totalorder %s18, 0
      %p175 = por %p173, %p174
      %p176 = scmp.ne.s32.totalorder %s164, %s165
      %p177 = scmp.eq.s32.totalorder %s19, 31
      %p178 = por %p176, %p177
      %p180 = scmp.ne.s32.totalorder %s165, %s179
      %p181 = scmp.eq.s32.totalorder %s19, 0
      %p182 = por %p180, %p181
      %s184 = sadd.s32 %s183, 1
      %p187 = scmp.eq.s32.totalorder %s13, 31
      %p188 = scmp.ne.s32.totalorder %s183, %s185
      %p189 = scmp.eq.s32.totalorder %s13, 0
      %p190 = por %p188, %p189
      %p191 = scmp.ne.s32.totalorder %s183, %s185
      %p192 = scmp.eq.s32.totalorder %s18, 31
      %p193 = por %p191, %p192
      %p194 = scmp.ne.s32.totalorder %s185, %s186
      %p195 = scmp.eq.s32.totalorder %s18, 0
      %p196 = por %p194, %p195
      %p197 = scmp.ne.s32.totalorder %s185, %s186
      %p198 = scmp.eq.s32.totalorder %s19, 31
      %p199 = por %p197, %p198
      %p201 = scmp.ne.s32.totalorder %s186, %s200
      %p202 = scmp.eq.s32.totalorder %s19, 0
      %p203 = por %p201, %p202
      %s204 = ssub.s32 %s20, %s32
      %p205 = scmp.eq.s32.totalorder %s204, 0
      %s207 = sadd.s32 %s206, 1
      %s208 = scalar_select %p205, %s206, %s207
      %p211 = pneg %p205
      %p212 = scmp.eq.s32.totalorder %s13, 31
      %p213 = por %p211, %p212
      %p214 = scmp.ne.s32.totalorder %s206, %s209
      %p215 = scmp.eq.s32.totalorder %s13, 0
      %p216 = por %p214, %p215
      %p217 = scmp.ne.s32.totalorder %s206, %s209
      %p218 = scmp.eq.s32.totalorder %s18, 31
      %p219 = por %p217, %p218
      %p220 = scmp.ne.s32.totalorder %s209, %s210
      %p221 = scmp.eq.s32.totalorder %s18, 0
      %p222 = por %p220, %p221
      %p223 = scmp.ne.s32.totalorder %s209, %s210
      %p224 = scmp.eq.s32.totalorder %s19, 31
      %p225 = por %p223, %p224
      %p227 = scmp.ne.s32.totalorder %s210, %s226
      %p228 = scmp.eq.s32.totalorder %s19, 0
      %p229 = por %p227, %p228
      %p230 = scmp.le.s32.totalorder 1, %s13
      %p231 = scmp.lt.s32.totalorder %s13, 33
      %p232 = pnand %p230, %p231
      %p233 = pneg %p232
      // Predicated region
      $region9: #{dehnn_forward.8} parent=5 // pred_check
        _
      $region10: #{dehnn_forward.8} parent=5 // pred_check_branch
        %235 = sbr.rel (%p232) target = $region12
      $region11: #{dehnn_forward.8} parent=5 // pred_region
        %s236 = ssub.s32 %s13, 1
        // Predicated region
        $region13: #{dehnn_forward.8} parent=11 // pred_check
          %p237 = pneg %p154
        $region14: #{dehnn_forward.8} parent=11 // pred_check_branch
          %239 = sbr.rel (%p237) target = $region16
        $region15: #{dehnn_forward.8} parent=11 // pred_region
          _
        $region16: #{dehnn_forward.8} parent=11 // pred_fallthru
          _
        // Predicated region
        $region17: #{dehnn_forward.8} parent=11 // pred_check
          %p240 = pneg %p175
        $region18: #{dehnn_forward.8} parent=11 // pred_check_branch
          %242 = sbr.rel (%p240) target = $region20
        $region19: #{dehnn_forward.8} parent=11 // pred_region
          _
        $region20: #{dehnn_forward.8} parent=11 // pred_fallthru
          _
        // Predicated region
        $region21: #{dehnn_forward.8} parent=11 // pred_check
          %p243 = pneg %p196
        $region22: #{dehnn_forward.8} parent=11 // pred_check_branch
          %245 = sbr.rel (%p243) target = $region24
        $region23: #{dehnn_forward.8} parent=11 // pred_region
          _
        $region24: #{dehnn_forward.8} parent=11 // pred_fallthru
          _
      $region12: #{dehnn_forward.8} parent=5 // pred_fallthru
        _
      %p246 = scmp.lt.s32.totalorder %s13, 32
      // Predicated region
      $region25: #{dehnn_forward.8} parent=5 // pred_check
        %p247 = pneg %p246
      $region26: #{dehnn_forward.8} parent=5 // pred_check_branch
        %249 = sbr.rel (%p247) target = $region28
      $region27: #{dehnn_forward.8} parent=5 // pred_region
        // Predicated region
        $region29: #{dehnn_forward.8} parent=27 // pred_check
          %p250 = pneg %p47
        $region30: #{dehnn_forward.8} parent=27 // pred_check_branch
          %252 = sbr.rel (%p250) target = $region32
        $region31: #{dehnn_forward.8} parent=27 // pred_region
          %s253 = sand.u32 %s37, 1
          %s254 = sand.u32 %s37, 1
          %s255 = smul.addr %s254, 8
          %s256 = scalar_lea.vmem [#allocation3], %s255
          %s257 = smul.u32 2, %s20
          %s258 = smul.addr %s257, 2
          %s259 = sadd.s32 %s21, %s258
          %s260 = smul.addr %s259, 4
          %s261 = scalar_lea.vmem %s0, %s260
          // Predicated region
          $region33: #{dehnn_forward.8} parent=31 // pred_check
            _
          $region34: #{dehnn_forward.8} parent=31 // pred_check_branch
            %263 = sbr.rel (0) target = $region36
          $region35: #{dehnn_forward.8} parent=31 // pred_region
            // Predicated region
            $region37: #{dehnn_forward.8} parent=35 // pred_check
              _
            $region38: #{dehnn_forward.8} parent=35 // pred_check_branch
              %265 = sbr.rel target = $region40
            $region39: #{dehnn_forward.8} parent=35 // pred_region
              // Predicated region
              $region52: #{dehnn_forward.8} parent=39 // pred_check
                _
              $region53: #{dehnn_forward.8} parent=39 // pred_check_branch
                %283 = sbr.rel (0) target = $region55
              $region54: #{dehnn_forward.8} parent=39 // pred_region
                loop: start=0, step=1, limit=1
                $region56: #{dehnn_forward.8} parent=54 // loop_pre_header
                  _
                $region57: #{dehnn_forward.8} parent=54 // loop_header
                  %s285 = sphi 0, %s289
                  %p286 = scmp.ge.s32.totalorder %s285, 1
                  %s290 = sphi %s261, %s261
                  %s291 = sphi %s256, %s256
                $region58: #{dehnn_forward.8} parent=54 // loop_header_branch
                  %288 = sbr.rel (%p286) target = $region62
                $region59: #{dehnn_forward.8} parent=54 // loop_body
                  _
                $region60: #{dehnn_forward.8} parent=54 // loop_footer
                  %s289 = sadd.s32 1, %s285
                $region61: #{dehnn_forward.8} parent=54 // loop_footer_branch
                  %284 = sbr.rel target = $region57
                $region62: #{dehnn_forward.8} parent=54 // loop_exit
                  _
                %s293 = ssub.s32 16, 1
                loop: start=0, step=1, limit=1
                $region63: #{dehnn_forward.8} parent=54 // loop_pre_header
                  _
                $region64: #{dehnn_forward.8} parent=54 // loop_header
                  %s295 = sphi 0, %s299
                  %p296 = scmp.ge.s32.totalorder %s295, 1
                  %s300 = sphi %s261, %s261
                  %s301 = sphi %s256, %s256
                $region65: #{dehnn_forward.8} parent=54 // loop_header_branch
                  %298 = sbr.rel (%p296) target = $region69
                $region66: #{dehnn_forward.8} parent=54 // loop_body
                  %v302 = vld [vmem:[%s300] sm:%s293]
                  %303 = vst [vmem:[%s301] sm:%s293] %v302
                  %v304 = vld [vmem:[%s300 + $0x8] sm:%s293]
                  %305 = vst [vmem:[%s301 + $0x4] sm:%s293] %v304
                $region67: #{dehnn_forward.8} parent=54 // loop_footer
                  %s299 = sadd.s32 1, %s295
                $region68: #{dehnn_forward.8} parent=54 // loop_footer_branch
                  %294 = sbr.rel target = $region64
                $region69: #{dehnn_forward.8} parent=54 // loop_exit
                  _
              $region55: #{dehnn_forward.8} parent=39 // pred_fallthru
                _
            $region40: #{dehnn_forward.8} parent=35 // pred_fallthru
              _
            // Predicated region
            $region41: #{dehnn_forward.8} parent=35 // pred_check
              _
            $region42: #{dehnn_forward.8} parent=35 // pred_check_branch
              %267 = sbr.rel (0) target = $region44
            $region43: #{dehnn_forward.8} parent=35 // pred_region
              %s269 = ssub.s32 16, 1
              loop: start=0, step=1, limit=1
              $region45: #{dehnn_forward.8} parent=43 // loop_pre_header
                _
              $region46: #{dehnn_forward.8} parent=43 // loop_header
                %s271 = sphi 0, %s275
                %p272 = scmp.ge.s32.totalorder %s271, 1
                %s276 = sphi %s261, %s261
                %s277 = sphi %s256, %s256
              $region47: #{dehnn_forward.8} parent=43 // loop_header_branch
                %274 = sbr.rel (%p272) target = $region51
              $region48: #{dehnn_forward.8} parent=43 // loop_body
                %v278 = vld [vmem:[%s276] sm:%s269]
                %279 = vst [vmem:[%s277] sm:%s269] %v278
                %v280 = vld [vmem:[%s276 + $0x8] sm:%s269]
                %281 = vst [vmem:[%s277 + $0x4] sm:%s269] %v280
              $region49: #{dehnn_forward.8} parent=43 // loop_footer
                %s275 = sadd.s32 1, %s271
              $region50: #{dehnn_forward.8} parent=43 // loop_footer_branch
                %270 = sbr.rel target = $region46
              $region51: #{dehnn_forward.8} parent=43 // loop_exit
                _
            $region44: #{dehnn_forward.8} parent=35 // pred_fallthru
              _
          $region36: #{dehnn_forward.8} parent=31 // pred_fallthru
            _
          %306 = vnop
        $region32: #{dehnn_forward.8} parent=27 // pred_fallthru
          _
        // Predicated region
        $region70: #{dehnn_forward.8} parent=27 // pred_check
          %p307 = pneg %p75
        $region71: #{dehnn_forward.8} parent=27 // pred_check_branch
          %309 = sbr.rel (%p307) target = $region73
        $region72: #{dehnn_forward.8} parent=27 // pred_region
          %s310 = sand.u32 %s65, 1
          %s311 = sand.u32 %s65, 1
          %s312 = smul.addr %s311, 8
          %s313 = scalar_lea.vmem [#allocation4], %s312
          %s314 = smul.u32 2, %s20
          %s315 = smul.addr %s314, 2
          %s316 = sadd.s32 %s21, %s315
          %s317 = smul.addr %s316, 4
          %s318 = scalar_lea.vmem %s1, %s317
          // Predicated region
          $region74: #{dehnn_forward.8} parent=72 // pred_check
            _
          $region75: #{dehnn_forward.8} parent=72 // pred_check_branch
            %320 = sbr.rel (0) target = $region77
          $region76: #{dehnn_forward.8} parent=72 // pred_region
            // Predicated region
            $region78: #{dehnn_forward.8} parent=76 // pred_check
              _
            $region79: #{dehnn_forward.8} parent=76 // pred_check_branch
              %322 = sbr.rel target = $region81
            $region80: #{dehnn_forward.8} parent=76 // pred_region
              // Predicated region
              $region93: #{dehnn_forward.8} parent=80 // pred_check
                _
              $region94: #{dehnn_forward.8} parent=80 // pred_check_branch
                %340 = sbr.rel (0) target = $region96
              $region95: #{dehnn_forward.8} parent=80 // pred_region
                loop: start=0, step=1, limit=1
                $region97: #{dehnn_forward.8} parent=95 // loop_pre_header
                  _
                $region98: #{dehnn_forward.8} parent=95 // loop_header
                  %s342 = sphi 0, %s346
                  %p343 = scmp.ge.s32.totalorder %s342, 1
                  %s347 = sphi %s318, %s318
                  %s348 = sphi %s313, %s313
                $region99: #{dehnn_forward.8} parent=95 // loop_header_branch
                  %345 = sbr.rel (%p343) target = $region103
                $region100: #{dehnn_forward.8} parent=95 // loop_body
                  _
                $region101: #{dehnn_forward.8} parent=95 // loop_footer
                  %s346 = sadd.s32 1, %s342
                $region102: #{dehnn_forward.8} parent=95 // loop_footer_branch
                  %341 = sbr.rel target = $region98
                $region103: #{dehnn_forward.8} parent=95 // loop_exit
                  _
                %s350 = ssub.s32 16, 1
                loop: start=0, step=1, limit=1
                $region104: #{dehnn_forward.8} parent=95 // loop_pre_header
                  _
                $region105: #{dehnn_forward.8} parent=95 // loop_header
                  %s352 = sphi 0, %s356
                  %p353 = scmp.ge.s32.totalorder %s352, 1
                  %s357 = sphi %s318, %s318
                  %s358 = sphi %s313, %s313
                $region106: #{dehnn_forward.8} parent=95 // loop_header_branch
                  %355 = sbr.rel (%p353) target = $region110
                $region107: #{dehnn_forward.8} parent=95 // loop_body
                  %v359 = vld [vmem:[%s357] sm:%s350]
                  %360 = vst [vmem:[%s358] sm:%s350] %v359
                  %v361 = vld [vmem:[%s357 + $0x8] sm:%s350]
                  %362 = vst [vmem:[%s358 + $0x4] sm:%s350] %v361
                $region108: #{dehnn_forward.8} parent=95 // loop_footer
                  %s356 = sadd.s32 1, %s352
                $region109: #{dehnn_forward.8} parent=95 // loop_footer_branch
                  %351 = sbr.rel target = $region105
                $region110: #{dehnn_forward.8} parent=95 // loop_exit
                  _
              $region96: #{dehnn_forward.8} parent=80 // pred_fallthru
                _
            $region81: #{dehnn_forward.8} parent=76 // pred_fallthru
              _
            // Predicated region
            $region82: #{dehnn_forward.8} parent=76 // pred_check
              _
            $region83: #{dehnn_forward.8} parent=76 // pred_check_branch
              %324 = sbr.rel (0) target = $region85
            $region84: #{dehnn_forward.8} parent=76 // pred_region
              %s326 = ssub.s32 16, 1
              loop: start=0, step=1, limit=1
              $region86: #{dehnn_forward.8} parent=84 // loop_pre_header
                _
              $region87: #{dehnn_forward.8} parent=84 // loop_header
                %s328 = sphi 0, %s332
                %p329 = scmp.ge.s32.totalorder %s328, 1
                %s333 = sphi %s318, %s318
                %s334 = sphi %s313, %s313
              $region88: #{dehnn_forward.8} parent=84 // loop_header_branch
                %331 = sbr.rel (%p329) target = $region92
              $region89: #{dehnn_forward.8} parent=84 // loop_body
                %v335 = vld [vmem:[%s333] sm:%s326]
                %336 = vst [vmem:[%s334] sm:%s326] %v335
                %v337 = vld [vmem:[%s333 + $0x8] sm:%s326]
                %338 = vst [vmem:[%s334 + $0x4] sm:%s326] %v337
              $region90: #{dehnn_forward.8} parent=84 // loop_footer
                %s332 = sadd.s32 1, %s328
              $region91: #{dehnn_forward.8} parent=84 // loop_footer_branch
                %327 = sbr.rel target = $region87
              $region92: #{dehnn_forward.8} parent=84 // loop_exit
                _
            $region85: #{dehnn_forward.8} parent=76 // pred_fallthru
              _
          $region77: #{dehnn_forward.8} parent=72 // pred_fallthru
            _
          %363 = vnop
        $region73: #{dehnn_forward.8} parent=27 // pred_fallthru
          _
        // Predicated region
        $region111: #{dehnn_forward.8} parent=27 // pred_check
          %p364 = pneg %p101
        $region112: #{dehnn_forward.8} parent=27 // pred_check_branch
          %366 = sbr.rel (%p364) target = $region114
        $region113: #{dehnn_forward.8} parent=27 // pred_region
          %s367 = smul.u32 16, %s21
          %p368 = scmp.lt.s32.totalorder %s367, 31
          %s369 = scalar_select %p368, %s367, 31
          %s370 = smul.addr %s369, 4
          %s371 = scalar_lea.vmem %s2, %s370
          %s372 = smul.u32 16, %s21
        $region114: #{dehnn_forward.8} parent=27 // pred_fallthru
          _
        // Predicated region
        $region115: #{dehnn_forward.8} parent=27 // pred_check
          %p373 = pneg %p127
        $region116: #{dehnn_forward.8} parent=27 // pred_check_branch
          %375 = sbr.rel (%p373) target = $region118
        $region117: #{dehnn_forward.8} parent=27 // pred_region
          %s376 = smul.u32 16, %s21
          %p377 = scmp.lt.s32.totalorder %s376, 31
          %s378 = scalar_select %p377, %s376, 31
          %s379 = smul.addr %s378, 4
          %s380 = scalar_lea.vmem %s3, %s379
          %s381 = smul.u32 16, %s21
        $region118: #{dehnn_forward.8} parent=27 // pred_fallthru
          _
      $region28: #{dehnn_forward.8} parent=5 // pred_fallthru
        _
      %p382 = scmp.le.s32.totalorder 1, %s13
      %p383 = scmp.lt.s32.totalorder %s13, 33
      %p384 = pnand %p382, %p383
      %p385 = pneg %p384
      // Predicated region
      $region119: #{dehnn_forward.8} parent=5 // pred_check
        _
      $region120: #{dehnn_forward.8} parent=5 // pred_check_branch
        %387 = sbr.rel (%p384) target = $region122
      $region121: #{dehnn_forward.8} parent=5 // pred_region
        %s388 = ssub.s32 %s13, 1
        %s389 = sand.u32 %s40, 1
        %s390 = sand.u32 %s40, 1
        %s391 = smul.addr %s390, 8
        %s392 = scalar_lea.vmem [#allocation3], %s391
        // Predicated region
        $region123: #{dehnn_forward.8} parent=121 // pred_check
          %p393 = pneg %p53
        $region124: #{dehnn_forward.8} parent=121 // pred_check_branch
          %395 = sbr.rel (%p393) target = $region126
        $region125: #{dehnn_forward.8} parent=121 // pred_region
          _
        $region126: #{dehnn_forward.8} parent=121 // pred_fallthru
          _
        %s396 = sand.u32 %s68, 1
        %s397 = sand.u32 %s68, 1
        %s398 = smul.addr %s397, 8
        %s399 = scalar_lea.vmem [#allocation4], %s398
        // Predicated region
        $region127: #{dehnn_forward.8} parent=121 // pred_check
          %p400 = pneg %p81
        $region128: #{dehnn_forward.8} parent=121 // pred_check_branch
          %402 = sbr.rel (%p400) target = $region130
        $region129: #{dehnn_forward.8} parent=121 // pred_region
          _
        $region130: #{dehnn_forward.8} parent=121 // pred_fallthru
          _
        %s403 = sand.u32 %s40, 1
        %s404 = sand.u32 %s40, 1
        %s405 = smul.addr %s404, 8
        %s406 = scalar_lea.vmem [#allocation3], %s405
        %p407 = pneg %p53
        %p408 = pneg %p50
        %s409 = sand.u32 %s68, 1
        %s410 = sand.u32 %s68, 1
        %s411 = smul.addr %s410, 8
        %s412 = scalar_lea.vmem [#allocation4], %s411
        %p413 = pneg %p81
        %p414 = pneg %p78
        %s415 = smul.u32 16, %s23
        %p416 = scmp.lt.s32.totalorder %s415, 31
        %s417 = scalar_select %p416, %s415, 31
        %s418 = smul.addr %s417, 4
        %s419 = scalar_lea.vmem %s2, %s418
        %p420 = pneg %p107
        %p421 = pneg %p104
        %s422 = smul.u32 16, %s23
        %p423 = scmp.lt.s32.totalorder %s422, 31
        %s424 = scalar_select %p423, %s422, 31
        %s425 = smul.addr %s424, 4
        %s426 = scalar_lea.vmem %s3, %s425
        %p427 = pneg %p133
        %p428 = pneg %p130
        %p429 = pneg %p154
        %p430 = pneg %p151
        %p431 = pneg %p175
        %p432 = pneg %p172
        %p433 = pneg %p196
        %p434 = pneg %p193
        %p435 = pneg %p222
        %p436 = pneg %p219
        %s437 = smul.u32 2, %s22
        %p438 = scmp.lt.s32.totalorder %s437, 31
        %s439 = scalar_select %p438, %s437, 31
        %s440 = smul.addr %s439, 8
        %s441 = scalar_lea.vmem %s7, %s440
        %s442 = smul.u32 2, %s22
        %s443 = smul.u32 2, %s22
        %s444 = smul.u32 16, %s23
        %p445 = scmp.lt.s32.totalorder %s444, 31
        %s446 = scalar_select %p445, %s444, 31
        %s447 = smul.addr %s446, 4
        %s448 = scalar_lea.vmem %s2, %s447
        %s449 = smul.u32 16, %s23
        %s450 = smul.u32 16, %s23
        %p451 = scmp.lt.s32.totalorder %s450, 31
        %s452 = scalar_select %p451, %s450, 31
        %s453 = smul.addr %s452, 4
        %s454 = scalar_lea.vmem %s3, %s453
        %s455 = smul.u32 16, %s23
        %s456 = smul.u32 2, %s22
        %p457 = scmp.lt.s32.totalorder %s456, 31
        %s458 = scalar_select %p457, %s456, 31
        %s459 = smul.addr %s458, 8
        %s460 = scalar_lea.vmem %s7, %s459
        %s461 = smul.u32 2, %s22
        %p463 = scmp.eq.s32.totalorder %s23, 0
        // Predicated region
        $region131: #{dehnn_forward.8} parent=121 // pred_check
          %p464 = pneg %p463
        $region132: #{dehnn_forward.8} parent=121 // pred_check_branch
          %466 = sbr.rel (%p464) target = $region134
        $region133: #{dehnn_forward.8} parent=121 // pred_region
          %vm467 = vcmask 261120
          %468 = vst.msk [vmem:[#allocation2] sm:$0xff] %vm467, 0.0
          %469 = vst.msk [vmem:[#allocation2 + $0x8] sm:$0xff] %vm467, 0.0
        $region134: #{dehnn_forward.8} parent=121 // pred_fallthru
          _
        %v470 = vld [vmem:[#allocation2] sm:$0xff]
        %v471 = vld [vmem:[#allocation2 + $0x8] sm:$0xff]
        %v472 = vld [vmem:[%s392] sm:$0xf]
        %v473 = vld [vmem:[%s392 + $0x4] sm:$0xf]
        %v474 = vld [vmem:[%s448] sm:$0xf]
        %v475 = vld [vmem:[%s448 + $0x4] sm:$0xf]
        %v476 = vld [vmem:[%s448 + $0x8] sm:$0xf]
        %v477 = vld [vmem:[%s448 + $0xc] sm:$0xf]
        %v478 = vld [vmem:[%s448 + $0x10] sm:$0xf]
        %v479 = vld [vmem:[%s448 + $0x14] sm:$0xf]
        %v480 = vld [vmem:[%s448 + $0x18] sm:$0xf]
        %v481 = vld [vmem:[%s448 + $0x1c] sm:$0xf]
        %v482 = vld [vmem:[%s448 + $0x20] sm:$0xf]
        %v483 = vld [vmem:[%s448 + $0x24] sm:$0xf]
        %v484 = vld [vmem:[%s448 + $0x28] sm:$0xf]
        %v485 = vld [vmem:[%s448 + $0x2c] sm:$0xf]
        %v486 = vld [vmem:[%s448 + $0x30] sm:$0xf]
        %v487 = vld [vmem:[%s448 + $0x34] sm:$0xf]
        %v488 = vld [vmem:[%s448 + $0x38] sm:$0xf]
        %v489 = vld [vmem:[%s448 + $0x3c] sm:$0xf]
        %v490 = vld [vmem:[%s399] sm:$0xf]
        %v491 = vld [vmem:[%s399 + $0x4] sm:$0xf]
        %v492 = vld [vmem:[%s454] sm:$0xf]
        %v493 = vld [vmem:[%s454 + $0x4] sm:$0xf]
        %v494 = vld [vmem:[%s454 + $0x8] sm:$0xf]
        %v495 = vld [vmem:[%s454 + $0xc] sm:$0xf]
        %v496 = vld [vmem:[%s454 + $0x10] sm:$0xf]
        %v497 = vld [vmem:[%s454 + $0x14] sm:$0xf]
        %v498 = vld [vmem:[%s454 + $0x18] sm:$0xf]
        %v499 = vld [vmem:[%s454 + $0x1c] sm:$0xf]
        %v500 = vld [vmem:[%s454 + $0x20] sm:$0xf]
        %v501 = vld [vmem:[%s454 + $0x24] sm:$0xf]
        %v502 = vld [vmem:[%s454 + $0x28] sm:$0xf]
        %v503 = vld [vmem:[%s454 + $0x2c] sm:$0xf]
        %v504 = vld [vmem:[%s454 + $0x30] sm:$0xf]
        %v505 = vld [vmem:[%s454 + $0x34] sm:$0xf]
        %v506 = vld [vmem:[%s454 + $0x38] sm:$0xf]
        %v507 = vld [vmem:[%s454 + $0x3c] sm:$0xf]
        %v510 = vunpack.c.l.b16 %v490
        %v511 = vunpack.c.l.b16 %v491
        %v512 = vpack.c.b16 %v511, %v510
        %v530 = vunpack.c.l.b16 %v492
        %v531 = vunpack.c.l.b16 %v493
        %v532 = vunpack.c.l.b16 %v494
        %v533 = vunpack.c.l.b16 %v495
        %v534 = vunpack.c.l.b16 %v496
        %v535 = vunpack.c.l.b16 %v497
        %v536 = vunpack.c.l.b16 %v498
        %v537 = vunpack.c.l.b16 %v499
        %v538 = vunpack.c.l.b16 %v500
        %v539 = vunpack.c.l.b16 %v501
        %v540 = vunpack.c.l.b16 %v502
        %v541 = vunpack.c.l.b16 %v503
        %v542 = vunpack.c.l.b16 %v504
        %v543 = vunpack.c.l.b16 %v505
        %v544 = vunpack.c.l.b16 %v506
        %v545 = vunpack.c.l.b16 %v507
        %v546 = vpack.c.b16 %v531, %v530
        %v547 = vpack.c.b16 %v533, %v532
        %v548 = vpack.c.b16 %v535, %v534
        %v549 = vpack.c.b16 %v537, %v536
        %v550 = vpack.c.b16 %v539, %v538
        %v551 = vpack.c.b16 %v541, %v540
        %v552 = vpack.c.b16 %v543, %v542
        %v553 = vpack.c.b16 %v545, %v544
        %562 = vmatprep.subr.bf16.mxu0 0
        %563 = vmatpush1.bf16.msra.mxu0 %v553
        %564 = vmatprep.subr.bf16.mxu0 0
        %565 = vmatpush1.bf16.msra.mxu0 %v552
        %566 = vmatprep.subr.bf16.mxu0 0
        %567 = vmatpush1.bf16.msra.mxu0 %v551
        %568 = vmatprep.subr.bf16.mxu0 0
        %569 = vmatpush1.bf16.msra.mxu0 %v550
        %570 = vmatprep.subr.bf16.mxu0 0
        %571 = vmatpush1.bf16.msra.mxu0 %v549
        %572 = vmatprep.subr.bf16.mxu0 0
        %573 = vmatpush1.bf16.msra.mxu0 %v548
        %574 = vmatprep.subr.bf16.mxu0 0
        %575 = vmatpush1.bf16.msra.mxu0 %v547
        %576 = vmatprep.subr.bf16.mxu0 0
        %577 = vmatpush1.bf16.msra.mxu0 %v546
        %578 = vmatprep.subr.bf16.mxu0 0
        %579 = vmatpush2.bf16.msra.mxu0 0
        %580 = vmatprep.subr.bf16.mxu0 0
        %581 = vmatpush2.bf16.msra.mxu0 0
        %582 = vmatprep.subr.bf16.mxu0 0
        %583 = vmatpush2.bf16.msra.mxu0 0
        %584 = vmatprep.subr.bf16.mxu0 0
        %585 = vmatpush2.bf16.msra.mxu0 0
        %586 = vmatprep.subr.bf16.mxu0 0
        %587 = vmatpush2.bf16.msra.mxu0 0
        %588 = vmatprep.subr.bf16.mxu0 0
        %589 = vmatpush2.bf16.msra.mxu0 0
        %590 = vmatprep.subr.bf16.mxu0 0
        %591 = vmatpush2.bf16.msra.mxu0 0
        %592 = vmatprep.subr.bf16.mxu0 0
        %593 = vmatpush2.bf16.msra.mxu0 0
        %594 = vmatprep.mubr.bf16.mxu0 0
        %595 = vmatmul.mubr.bf16.gmra.mxu0 %v512
        %v596 = vpop.f32.mrf.mxu0
        %v597 = vadd.f32 0.0, %v596
        %v598 = vpop.f32.mrf.mxu0
        %v599 = vpop.f32.mrf.mxu0
        %v600 = vadd.f32 0.0, %v599
        %v601 = vpop.f32.mrf.mxu0
        %602 = vdwg.mxu0
        %v605 = vunpack.c.l.b16 %v472
        %v606 = vunpack.c.l.b16 %v473
        %v607 = vpack.c.b16 %v606, %v605
        %v625 = vunpack.c.l.b16 %v474
        %v626 = vunpack.c.l.b16 %v475
        %v627 = vunpack.c.l.b16 %v476
        %v628 = vunpack.c.l.b16 %v477
        %v629 = vunpack.c.l.b16 %v478
        %v630 = vunpack.c.l.b16 %v479
        %v631 = vunpack.c.l.b16 %v480
        %v632 = vunpack.c.l.b16 %v481
        %v633 = vunpack.c.l.b16 %v482
        %v634 = vunpack.c.l.b16 %v483
        %v635 = vunpack.c.l.b16 %v484
        %v636 = vunpack.c.l.b16 %v485
        %v637 = vunpack.c.l.b16 %v486
        %v638 = vunpack.c.l.b16 %v487
        %v639 = vunpack.c.l.b16 %v488
        %v640 = vunpack.c.l.b16 %v489
        %v641 = vpack.c.b16 %v626, %v625
        %v642 = vpack.c.b16 %v628, %v627
        %v643 = vpack.c.b16 %v630, %v629
        %v644 = vpack.c.b16 %v632, %v631
        %v645 = vpack.c.b16 %v634, %v633
        %v646 = vpack.c.b16 %v636, %v635
        %v647 = vpack.c.b16 %v638, %v637
        %v648 = vpack.c.b16 %v640, %v639
        %657 = vmatprep.subr.bf16.mxu0 0
        %658 = vmatpush1.bf16.msra.mxu0 %v648
        %659 = vmatprep.subr.bf16.mxu0 0
        %660 = vmatpush1.bf16.msra.mxu0 %v647
        %661 = vmatprep.subr.bf16.mxu0 0
        %662 = vmatpush1.bf16.msra.mxu0 %v646
        %663 = vmatprep.subr.bf16.mxu0 0
        %664 = vmatpush1.bf16.msra.mxu0 %v645
        %665 = vmatprep.subr.bf16.mxu0 0
        %666 = vmatpush1.bf16.msra.mxu0 %v644
        %667 = vmatprep.subr.bf16.mxu0 0
        %668 = vmatpush1.bf16.msra.mxu0 %v643
        %669 = vmatprep.subr.bf16.mxu0 0
        %670 = vmatpush1.bf16.msra.mxu0 %v642
        %671 = vmatprep.subr.bf16.mxu0 0
        %672 = vmatpush1.bf16.msra.mxu0 %v641
        %673 = vmatprep.subr.bf16.mxu0 0
        %674 = vmatpush2.bf16.msra.mxu0 0
        %675 = vmatprep.subr.bf16.mxu0 0
        %676 = vmatpush2.bf16.msra.mxu0 0
        %677 = vmatprep.subr.bf16.mxu0 0
        %678 = vmatpush2.bf16.msra.mxu0 0
        %679 = vmatprep.subr.bf16.mxu0 0
        %680 = vmatpush2.bf16.msra.mxu0 0
        %681 = vmatprep.subr.bf16.mxu0 0
        %682 = vmatpush2.bf16.msra.mxu0 0
        %683 = vmatprep.subr.bf16.mxu0 0
        %684 = vmatpush2.bf16.msra.mxu0 0
        %685 = vmatprep.subr.bf16.mxu0 0
        %686 = vmatpush2.bf16.msra.mxu0 0
        %687 = vmatprep.subr.bf16.mxu0 0
        %688 = vmatpush2.bf16.msra.mxu0 0
        %689 = vmatprep.mubr.bf16.mxu0 0
        %690 = vmatmul.mubr.bf16.gmra.mxu0 %v607
        %v691 = vpop.f32.mrf.mxu0
        %v692 = vadd.f32 %v597, %v691
        %v693 = vpop.f32.mrf.mxu0
        %v694 = vpop.f32.mrf.mxu0
        %v695 = vadd.f32 %v600, %v694
        %v696 = vpop.f32.mrf.mxu0
        %697 = vdwg.mxu0
        %v698 = vadd.f32 %v470, %v692
        %v699 = vadd.f32 %v471, %v695
        %vm700 = vcmask 261120
        %701 = vst.msk [vmem:[#allocation2] sm:$0xff] %vm700, %v698
        %702 = vst.msk [vmem:[#allocation2 + $0x8] sm:$0xff] %vm700, %v699
        %p703 = scmp.eq.s32.totalorder %s23, 1
        // Predicated region
        $region135: #{dehnn_forward.8} parent=121 // pred_check
          %p704 = pneg %p703
        $region136: #{dehnn_forward.8} parent=121 // pred_check_branch
          %706 = sbr.rel (%p704) target = $region138
        $region137: #{dehnn_forward.8} parent=121 // pred_region
          %v707 = vld [vmem:[#allocation2] sm:$0xff]
          %v708 = vld [vmem:[#allocation2 + $0x8] sm:$0xff]
          %v709 = vld [vmem:[%s4] sm:$0x1]
          %v711 = vlaneseq
          %v712 = vshrl.u32 %v711, 7
          %v713 = vsub.s32 0, %v712
          %v714 = vrot.slane %v709, %v713
          %v716 = vadd.f32 %v707, %v714
          %v717 = vadd.f32 %v708, %v714
          %v718 = vmax.f32 %v716, 0.0
          %v719 = vmax.f32 %v717, 0.0
          %v720 = vpack.c.bf16 %v719, %v718
          %v721 = vld [vmem:[%s5] sm:$0xf]
          %v722 = vld [vmem:[%s5 + $0x4] sm:$0xf]
          %v723 = vld [vmem:[%s5 + $0x8] sm:$0xf]
          %v724 = vld [vmem:[%s5 + $0xc] sm:$0xf]
          %v725 = vld [vmem:[%s6] sm:$0x1]
          %v727 = vlaneseq
          %v728 = vshrl.u32 %v727, 7
          %v729 = vsub.s32 0, %v728
          %v730 = vrot.slane %v725, %v729
          %v736 = vunpack.c.l.b16 %v721
          %v737 = vunpack.c.l.b16 %v722
          %v738 = vunpack.c.l.b16 %v723
          %v739 = vunpack.c.l.b16 %v724
          %v740 = vpack.c.b16 %v737, %v736
          %v741 = vpack.c.b16 %v739, %v738
          %v745 = vsel %vm700, %v720, 0
          %747 = vmatprep.subr.bf16.mxu0 0
          %748 = vmatpush1.bf16.msra.mxu0 0
          %749 = vmatprep.subr.bf16.mxu0 0
          %750 = vmatpush1.bf16.msra.mxu0 0
          %751 = vmatprep.subr.bf16.mxu0 0
          %752 = vmatpush1.bf16.msra.mxu0 0
          %753 = vmatprep.subr.bf16.mxu0 0
          %754 = vmatpush1.bf16.msra.mxu0 0
          %755 = vmatprep.subr.bf16.mxu0 0
          %756 = vmatpush1.bf16.msra.mxu0 0
          %757 = vmatprep.subr.bf16.mxu0 0
          %758 = vmatpush1.bf16.msra.mxu0 0
          %759 = vmatprep.subr.bf16.mxu0 0
          %760 = vmatpush1.bf16.msra.mxu0 %v741
          %761 = vmatprep.subr.bf16.mxu0 0
          %762 = vmatpush1.bf16.msra.mxu0 %v740
          %763 = vmatprep.subr.bf16.mxu0 0
          %764 = vmatpush2.bf16.msra.mxu0 0
          %765 = vmatprep.subr.bf16.mxu0 0
          %766 = vmatpush2.bf16.msra.mxu0 0
          %767 = vmatprep.subr.bf16.mxu0 0
          %768 = vmatpush2.bf16.msra.mxu0 0
          %769 = vmatprep.subr.bf16.mxu0 0
          %770 = vmatpush2.bf16.msra.mxu0 0
          %771 = vmatprep.subr.bf16.mxu0 0
          %772 = vmatpush2.bf16.msra.mxu0 0
          %773 = vmatprep.subr.bf16.mxu0 0
          %774 = vmatpush2.bf16.msra.mxu0 0
          %775 = vmatprep.subr.bf16.mxu0 0
          %776 = vmatpush2.bf16.msra.mxu0 0
          %777 = vmatprep.subr.bf16.mxu0 0
          %778 = vmatpush2.bf16.msra.mxu0 0
          %779 = vmatprep.mubr.bf16.mxu0 0
          %780 = vmatmul.mubr.bf16.gmra.mxu0 %v745
          %v781 = vpop.f32.mrf.mxu0
          %v782 = vadd.f32 %v730, %v781
          %v783 = vpop.f32.mrf.mxu0
          %v784 = vpop.f32.mrf.mxu0
          %v785 = vadd.f32 %v730, %v784
          %v786 = vpop.f32.mrf.mxu0
          %787 = vdwg.mxu0
          %788 = vst.msk [vmem:[%s460] sm:$0xff] %vm700, %v782
          %789 = vst.msk [vmem:[%s460 + $0x8] sm:$0xff] %vm700, %v785
        $region138: #{dehnn_forward.8} parent=121 // pred_fallthru
          _
        %s790 = smul.u32 2, %s22
        %p791 = scmp.lt.s32.totalorder %s790, 31
        %s792 = scalar_select %p791, %s790, 31
        %s793 = smul.addr %s792, 8
        %s794 = scalar_lea.vmem %s7, %s793
        // Predicated region
        $region139: #{dehnn_forward.8} parent=121 // pred_check
          %p795 = pneg %p219
        $region140: #{dehnn_forward.8} parent=121 // pred_check_branch
          %797 = sbr.rel (%p795) target = $region142
        $region141: #{dehnn_forward.8} parent=121 // pred_region
          %s798 = smul.u32 2, %s22
        $region142: #{dehnn_forward.8} parent=121 // pred_fallthru
          _
      $region122: #{dehnn_forward.8} parent=5 // pred_fallthru
        _
      %p799 = scmp.le.s32.totalorder 2, %s13
      // Predicated region
      $region143: #{dehnn_forward.8} parent=5 // pred_check
        %p800 = pneg %p799
      $region144: #{dehnn_forward.8} parent=5 // pred_check_branch
        %802 = sbr.rel (%p800) target = $region146
      $region145: #{dehnn_forward.8} parent=5 // pred_region
        %s803 = ssub.s32 %s13, 2
        // Predicated region
        $region147: #{dehnn_forward.8} parent=145 // pred_check
          %p804 = pneg %p225
        $region148: #{dehnn_forward.8} parent=145 // pred_check_branch
          %806 = sbr.rel (%p804) target = $region150
        $region149: #{dehnn_forward.8} parent=145 // pred_region
          %s807 = smul.u32 2, %s24
          %p808 = scmp.lt.s32.totalorder %s807, 31
          %s809 = scalar_select %p808, %s807, 31
          %s810 = smul.addr %s809, 8
          %s811 = scalar_lea.vmem %s7, %s810
        $region150: #{dehnn_forward.8} parent=145 // pred_fallthru
          _
      $region146: #{dehnn_forward.8} parent=5 // pred_fallthru
        _
    $region6: #{dehnn_forward.8} parent=1 // loop_footer
      %s17 = sadd.s32 1, %s13
    $region7: #{dehnn_forward.8} parent=1 // loop_footer_branch
      %12 = sbr.rel target = $region3
    $region8: #{dehnn_forward.8} parent=1 // loop_exit
      _

// kernel: dehnn_forward.5
$region0: #{dehnn_forward.5}
  #allocation0 [shape = 'u32[]', space=smem, size = 0x4, offset = 0x4, fixed_abs, tag = 'smem constant byte address 0x4 - core index']
  #allocation1 [shape = 'u32[144,128]{1,0:T(1,128)}', space=vmem, size = 0x12000, scoped, tag = 'internal scratch']
  %s0 = inlined_call_operand.vmem [shape: f32[256,16], index: 0, kind: input, shape index: {}]
  %s1 = inlined_call_operand.vmem [shape: bf16[16,32], index: 1, kind: input, shape index: {}]
  %s2 = inlined_call_operand.vmem [shape: f32[1,32], index: 2, kind: input, shape index: {}]
  %s3 = inlined_call_operand.vmem [shape: bf16[32,16], index: 3, kind: input, shape index: {}]
  %s4 = inlined_call_operand.vmem [shape: f32[1,16], index: 4, kind: input, shape index: {}]
  %s5 = inlined_call_operand.vmem [shape: bf16[16,32], index: 5, kind: input, shape index: {}]
  %s6 = inlined_call_operand.vmem [shape: bf16[16,32], index: 6, kind: input, shape index: {}]
  %s7 = inlined_call_operand.vmem [shape: bf16[16,32], index: 7, kind: input, shape index: {}]
  %s8 = inlined_call_operand.vmem [shape: f32[1,32], index: 8, kind: input, shape index: {}]
  %s9 = inlined_call_operand.vmem [shape: bf16[32,8], index: 9, kind: input, shape index: {}]
  %s10 = inlined_call_operand.vmem [shape: f32[1,8], index: 10, kind: input, shape index: {}]
  %s11 = inlined_call_operand.vmem [shape: bf16[256,32], index: 11, kind: output, shape index: {0}]
  %s12 = inlined_call_operand.vmem [shape: bf16[256,32], index: 12, kind: output, shape index: {1}]
  %s13 = inlined_call_operand.vmem [shape: bf16[256,8], index: 13, kind: output, shape index: {2}]
  %14 = xla_tuple %s11, %s12, %s13
  %s15 = sld [smem:[#allocation0]]
  $region93: #{dehnn_forward.5} parent=0
    _
  %s17 = ssub.s32 1, %s15
  %s18 = scalar_select 0, %s17, %s15
  loop: start=0, step=1, limit=18
  $region2: #{dehnn_forward.5} parent=0 // loop_pre_header
    _
  $region3: #{dehnn_forward.5} parent=0 // loop_header
    %s20 = sphi 0, %s24
    %p21 = scmp.ge.s32.totalorder %s20, 18
    %s30 = sphi 0, %s32
    %s33 = sphi 0, %s30
    %s34 = sphi 0, %s33
    %s50 = sphi 0, %s34
    %s54 = sphi 0, %s54
    %s56 = sphi 0, %s54
    %s57 = sphi 0, %s56
    %s71 = sphi 0, %s57
    %s75 = sphi 0, %s75
    %s77 = sphi 0, %s75
    %s78 = sphi 0, %s77
    %s92 = sphi 0, %s78
    %s96 = sphi 0, %s96
    %s98 = sphi 0, %s96
    %s99 = sphi 0, %s98
    %s113 = sphi 0, %s99
    %s117 = sphi 0, %s117
    %s119 = sphi 0, %s117
    %s120 = sphi 0, %s119
    %s134 = sphi 0, %s120
    %s138 = sphi 0, %s138
    %s140 = sphi 0, %s138
    %s141 = sphi 0, %s140
    %s155 = sphi 0, %s141
    %s159 = sphi 0, %s159
    %s161 = sphi 0, %s159
    %s162 = sphi 0, %s161
    %s176 = sphi 0, %s162
    %s180 = sphi 0, %s180
    %s182 = sphi 0, %s180
    %s183 = sphi 0, %s182
    %s197 = sphi 0, %s183
    %s201 = sphi 0, %s201
    %s203 = sphi 0, %s201
    %s204 = sphi 0, %s203
    %s218 = sphi 0, %s204
    %s222 = sphi 0, %s222
    %s224 = sphi 0, %s222
    %s225 = sphi 0, %s224
    %s239 = sphi 0, %s225
    %s243 = sphi 0, %s243
    %s245 = sphi 0, %s243
    %s246 = sphi 0, %s245
    %s260 = sphi 0, %s246
    %s266 = sphi 0, %s268
    %s269 = sphi 0, %s266
    %s270 = sphi 0, %s269
    %s286 = sphi 0, %s270
    %s292 = sphi 0, %s294
    %s295 = sphi 0, %s292
    %s296 = sphi 0, %s295
    %s312 = sphi 0, %s296
    %s318 = sphi 0, %s320
    %s321 = sphi 0, %s318
    %s322 = sphi 0, %s321
    %s338 = sphi 0, %s322
  $region4: #{dehnn_forward.5} parent=0 // loop_header_branch
    %23 = sbr.rel (%p21) target = $region8
  $region5: #{dehnn_forward.5} parent=0 // loop_body
    %s25 = ssub.s32 %s20, 1
    %s26 = ssub.s32 %s20, 2
    %s27 = sadd.s32 %s20, 1
    %s28 = ssub.s32 %s20, %s27
    %p29 = scmp.eq.s32.totalorder %s28, 0
    %s31 = sadd.s32 %s30, 1
    %s32 = scalar_select %p29, %s30, %s31
    %p35 = pneg %p29
    %p36 = scmp.eq.s32.totalorder %s20, 15
    %p37 = por %p35, %p36
    %p38 = scmp.ne.s32.totalorder %s30, %s33
    %p39 = scmp.eq.s32.totalorder %s20, 0
    %p40 = por %p38, %p39
    %p41 = scmp.ne.s32.totalorder %s30, %s33
    %p42 = scmp.eq.s32.totalorder %s25, 15
    %p43 = por %p41, %p42
    %p44 = scmp.ne.s32.totalorder %s33, %s34
    %p45 = scmp.eq.s32.totalorder %s25, 0
    %p46 = por %p44, %p45
    %p47 = scmp.ne.s32.totalorder %s33, %s34
    %p48 = scmp.eq.s32.totalorder %s26, 15
    %p49 = por %p47, %p48
    %p51 = scmp.ne.s32.totalorder %s34, %s50
    %p52 = scmp.eq.s32.totalorder %s26, 0
    %p53 = por %p51, %p52
    %s55 = sadd.s32 %s54, 1
    %p58 = scmp.eq.s32.totalorder %s20, 15
    %p59 = scmp.ne.s32.totalorder %s54, %s56
    %p60 = scmp.eq.s32.totalorder %s20, 0
    %p61 = por %p59, %p60
    %p62 = scmp.ne.s32.totalorder %s54, %s56
    %p63 = scmp.eq.s32.totalorder %s25, 15
    %p64 = por %p62, %p63
    %p65 = scmp.ne.s32.totalorder %s56, %s57
    %p66 = scmp.eq.s32.totalorder %s25, 0
    %p67 = por %p65, %p66
    %p68 = scmp.ne.s32.totalorder %s56, %s57
    %p69 = scmp.eq.s32.totalorder %s26, 15
    %p70 = por %p68, %p69
    %p72 = scmp.ne.s32.totalorder %s57, %s71
    %p73 = scmp.eq.s32.totalorder %s26, 0
    %p74 = por %p72, %p73
    %s76 = sadd.s32 %s75, 1
    %p79 = scmp.eq.s32.totalorder %s20, 15
    %p80 = scmp.ne.s32.totalorder %s75, %s77
    %p81 = scmp.eq.s32.totalorder %s20, 0
    %p82 = por %p80, %p81
    %p83 = scmp.ne.s32.totalorder %s75, %s77
    %p84 = scmp.eq.s32.totalorder %s25, 15
    %p85 = por %p83, %p84
    %p86 = scmp.ne.s32.totalorder %s77, %s78
    %p87 = scmp.eq.s32.totalorder %s25, 0
    %p88 = por %p86, %p87
    %p89 = scmp.ne.s32.totalorder %s77, %s78
    %p90 = scmp.eq.s32.totalorder %s26, 15
    %p91 = por %p89, %p90
    %p93 = scmp.ne.s32.totalorder %s78, %s92
    %p94 = scmp.eq.s32.totalorder %s26, 0
    %p95 = por %p93, %p94
    %s97 = sadd.s32 %s96, 1
    %p100 = scmp.eq.s32.totalorder %s20, 15
    %p101 = scmp.ne.s32.totalorder %s96, %s98
    %p102 = scmp.eq.s32.totalorder %s20, 0
    %p103 = por %p101, %p102
    %p104 = scmp.ne.s32.totalorder %s96, %s98
    %p105 = scmp.eq.s32.totalorder %s25, 15
    %p106 = por %p104, %p105
    %p107 = scmp.ne.s32.totalorder %s98, %s99
    %p108 = scmp.eq.s32.totalorder %s25, 0
    %p109 = por %p107, %p108
    %p110 = scmp.ne.s32.totalorder %s98, %s99
    %p111 = scmp.eq.s32.totalorder %s26, 15
    %p112 = por %p110, %p111
    %p114 = scmp.ne.s32.totalorder %s99, %s113
    %p115 = scmp.eq.s32.totalorder %s26, 0
    %p116 = por %p114, %p115
    %s118 = sadd.s32 %s117, 1
    %p121 = scmp.eq.s32.totalorder %s20, 15
    %p122 = scmp.ne.s32.totalorder %s117, %s119
    %p123 = scmp.eq.s32.totalorder %s20, 0
    %p124 = por %p122, %p123
    %p125 = scmp.ne.s32.totalorder %s117, %s119
    %p126 = scmp.eq.s32.totalorder %s25, 15
    %p127 = por %p125, %p126
    %p128 = scmp.ne.s32.totalorder %s119, %s120
    %p129 = scmp.eq.s32.totalorder %s25, 0
    %p130 = por %p128, %p129
    %p131 = scmp.ne.s32.totalorder %s119, %s120
    %p132 = scmp.eq.s32.totalorder %s26, 15
    %p133 = por %p131, %p132
    %p135 = scmp.ne.s32.totalorder %s120, %s134
    %p136 = scmp.eq.s32.totalorder %s26, 0
    %p137 = por %p135, %p136
    %s139 = sadd.s32 %s138, 1
    %p142 = scmp.eq.s32.totalorder %s20, 15
    %p143 = scmp.ne.s32.totalorder %s138, %s140
    %p144 = scmp.eq.s32.totalorder %s20, 0
    %p145 = por %p143, %p144
    %p146 = scmp.ne.s32.totalorder %s138, %s140
    %p147 = scmp.eq.s32.totalorder %s25, 15
    %p148 = por %p146, %p147
    %p149 = scmp.ne.s32.totalorder %s140, %s141
    %p150 = scmp.eq.s32.totalorder %s25, 0
    %p151 = por %p149, %p150
    %p152 = scmp.ne.s32.totalorder %s140, %s141
    %p153 = scmp.eq.s32.totalorder %s26, 15
    %p154 = por %p152, %p153
    %p156 = scmp.ne.s32.totalorder %s141, %s155
    %p157 = scmp.eq.s32.totalorder %s26, 0
    %p158 = por %p156, %p157
    %s160 = sadd.s32 %s159, 1
    %p163 = scmp.eq.s32.totalorder %s20, 15
    %p164 = scmp.ne.s32.totalorder %s159, %s161
    %p165 = scmp.eq.s32.totalorder %s20, 0
    %p166 = por %p164, %p165
    %p167 = scmp.ne.s32.totalorder %s159, %s161
    %p168 = scmp.eq.s32.totalorder %s25, 15
    %p169 = por %p167, %p168
    %p170 = scmp.ne.s32.totalorder %s161, %s162
    %p171 = scmp.eq.s32.totalorder %s25, 0
    %p172 = por %p170, %p171
    %p173 = scmp.ne.s32.totalorder %s161, %s162
    %p174 = scmp.eq.s32.totalorder %s26, 15
    %p175 = por %p173, %p174
    %p177 = scmp.ne.s32.totalorder %s162, %s176
    %p178 = scmp.eq.s32.totalorder %s26, 0
    %p179 = por %p177, %p178
    %s181 = sadd.s32 %s180, 1
    %p184 = scmp.eq.s32.totalorder %s20, 15
    %p185 = scmp.ne.s32.totalorder %s180, %s182
    %p186 = scmp.eq.s32.totalorder %s20, 0
    %p187 = por %p185, %p186
    %p188 = scmp.ne.s32.totalorder %s180, %s182
    %p189 = scmp.eq.s32.totalorder %s25, 15
    %p190 = por %p188, %p189
    %p191 = scmp.ne.s32.totalorder %s182, %s183
    %p192 = scmp.eq.s32.totalorder %s25, 0
    %p193 = por %p191, %p192
    %p194 = scmp.ne.s32.totalorder %s182, %s183
    %p195 = scmp.eq.s32.totalorder %s26, 15
    %p196 = por %p194, %p195
    %p198 = scmp.ne.s32.totalorder %s183, %s197
    %p199 = scmp.eq.s32.totalorder %s26, 0
    %p200 = por %p198, %p199
    %s202 = sadd.s32 %s201, 1
    %p205 = scmp.eq.s32.totalorder %s20, 15
    %p206 = scmp.ne.s32.totalorder %s201, %s203
    %p207 = scmp.eq.s32.totalorder %s20, 0
    %p208 = por %p206, %p207
    %p209 = scmp.ne.s32.totalorder %s201, %s203
    %p210 = scmp.eq.s32.totalorder %s25, 15
    %p211 = por %p209, %p210
    %p212 = scmp.ne.s32.totalorder %s203, %s204
    %p213 = scmp.eq.s32.totalorder %s25, 0
    %p214 = por %p212, %p213
    %p215 = scmp.ne.s32.totalorder %s203, %s204
    %p216 = scmp.eq.s32.totalorder %s26, 15
    %p217 = por %p215, %p216
    %p219 = scmp.ne.s32.totalorder %s204, %s218
    %p220 = scmp.eq.s32.totalorder %s26, 0
    %p221 = por %p219, %p220
    %s223 = sadd.s32 %s222, 1
    %p226 = scmp.eq.s32.totalorder %s20, 15
    %p227 = scmp.ne.s32.totalorder %s222, %s224
    %p228 = scmp.eq.s32.totalorder %s20, 0
    %p229 = por %p227, %p228
    %p230 = scmp.ne.s32.totalorder %s222, %s224
    %p231 = scmp.eq.s32.totalorder %s25, 15
    %p232 = por %p230, %p231
    %p233 = scmp.ne.s32.totalorder %s224, %s225
    %p234 = scmp.eq.s32.totalorder %s25, 0
    %p235 = por %p233, %p234
    %p236 = scmp.ne.s32.totalorder %s224, %s225
    %p237 = scmp.eq.s32.totalorder %s26, 15
    %p238 = por %p236, %p237
    %p240 = scmp.ne.s32.totalorder %s225, %s239
    %p241 = scmp.eq.s32.totalorder %s26, 0
    %p242 = por %p240, %p241
    %s244 = sadd.s32 %s243, 1
    %p247 = scmp.eq.s32.totalorder %s20, 15
    %p248 = scmp.ne.s32.totalorder %s243, %s245
    %p249 = scmp.eq.s32.totalorder %s20, 0
    %p250 = por %p248, %p249
    %p251 = scmp.ne.s32.totalorder %s243, %s245
    %p252 = scmp.eq.s32.totalorder %s25, 15
    %p253 = por %p251, %p252
    %p254 = scmp.ne.s32.totalorder %s245, %s246
    %p255 = scmp.eq.s32.totalorder %s25, 0
    %p256 = por %p254, %p255
    %p257 = scmp.ne.s32.totalorder %s245, %s246
    %p258 = scmp.eq.s32.totalorder %s26, 15
    %p259 = por %p257, %p258
    %p261 = scmp.ne.s32.totalorder %s246, %s260
    %p262 = scmp.eq.s32.totalorder %s26, 0
    %p263 = por %p261, %p262
    %s264 = ssub.s32 %s20, %s27
    %p265 = scmp.eq.s32.totalorder %s264, 0
    %s267 = sadd.s32 %s266, 1
    %s268 = scalar_select %p265, %s266, %s267
    %p271 = pneg %p265
    %p272 = scmp.eq.s32.totalorder %s20, 15
    %p273 = por %p271, %p272
    %p274 = scmp.ne.s32.totalorder %s266, %s269
    %p275 = scmp.eq.s32.totalorder %s20, 0
    %p276 = por %p274, %p275
    %p277 = scmp.ne.s32.totalorder %s266, %s269
    %p278 = scmp.eq.s32.totalorder %s25, 15
    %p279 = por %p277, %p278
    %p280 = scmp.ne.s32.totalorder %s269, %s270
    %p281 = scmp.eq.s32.totalorder %s25, 0
    %p282 = por %p280, %p281
    %p283 = scmp.ne.s32.totalorder %s269, %s270
    %p284 = scmp.eq.s32.totalorder %s26, 15
    %p285 = por %p283, %p284
    %p287 = scmp.ne.s32.totalorder %s270, %s286
    %p288 = scmp.eq.s32.totalorder %s26, 0
    %p289 = por %p287, %p288
    %s290 = ssub.s32 %s20, %s27
    %p291 = scmp.eq.s32.totalorder %s290, 0
    %s293 = sadd.s32 %s292, 1
    %s294 = scalar_select %p291, %s292, %s293
    %p297 = pneg %p291
    %p298 = scmp.eq.s32.totalorder %s20, 15
    %p299 = por %p297, %p298
    %p300 = scmp.ne.s32.totalorder %s292, %s295
    %p301 = scmp.eq.s32.totalorder %s20, 0
    %p302 = por %p300, %p301
    %p303 = scmp.ne.s32.totalorder %s292, %s295
    %p304 = scmp.eq.s32.totalorder %s25, 15
    %p305 = por %p303, %p304
    %p306 = scmp.ne.s32.totalorder %s295, %s296
    %p307 = scmp.eq.s32.totalorder %s25, 0
    %p308 = por %p306, %p307
    %p309 = scmp.ne.s32.totalorder %s295, %s296
    %p310 = scmp.eq.s32.totalorder %s26, 15
    %p311 = por %p309, %p310
    %p313 = scmp.ne.s32.totalorder %s296, %s312
    %p314 = scmp.eq.s32.totalorder %s26, 0
    %p315 = por %p313, %p314
    %s316 = ssub.s32 %s20, %s27
    %p317 = scmp.eq.s32.totalorder %s316, 0
    %s319 = sadd.s32 %s318, 1
    %s320 = scalar_select %p317, %s318, %s319
    %p323 = pneg %p317
    %p324 = scmp.eq.s32.totalorder %s20, 15
    %p325 = por %p323, %p324
    %p326 = scmp.ne.s32.totalorder %s318, %s321
    %p327 = scmp.eq.s32.totalorder %s20, 0
    %p328 = por %p326, %p327
    %p329 = scmp.ne.s32.totalorder %s318, %s321
    %p330 = scmp.eq.s32.totalorder %s25, 15
    %p331 = por %p329, %p330
    %p332 = scmp.ne.s32.totalorder %s321, %s322
    %p333 = scmp.eq.s32.totalorder %s25, 0
    %p334 = por %p332, %p333
    %p335 = scmp.ne.s32.totalorder %s321, %s322
    %p336 = scmp.eq.s32.totalorder %s26, 15
    %p337 = por %p335, %p336
    %p339 = scmp.ne.s32.totalorder %s322, %s338
    %p340 = scmp.eq.s32.totalorder %s26, 0
    %p341 = por %p339, %p340
    %p342 = scmp.le.s32.totalorder 1, %s20
    %p343 = scmp.lt.s32.totalorder %s20, 17
    %p344 = pnand %p342, %p343
    %p345 = pneg %p344
    // Predicated region
    $region9: #{dehnn_forward.5} parent=5 // pred_check
      _
    $region10: #{dehnn_forward.5} parent=5 // pred_check_branch
      %347 = sbr.rel (%p344) target = $region12
    $region11: #{dehnn_forward.5} parent=5 // pred_region
      %s348 = ssub.s32 %s20, 1
      // Predicated region
      $region13: #{dehnn_forward.5} parent=11 // pred_check
        %p349 = pneg %p67
      $region14: #{dehnn_forward.5} parent=11 // pred_check_branch
        %351 = sbr.rel (%p349) target = $region16
      $region15: #{dehnn_forward.5} parent=11 // pred_region
        _
      $region16: #{dehnn_forward.5} parent=11 // pred_fallthru
        _
      // Predicated region
      $region17: #{dehnn_forward.5} parent=11 // pred_check
        %p352 = pneg %p88
      $region18: #{dehnn_forward.5} parent=11 // pred_check_branch
        %354 = sbr.rel (%p352) target = $region20
      $region19: #{dehnn_forward.5} parent=11 // pred_region
        _
      $region20: #{dehnn_forward.5} parent=11 // pred_fallthru
        _
      // Predicated region
      $region21: #{dehnn_forward.5} parent=11 // pred_check
        %p355 = pneg %p109
      $region22: #{dehnn_forward.5} parent=11 // pred_check_branch
        %357 = sbr.rel (%p355) target = $region24
      $region23: #{dehnn_forward.5} parent=11 // pred_region
        _
      $region24: #{dehnn_forward.5} parent=11 // pred_fallthru
        _
      // Predicated region
      $region25: #{dehnn_forward.5} parent=11 // pred_check
        %p358 = pneg %p130
      $region26: #{dehnn_forward.5} parent=11 // pred_check_branch
        %360 = sbr.rel (%p358) target = $region28
      $region27: #{dehnn_forward.5} parent=11 // pred_region
        _
      $region28: #{dehnn_forward.5} parent=11 // pred_fallthru
        _
      // Predicated region
      $region29: #{dehnn_forward.5} parent=11 // pred_check
        %p361 = pneg %p151
      $region30: #{dehnn_forward.5} parent=11 // pred_check_branch
        %363 = sbr.rel (%p361) target = $region32
      $region31: #{dehnn_forward.5} parent=11 // pred_region
        _
      $region32: #{dehnn_forward.5} parent=11 // pred_fallthru
        _
      // Predicated region
      $region33: #{dehnn_forward.5} parent=11 // pred_check
        %p364 = pneg %p172
      $region34: #{dehnn_forward.5} parent=11 // pred_check_branch
        %366 = sbr.rel (%p364) target = $region36
      $region35: #{dehnn_forward.5} parent=11 // pred_region
        _
      $region36: #{dehnn_forward.5} parent=11 // pred_fallthru
        _
      // Predicated region
      $region37: #{dehnn_forward.5} parent=11 // pred_check
        %p367 = pneg %p193
      $region38: #{dehnn_forward.5} parent=11 // pred_check_branch
        %369 = sbr.rel (%p367) target = $region40
      $region39: #{dehnn_forward.5} parent=11 // pred_region
        _
      $region40: #{dehnn_forward.5} parent=11 // pred_fallthru
        _
      // Predicated region
      $region41: #{dehnn_forward.5} parent=11 // pred_check
        %p370 = pneg %p214
      $region42: #{dehnn_forward.5} parent=11 // pred_check_branch
        %372 = sbr.rel (%p370) target = $region44
      $region43: #{dehnn_forward.5} parent=11 // pred_region
        _
      $region44: #{dehnn_forward.5} parent=11 // pred_fallthru
        _
      // Predicated region
      $region45: #{dehnn_forward.5} parent=11 // pred_check
        %p373 = pneg %p235
      $region46: #{dehnn_forward.5} parent=11 // pred_check_branch
        %375 = sbr.rel (%p373) target = $region48
      $region47: #{dehnn_forward.5} parent=11 // pred_region
        _
      $region48: #{dehnn_forward.5} parent=11 // pred_fallthru
        _
      // Predicated region
      $region49: #{dehnn_forward.5} parent=11 // pred_check
        %p376 = pneg %p256
      $region50: #{dehnn_forward.5} parent=11 // pred_check_branch
        %378 = sbr.rel (%p376) target = $region52
      $region51: #{dehnn_forward.5} parent=11 // pred_region
        _
      $region52: #{dehnn_forward.5} parent=11 // pred_fallthru
        _
    $region12: #{dehnn_forward.5} parent=5 // pred_fallthru
      _
    %p379 = scmp.lt.s32.totalorder %s20, 16
    // Predicated region
    $region53: #{dehnn_forward.5} parent=5 // pred_check
      %p380 = pneg %p379
    $region54: #{dehnn_forward.5} parent=5 // pred_check_branch
      %382 = sbr.rel (%p380) target = $region56
    $region55: #{dehnn_forward.5} parent=5 // pred_region
      // Predicated region
      $region57: #{dehnn_forward.5} parent=55 // pred_check
        %p383 = pneg %p40
      $region58: #{dehnn_forward.5} parent=55 // pred_check_branch
        %385 = sbr.rel (%p383) target = $region60
      $region59: #{dehnn_forward.5} parent=55 // pred_region
        %s386 = smul.u32 2, %s20
        %p387 = scmp.lt.s32.totalorder %s386, 31
        %s388 = scalar_select %p387, %s386, 31
        %s389 = smul.addr %s388, 8
        %s390 = scalar_lea.vmem %s0, %s389
        %s391 = smul.u32 2, %s20
      $region60: #{dehnn_forward.5} parent=55 // pred_fallthru
        _
    $region56: #{dehnn_forward.5} parent=5 // pred_fallthru
      _
    %p392 = scmp.le.s32.totalorder 1, %s20
    %p393 = scmp.lt.s32.totalorder %s20, 17
    %p394 = pnand %p392, %p393
    %p395 = pneg %p394
    // Predicated region
    $region61: #{dehnn_forward.5} parent=5 // pred_check
      _
    $region62: #{dehnn_forward.5} parent=5 // pred_check_branch
      %397 = sbr.rel (%p394) target = $region64
    $region63: #{dehnn_forward.5} parent=5 // pred_region
      %s398 = ssub.s32 %s20, 1
      %s399 = smul.u32 2, %s25
      %p400 = scmp.lt.s32.totalorder %s399, 31
      %s401 = scalar_select %p400, %s399, 31
      %s402 = smul.addr %s401, 8
      %s403 = scalar_lea.vmem %s0, %s402
      %p404 = pneg %p46
      %p405 = pneg %p43
      %p406 = pneg %p67
      %p407 = pneg %p64
      %p408 = pneg %p88
      %p409 = pneg %p85
      %p410 = pneg %p109
      %p411 = pneg %p106
      %p412 = pneg %p130
      %p413 = pneg %p127
      %p414 = pneg %p151
      %p415 = pneg %p148
      %p416 = pneg %p172
      %p417 = pneg %p169
      %p418 = pneg %p193
      %p419 = pneg %p190
      %p420 = pneg %p214
      %p421 = pneg %p211
      %p422 = pneg %p235
      %p423 = pneg %p232
      %p424 = pneg %p256
      %p425 = pneg %p253
      %p426 = pneg %p282
      %p427 = pneg %p279
      %s428 = smul.u32 2, %s25
      %p429 = scmp.lt.s32.totalorder %s428, 31
      %s430 = scalar_select %p429, %s428, 31
      %s431 = smul.addr %s430, 4
      %s432 = scalar_lea.vmem %s11, %s431
      %p433 = pneg %p308
      %p434 = pneg %p305
      %s435 = smul.u32 2, %s25
      %p436 = scmp.lt.s32.totalorder %s435, 31
      %s437 = scalar_select %p436, %s435, 31
      %s438 = smul.addr %s437, 4
      %s439 = scalar_lea.vmem %s12, %s438
      %p440 = pneg %p334
      %p441 = pneg %p331
      %s442 = smul.u32 2, %s25
      %p443 = scmp.lt.s32.totalorder %s442, 31
      %s444 = scalar_select %p443, %s442, 31
      %s445 = smul.addr %s444, 4
      %s446 = scalar_lea.vmem %s13, %s445
      %s447 = smul.u32 2, %s25
      %p448 = scmp.lt.s32.totalorder %s447, 31
      %s449 = scalar_select %p448, %s447, 31
      %s450 = smul.addr %s449, 8
      %s451 = scalar_lea.vmem %s0, %s450
      %s452 = smul.u32 2, %s25
      %s453 = smul.u32 2, %s25
      %p454 = scmp.lt.s32.totalorder %s453, 31
      %s455 = scalar_select %p454, %s453, 31
      %s456 = smul.addr %s455, 4
      %s457 = scalar_lea.vmem %s11, %s456
      %s458 = smul.u32 2, %s25
      %s459 = smul.u32 2, %s25
      %p460 = scmp.lt.s32.totalorder %s459, 31
      %s461 = scalar_select %p460, %s459, 31
      %s462 = smul.addr %s461, 4
      %s463 = scalar_lea.vmem %s12, %s462
      %s464 = smul.u32 2, %s25
      %s465 = smul.u32 2, %s25
      %p466 = scmp.lt.s32.totalorder %s465, 31
      %s467 = scalar_select %p466, %s465, 31
      %s468 = smul.addr %s467, 4
      %s469 = scalar_lea.vmem %s13, %s468
      %s470 = smul.u32 2, %s25
      %v472 = vld [vmem:[%s451] sm:$0xff]
      %v473 = vld [vmem:[%s451 + $0x8] sm:$0xff]
      %v474 = vpack.c.bf16 %v473, %v472
      %v475 = vld [vmem:[%s1] sm:$0xf]
      %v476 = vld [vmem:[%s1 + $0x4] sm:$0xf]
      %v477 = vld [vmem:[%s2] sm:$0x1]
      %v479 = vlaneseq
      %v480 = vshrl.u32 %v479, 7
      %v481 = vsub.s32 0, %v480
      %v482 = vrot.slane %v477, %v481
      %v486 = vunpack.c.l.b16 %v475
      %v487 = vunpack.c.l.b16 %v476
      %v488 = vpack.c.b16 %v487, %v486
      %vm490 = vcmask 130048
      %v492 = vsel %vm490, %v474, 0
      %494 = vmatprep.subr.bf16.mxu0 0
      %495 = vmatpush1.bf16.msra.mxu0 0
      %496 = vmatprep.subr.bf16.mxu0 0
      %497 = vmatpush1.bf16.msra.mxu0 0
      %498 = vmatprep.subr.bf16.mxu0 0
      %499 = vmatpush1.bf16.msra.mxu0 0
      %500 = vmatprep.subr.bf16.mxu0 0
      %501 = vmatpush1.bf16.msra.mxu0 0
      %502 = vmatprep.subr.bf16.mxu0 0
      %503 = vmatpush1.bf16.msra.mxu0 0
      %504 = vmatprep.subr.bf16.mxu0 0
      %505 = vmatpush1.bf16.msra.mxu0 0
      %506 = vmatprep.subr.bf16.mxu0 0
      %507 = vmatpush1.bf16.msra.mxu0 0
      %508 = vmatprep.subr.bf16.mxu0 0
      %509 = vmatpush1.bf16.msra.mxu0 %v488
      %510 = vmatprep.subr.bf16.mxu0 0
      %511 = vmatpush2.bf16.msra.mxu0 0
      %512 = vmatprep.subr.bf16.mxu0 0
      %513 = vmatpush2.bf16.msra.mxu0 0
      %514 = vmatprep.subr.bf16.mxu0 0
      %515 = vmatpush2.bf16.msra.mxu0 0
      %516 = vmatprep.subr.bf16.mxu0 0
      %517 = vmatpush2.bf16.msra.mxu0 0
      %518 = vmatprep.subr.bf16.mxu0 0
      %519 = vmatpush2.bf16.msra.mxu0 0
      %520 = vmatprep.subr.bf16.mxu0 0
      %521 = vmatpush2.bf16.msra.mxu0 0
      %522 = vmatprep.subr.bf16.mxu0 0
      %523 = vmatpush2.bf16.msra.mxu0 0
      %524 = vmatprep.subr.bf16.mxu0 0
      %525 = vmatpush2.bf16.msra.mxu0 0
      %526 = vmatprep.mubr.bf16.mxu0 0
      %527 = vmatmul.mubr.bf16.gmra.mxu0 %v492
      %v528 = vpop.f32.mrf.mxu0
      %v529 = vadd.f32 %v482, %v528
      %v530 = vpop.f32.mrf.mxu0
      %v531 = vpop.f32.mrf.mxu0
      %v532 = vadd.f32 %v482, %v531
      %v533 = vpop.f32.mrf.mxu0
      %534 = vdwg.mxu0
      %v535 = vmax.f32 %v529, 0.0
      %v536 = vmax.f32 %v532, 0.0
      %v537 = vpack.c.bf16 %v536, %v535
      %v538 = vld [vmem:[%s3] sm:$0xf]
      %v539 = vld [vmem:[%s3 + $0x4] sm:$0xf]
      %v540 = vld [vmem:[%s3 + $0x8] sm:$0xf]
      %v541 = vld [vmem:[%s3 + $0xc] sm:$0xf]
      %v542 = vld [vmem:[%s4] sm:$0x1]
      %v544 = vlaneseq
      %v545 = vshrl.u32 %v544, 7
      %v546 = vsub.s32 0, %v545
      %v547 = vrot.slane %v542, %v546
      %v553 = vunpack.c.l.b16 %v538
      %v554 = vunpack.c.l.b16 %v539
      %v555 = vunpack.c.l.b16 %v540
      %v556 = vunpack.c.l.b16 %v541
      %v557 = vpack.c.b16 %v554, %v553
      %v558 = vpack.c.b16 %v556, %v555
      %vm561 = vcmask 261120
      %v563 = vsel %vm561, %v537, 0
      %565 = vmatprep.subr.bf16.mxu0 0
      %566 = vmatpush1.bf16.msra.mxu0 0
      %567 = vmatprep.subr.bf16.mxu0 0
      %568 = vmatpush1.bf16.msra.mxu0 0
      %569 = vmatprep.subr.bf16.mxu0 0
      %570 = vmatpush1.bf16.msra.mxu0 0
      %571 = vmatprep.subr.bf16.mxu0 0
      %572 = vmatpush1.bf16.msra.mxu0 0
      %573 = vmatprep.subr.bf16.mxu0 0
      %574 = vmatpush1.bf16.msra.mxu0 0
      %575 = vmatprep.subr.bf16.mxu0 0
      %576 = vmatpush1.bf16.msra.mxu0 0
      %577 = vmatprep.subr.bf16.mxu0 0
      %578 = vmatpush1.bf16.msra.mxu0 %v558
      %579 = vmatprep.subr.bf16.mxu0 0
      %580 = vmatpush1.bf16.msra.mxu0 %v557
      %581 = vmatprep.subr.bf16.mxu0 0
      %582 = vmatpush2.bf16.msra.mxu0 0
      %583 = vmatprep.subr.bf16.mxu0 0
      %584 = vmatpush2.bf16.msra.mxu0 0
      %585 = vmatprep.subr.bf16.mxu0 0
      %586 = vmatpush2.bf16.msra.mxu0 0
      %587 = vmatprep.subr.bf16.mxu0 0
      %588 = vmatpush2.bf16.msra.mxu0 0
      %589 = vmatprep.subr.bf16.mxu0 0
      %590 = vmatpush2.bf16.msra.mxu0 0
      %591 = vmatprep.subr.bf16.mxu0 0
      %592 = vmatpush2.bf16.msra.mxu0 0
      %593 = vmatprep.subr.bf16.mxu0 0
      %594 = vmatpush2.bf16.msra.mxu0 0
      %595 = vmatprep.subr.bf16.mxu0 0
      %596 = vmatpush2.bf16.msra.mxu0 0
      %597 = vmatprep.mubr.bf16.mxu0 0
      %598 = vmatmul.mubr.bf16.gmra.mxu0 %v563
      %v599 = vpop.f32.mrf.mxu0
      %v600 = vadd.f32 %v547, %v599
      %v601 = vpop.f32.mrf.mxu0
      %v602 = vpop.f32.mrf.mxu0
      %v603 = vadd.f32 %v547, %v602
      %v604 = vpop.f32.mrf.mxu0
      %605 = vdwg.mxu0
      %v606 = vpack.c.bf16 %v603, %v600
      %v607 = vld [vmem:[%s5] sm:$0xf]
      %v608 = vld [vmem:[%s5 + $0x4] sm:$0xf]
      %v611 = vunpack.c.l.b16 %v607
      %v612 = vunpack.c.l.b16 %v608
      %v613 = vpack.c.b16 %v612, %v611
      %v616 = vsel %vm490, %v606, 0
      %618 = vmatprep.subr.bf16.mxu0 0
      %619 = vmatpush1.bf16.msra.mxu0 0
      %620 = vmatprep.subr.bf16.mxu0 0
      %621 = vmatpush1.bf16.msra.mxu0 0
      %622 = vmatprep.subr.bf16.mxu0 0
      %623 = vmatpush1.bf16.msra.mxu0 0
      %624 = vmatprep.subr.bf16.mxu0 0
      %625 = vmatpush1.bf16.msra.mxu0 0
      %626 = vmatprep.subr.bf16.mxu0 0
      %627 = vmatpush1.bf16.msra.mxu0 0
      %628 = vmatprep.subr.bf16.mxu0 0
      %629 = vmatpush1.bf16.msra.mxu0 0
      %630 = vmatprep.subr.bf16.mxu0 0
      %631 = vmatpush1.bf16.msra.mxu0 0
      %632 = vmatprep.subr.bf16.mxu0 0
      %633 = vmatpush1.bf16.msra.mxu0 %v613
      %634 = vmatprep.subr.bf16.mxu0 0
      %635 = vmatpush2.bf16.msra.mxu0 0
      %636 = vmatprep.subr.bf16.mxu0 0
      %637 = vmatpush2.bf16.msra.mxu0 0
      %638 = vmatprep.subr.bf16.mxu0 0
      %639 = vmatpush2.bf16.msra.mxu0 0
      %640 = vmatprep.subr.bf16.mxu0 0
      %641 = vmatpush2.bf16.msra.mxu0 0
      %642 = vmatprep.subr.bf16.mxu0 0
      %643 = vmatpush2.bf16.msra.mxu0 0
      %644 = vmatprep.subr.bf16.mxu0 0
      %645 = vmatpush2.bf16.msra.mxu0 0
      %646 = vmatprep.subr.bf16.mxu0 0
      %647 = vmatpush2.bf16.msra.mxu0 0
      %648 = vmatprep.subr.bf16.mxu0 0
      %649 = vmatpush2.bf16.msra.mxu0 0
      %650 = vmatprep.mubr.bf16.mxu0 0
      %651 = vmatmul.mubr.bf16.gmra.mxu0 %v616
      %v652 = vpop.f32.mrf.mxu0
      %v653 = vadd.f32 0.0, %v652
      %v654 = vpop.f32.mrf.mxu0
      %v655 = vpop.f32.mrf.mxu0
      %v656 = vadd.f32 0.0, %v655
      %v657 = vpop.f32.mrf.mxu0
      %658 = vdwg.mxu0
      %v659 = vpack.c.bf16 %v656, %v653
      %v661 = vunpack.c.l.b16 %v659
      %v662 = vunpack.c.h.b16 %v659
      %v663 = vpack.c.b16 %v661, %v661
      %v664 = vpack.c.b16 %v662, %v662
      %vm667 = vcmask 257024
      %668 = vst.msk [vmem:[%s457] sm:$0xf] %vm667, %v663
      %669 = vst.msk [vmem:[%s457 + $0x4] sm:$0xf] %vm667, %v664
      %v670 = vld [vmem:[%s6] sm:$0xf]
      %v671 = vld [vmem:[%s6 + $0x4] sm:$0xf]
      %v674 = vunpack.c.l.b16 %v670
      %v675 = vunpack.c.l.b16 %v671
      %v676 = vpack.c.b16 %v675, %v674
      %678 = vmatprep.subr.bf16.mxu0 0
      %679 = vmatpush1.bf16.msra.mxu0 0
      %680 = vmatprep.subr.bf16.mxu0 0
      %681 = vmatpush1.bf16.msra.mxu0 0
      %682 = vmatprep.subr.bf16.mxu0 0
      %683 = vmatpush1.bf16.msra.mxu0 0
      %684 = vmatprep.subr.bf16.mxu0 0
      %685 = vmatpush1.bf16.msra.mxu0 0
      %686 = vmatprep.subr.bf16.mxu0 0
      %687 = vmatpush1.bf16.msra.mxu0 0
      %688 = vmatprep.subr.bf16.mxu0 0
      %689 = vmatpush1.bf16.msra.mxu0 0
      %690 = vmatprep.subr.bf16.mxu0 0
      %691 = vmatpush1.bf16.msra.mxu0 0
      %692 = vmatprep.subr.bf16.mxu0 0
      %693 = vmatpush1.bf16.msra.mxu0 %v676
      %694 = vmatprep.subr.bf16.mxu0 0
      %695 = vmatpush2.bf16.msra.mxu0 0
      %696 = vmatprep.subr.bf16.mxu0 0
      %697 = vmatpush2.bf16.msra.mxu0 0
      %698 = vmatprep.subr.bf16.mxu0 0
      %699 = vmatpush2.bf16.msra.mxu0 0
      %700 = vmatprep.subr.bf16.mxu0 0
      %701 = vmatpush2.bf16.msra.mxu0 0
      %702 = vmatprep.subr.bf16.mxu0 0
      %703 = vmatpush2.bf16.msra.mxu0 0
      %704 = vmatprep.subr.bf16.mxu0 0
      %705 = vmatpush2.bf16.msra.mxu0 0
      %706 = vmatprep.subr.bf16.mxu0 0
      %707 = vmatpush2.bf16.msra.mxu0 0
      %708 = vmatprep.subr.bf16.mxu0 0
      %709 = vmatpush2.bf16.msra.mxu0 0
      %710 = vmatprep.mubr.bf16.mxu0 0
      %711 = vmatmul.mubr.bf16.gmra.mxu0 %v616
      %v712 = vpop.f32.mrf.mxu0
      %v713 = vadd.f32 0.0, %v712
      %v714 = vpop.f32.mrf.mxu0
      %v715 = vpop.f32.mrf.mxu0
      %v716 = vadd.f32 0.0, %v715
      %v717 = vpop.f32.mrf.mxu0
      %718 = vdwg.mxu0
      %v719 = vpack.c.bf16 %v716, %v713
      %v721 = vunpack.c.l.b16 %v719
      %v722 = vunpack.c.h.b16 %v719
      %v723 = vpack.c.b16 %v721, %v721
      %v724 = vpack.c.b16 %v722, %v722
      %727 = vst.msk [vmem:[%s463] sm:$0xf] %vm667, %v723
      %728 = vst.msk [vmem:[%s463 + $0x4] sm:$0xf] %vm667, %v724
      %v729 = vld [vmem:[%s7] sm:$0xf]
      %v730 = vld [vmem:[%s7 + $0x4] sm:$0xf]
      %v731 = vld [vmem:[%s8] sm:$0x1]
      %v733 = vlaneseq
      %v734 = vshrl.u32 %v733, 7
      %v735 = vsub.s32 0, %v734
      %v736 = vrot.slane %v731, %v735
      %v740 = vunpack.c.l.b16 %v729
      %v741 = vunpack.c.l.b16 %v730
      %v742 = vpack.c.b16 %v741, %v740
      %744 = vmatprep.subr.bf16.mxu0 0
      %745 = vmatpush1.bf16.msra.mxu0 0
      %746 = vmatprep.subr.bf16.mxu0 0
      %747 = vmatpush1.bf16.msra.mxu0 0
      %748 = vmatprep.subr.bf16.mxu0 0
      %749 = vmatpush1.bf16.msra.mxu0 0
      %750 = vmatprep.subr.bf16.mxu0 0
      %751 = vmatpush1.bf16.msra.mxu0 0
      %752 = vmatprep.subr.bf16.mxu0 0
      %753 = vmatpush1.bf16.msra.mxu0 0
      %754 = vmatprep.subr.bf16.mxu0 0
      %755 = vmatpush1.bf16.msra.mxu0 0
      %756 = vmatprep.subr.bf16.mxu0 0
      %757 = vmatpush1.bf16.msra.mxu0 0
      %758 = vmatprep.subr.bf16.mxu0 0
      %759 = vmatpush1.bf16.msra.mxu0 %v742
      %760 = vmatprep.subr.bf16.mxu0 0
      %761 = vmatpush2.bf16.msra.mxu0 0
      %762 = vmatprep.subr.bf16.mxu0 0
      %763 = vmatpush2.bf16.msra.mxu0 0
      %764 = vmatprep.subr.bf16.mxu0 0
      %765 = vmatpush2.bf16.msra.mxu0 0
      %766 = vmatprep.subr.bf16.mxu0 0
      %767 = vmatpush2.bf16.msra.mxu0 0
      %768 = vmatprep.subr.bf16.mxu0 0
      %769 = vmatpush2.bf16.msra.mxu0 0
      %770 = vmatprep.subr.bf16.mxu0 0
      %771 = vmatpush2.bf16.msra.mxu0 0
      %772 = vmatprep.subr.bf16.mxu0 0
      %773 = vmatpush2.bf16.msra.mxu0 0
      %774 = vmatprep.subr.bf16.mxu0 0
      %775 = vmatpush2.bf16.msra.mxu0 0
      %776 = vmatprep.mubr.bf16.mxu0 0
      %777 = vmatmul.mubr.bf16.gmra.mxu0 %v492
      %v778 = vpop.f32.mrf.mxu0
      %v779 = vadd.f32 %v736, %v778
      %v780 = vpop.f32.mrf.mxu0
      %v781 = vpop.f32.mrf.mxu0
      %v782 = vadd.f32 %v736, %v781
      %v783 = vpop.f32.mrf.mxu0
      %784 = vdwg.mxu0
      %v785 = vmax.f32 %v779, 0.0
      %v786 = vmax.f32 %v782, 0.0
      %v787 = vpack.c.bf16 %v786, %v785
      %v788 = vld [vmem:[%s9] sm:$0xf]
      %v789 = vld [vmem:[%s9 + $0x4] sm:$0xf]
      %v790 = vld [vmem:[%s9 + $0x8] sm:$0xf]
      %v791 = vld [vmem:[%s9 + $0xc] sm:$0xf]
      %v792 = vld [vmem:[%s10] sm:$0x1]
      %v794 = vlaneseq
      %v795 = vshrl.u32 %v794, 7
      %v796 = vsub.s32 0, %v795
      %v797 = vrot.slane %v792, %v796
      %v803 = vunpack.c.l.b16 %v788
      %v804 = vunpack.c.l.b16 %v789
      %v805 = vunpack.c.l.b16 %v790
      %v806 = vunpack.c.l.b16 %v791
      %v807 = vpack.c.b16 %v804, %v803
      %v808 = vpack.c.b16 %v806, %v805
      %v812 = vsel %vm561, %v787, 0
      %814 = vmatprep.subr.bf16.mxu0 0
      %815 = vmatpush1.bf16.msra.mxu0 0
      %816 = vmatprep.subr.bf16.mxu0 0
      %817 = vmatpush1.bf16.msra.mxu0 0
      %818 = vmatprep.subr.bf16.mxu0 0
      %819 = vmatpush1.bf16.msra.mxu0 0
      %820 = vmatprep.subr.bf16.mxu0 0
      %821 = vmatpush1.bf16.msra.mxu0 0
      %822 = vmatprep.subr.bf16.mxu0 0
      %823 = vmatpush1.bf16.msra.mxu0 0
      %824 = vmatprep.subr.bf16.mxu0 0
      %825 = vmatpush1.bf16.msra.mxu0 0
      %826 = vmatprep.subr.bf16.mxu0 0
      %827 = vmatpush1.bf16.msra.mxu0 %v808
      %828 = vmatprep.subr.bf16.mxu0 0
      %829 = vmatpush1.bf16.msra.mxu0 %v807
      %830 = vmatprep.subr.bf16.mxu0 0
      %831 = vmatpush2.bf16.msra.mxu0 0
      %832 = vmatprep.subr.bf16.mxu0 0
      %833 = vmatpush2.bf16.msra.mxu0 0
      %834 = vmatprep.subr.bf16.mxu0 0
      %835 = vmatpush2.bf16.msra.mxu0 0
      %836 = vmatprep.subr.bf16.mxu0 0
      %837 = vmatpush2.bf16.msra.mxu0 0
      %838 = vmatprep.subr.bf16.mxu0 0
      %839 = vmatpush2.bf16.msra.mxu0 0
      %840 = vmatprep.subr.bf16.mxu0 0
      %841 = vmatpush2.bf16.msra.mxu0 0
      %842 = vmatprep.subr.bf16.mxu0 0
      %843 = vmatpush2.bf16.msra.mxu0 0
      %844 = vmatprep.subr.bf16.mxu0 0
      %845 = vmatpush2.bf16.msra.mxu0 0
      %846 = vmatprep.mubr.bf16.mxu0 0
      %847 = vmatmul.mubr.bf16.gmra.mxu0 %v812
      %v848 = vpop.f32.mrf.mxu0
      %v849 = vadd.f32 %v797, %v848
      %v850 = vpop.f32.mrf.mxu0
      %v851 = vpop.f32.mrf.mxu0
      %v852 = vadd.f32 %v797, %v851
      %v853 = vpop.f32.mrf.mxu0
      %854 = vdwg.mxu0
      %v855 = vpack.c.bf16 %v852, %v849
      %v857 = vunpack.c.l.b16 %v855
      %v858 = vunpack.c.h.b16 %v855
      %v859 = vpack.c.b16 %v857, %v857
      %v860 = vpack.c.b16 %v858, %v858
      %vm863 = vcmask 60416
      %864 = vst.msk [vmem:[%s469] sm:$0xf] %vm863, %v859
      %865 = vst.msk [vmem:[%s469 + $0x4] sm:$0xf] %vm863, %v860
      %s866 = smul.u32 2, %s25
      %p867 = scmp.lt.s32.totalorder %s866, 31
      %s868 = scalar_select %p867, %s866, 31
      %s869 = smul.addr %s868, 4
      %s870 = scalar_lea.vmem %s11, %s869
      %s871 = smul.u32 2, %s25
      %p872 = scmp.lt.s32.totalorder %s871, 31
      %s873 = scalar_select %p872, %s871, 31
      %s874 = smul.addr %s873, 4
      %s875 = scalar_lea.vmem %s12, %s874
      %s876 = smul.u32 2, %s25
      %p877 = scmp.lt.s32.totalorder %s876, 31
      %s878 = scalar_select %p877, %s876, 31
      %s879 = smul.addr %s878, 4
      %s880 = scalar_lea.vmem %s13, %s879
      // Predicated region
      $region65: #{dehnn_forward.5} parent=63 // pred_check
        %p881 = pneg %p279
      $region66: #{dehnn_forward.5} parent=63 // pred_check_branch
        %883 = sbr.rel (%p881) target = $region68
      $region67: #{dehnn_forward.5} parent=63 // pred_region
        %s884 = smul.u32 2, %s25
      $region68: #{dehnn_forward.5} parent=63 // pred_fallthru
        _
      // Predicated region
      $region69: #{dehnn_forward.5} parent=63 // pred_check
        %p885 = pneg %p305
      $region70: #{dehnn_forward.5} parent=63 // pred_check_branch
        %887 = sbr.rel (%p885) target = $region72
      $region71: #{dehnn_forward.5} parent=63 // pred_region
        %s888 = smul.u32 2, %s25
      $region72: #{dehnn_forward.5} parent=63 // pred_fallthru
        _
      // Predicated region
      $region73: #{dehnn_forward.5} parent=63 // pred_check
        %p889 = pneg %p331
      $region74: #{dehnn_forward.5} parent=63 // pred_check_branch
        %891 = sbr.rel (%p889) target = $region76
      $region75: #{dehnn_forward.5} parent=63 // pred_region
        %s892 = smul.u32 2, %s25
      $region76: #{dehnn_forward.5} parent=63 // pred_fallthru
        _
    $region64: #{dehnn_forward.5} parent=5 // pred_fallthru
      _
    %p893 = scmp.le.s32.totalorder 2, %s20
    // Predicated region
    $region77: #{dehnn_forward.5} parent=5 // pred_check
      %p894 = pneg %p893
    $region78: #{dehnn_forward.5} parent=5 // pred_check_branch
      %896 = sbr.rel (%p894) target = $region80
    $region79: #{dehnn_forward.5} parent=5 // pred_region
      %s897 = ssub.s32 %s20, 2
      // Predicated region
      $region81: #{dehnn_forward.5} parent=79 // pred_check
        %p898 = pneg %p285
      $region82: #{dehnn_forward.5} parent=79 // pred_check_branch
        %900 = sbr.rel (%p898) target = $region84
      $region83: #{dehnn_forward.5} parent=79 // pred_region
        %s901 = smul.u32 2, %s26
        %p902 = scmp.lt.s32.totalorder %s901, 31
        %s903 = scalar_select %p902, %s901, 31
        %s904 = smul.addr %s903, 4
        %s905 = scalar_lea.vmem %s11, %s904
      $region84: #{dehnn_forward.5} parent=79 // pred_fallthru
        _
      // Predicated region
      $region85: #{dehnn_forward.5} parent=79 // pred_check
        %p906 = pneg %p311
      $region86: #{dehnn_forward.5} parent=79 // pred_check_branch
        %908 = sbr.rel (%p906) target = $region88
      $region87: #{dehnn_forward.5} parent=79 // pred_region
        %s909 = smul.u32 2, %s26
        %p910 = scmp.lt.s32.totalorder %s909, 31
        %s911 = scalar_select %p910, %s909, 31
        %s912 = smul.addr %s911, 4
        %s913 = scalar_lea.vmem %s12, %s912
      $region88: #{dehnn_forward.5} parent=79 // pred_fallthru
        _
      // Predicated region
      $region89: #{dehnn_forward.5} parent=79 // pred_check
        %p914 = pneg %p337
      $region90: #{dehnn_forward.5} parent=79 // pred_check_branch
        %916 = sbr.rel (%p914) target = $region92
      $region91: #{dehnn_forward.5} parent=79 // pred_region
        %s917 = smul.u32 2, %s26
        %p918 = scmp.lt.s32.totalorder %s917, 31
        %s919 = scalar_select %p918, %s917, 31
        %s920 = smul.addr %s919, 4
        %s921 = scalar_lea.vmem %s13, %s920
      $region92: #{dehnn_forward.5} parent=79 // pred_fallthru
        _
    $region80: #{dehnn_forward.5} parent=5 // pred_fallthru
      _
  $region6: #{dehnn_forward.5} parent=0 // loop_footer
    %s24 = sadd.s32 1, %s20
  $region7: #{dehnn_forward.5} parent=0 // loop_footer_branch
    %19 = sbr.rel target = $region3
  $region8: #{dehnn_forward.5} parent=0 // loop_exit
    _

// kernel: dehnn_forward.7
$region0: #{dehnn_forward.7}
  #allocation0 [shape = 'u32[]', space=smem, size = 0x4, offset = 0x4, fixed_abs, tag = 'smem constant byte address 0x4 - core index']
  #allocation1 [shape = 'u32[144,128]{1,0:T(1,128)}', space=vmem, size = 0x12000, scoped, tag = 'internal scratch']
  %s0 = inlined_call_operand.vmem [shape: bf16[5,256], index: 0, kind: input, shape index: {}]
  %s1 = inlined_call_operand.vmem [shape: bf16[256,8], index: 1, kind: input, shape index: {}]
  %s2 = inlined_call_operand.vmem [shape: f32[5,8], index: 2, kind: input, shape index: {}]
  %s3 = inlined_call_operand.vmem [shape: f32[1,8], index: 3, kind: input, shape index: {}]
  %s4 = inlined_call_operand.vmem [shape: bf16[8,32], index: 4, kind: input, shape index: {}]
  %s5 = inlined_call_operand.vmem [shape: f32[1,32], index: 5, kind: input, shape index: {}]
  %s6 = inlined_call_operand.vmem [shape: bf16[32,8], index: 6, kind: input, shape index: {}]
  %s7 = inlined_call_operand.vmem [shape: f32[1,8], index: 7, kind: input, shape index: {}]
  %s8 = inlined_call_operand.vmem [shape: bf16[8,32], index: 8, kind: input, shape index: {}]
  %s9 = inlined_call_operand.vmem [shape: f32[1,32], index: 9, kind: input, shape index: {}]
  %s10 = inlined_call_operand.vmem [shape: bf16[32,8], index: 10, kind: input, shape index: {}]
  %s11 = inlined_call_operand.vmem [shape: f32[1,8], index: 11, kind: input, shape index: {}]
  %s12 = inlined_call_operand.vmem [shape: bf16[8,32], index: 12, kind: input, shape index: {}]
  %s13 = inlined_call_operand.vmem [shape: f32[1,32], index: 13, kind: input, shape index: {}]
  %s14 = inlined_call_operand.vmem [shape: bf16[32,16], index: 14, kind: input, shape index: {}]
  %s15 = inlined_call_operand.vmem [shape: f32[1,16], index: 15, kind: input, shape index: {}]
  %s16 = inlined_call_operand.hbm [shape: f32[5,8], index: 16, kind: output, shape index: {0}]
  %s17 = inlined_call_operand.hbm [shape: f32[1,8], index: 17, kind: output, shape index: {1}]
  %s18 = inlined_call_operand.vmem [shape: bf16[5,16], index: 18, kind: output, shape index: {2}]
  %19 = xla_tuple %s16, %s17, %s18
  %s20 = sld [smem:[#allocation0]]
  $region117: #{dehnn_forward.7} parent=0
    _
  %s22 = ssub.s32 1, %s20
  %s23 = scalar_select 0, %s22, %s20
  $region1: #{dehnn_forward.7} parent=0
    #allocation2 [shape = 'u8[4096]{0}', space=vmem, size = 0x1000, scoped, tag = 'output window, operand 0, single buffered']
    #allocation3 [shape = 's32[2]{0}', space=sflag, size = 0x8, scoped, tag = 'scoped memory for dehnn_forward.7']
    #allocation4 [shape = 'u8[512]{0}', space=vmem, size = 0x400, scoped, tag = 'output window, operand 1, single buffered']
    #allocation5 [shape = 's32[1]{0}', space=sflag, size = 0x4, scoped, tag = 'scoped memory for dehnn_forward.7']
    %24 = vsyncpa [#allocation3], 0
    %25 = vsyncpa [#allocation5], 0
    loop: start=0, step=1, limit=4
    $region2: #{dehnn_forward.7} parent=1 // loop_pre_header
      _
    $region3: #{dehnn_forward.7} parent=1 // loop_header
      %s27 = sphi 0, %s31
      %p28 = scmp.ge.s32.totalorder %s27, 4
      %s37 = sphi 0, %s39
      %s40 = sphi 0, %s37
      %s41 = sphi 0, %s40
      %s57 = sphi 0, %s41
      %s63 = sphi 0, %s65
      %s66 = sphi 0, %s63
      %s67 = sphi 0, %s66
      %s83 = sphi 0, %s67
      %s87 = sphi 0, %s87
      %s89 = sphi 0, %s87
      %s90 = sphi 0, %s89
      %s104 = sphi 0, %s90
      %s108 = sphi 0, %s108
      %s110 = sphi 0, %s108
      %s111 = sphi 0, %s110
      %s125 = sphi 0, %s111
      %s129 = sphi 0, %s129
      %s131 = sphi 0, %s129
      %s132 = sphi 0, %s131
      %s146 = sphi 0, %s132
      %s150 = sphi 0, %s150
      %s152 = sphi 0, %s150
      %s153 = sphi 0, %s152
      %s167 = sphi 0, %s153
      %s171 = sphi 0, %s171
      %s173 = sphi 0, %s171
      %s174 = sphi 0, %s173
      %s188 = sphi 0, %s174
      %s192 = sphi 0, %s192
      %s194 = sphi 0, %s192
      %s195 = sphi 0, %s194
      %s209 = sphi 0, %s195
      %s213 = sphi 0, %s213
      %s215 = sphi 0, %s213
      %s216 = sphi 0, %s215
      %s230 = sphi 0, %s216
      %s234 = sphi 0, %s234
      %s236 = sphi 0, %s234
      %s237 = sphi 0, %s236
      %s251 = sphi 0, %s237
      %s255 = sphi 0, %s255
      %s257 = sphi 0, %s255
      %s258 = sphi 0, %s257
      %s272 = sphi 0, %s258
      %s276 = sphi 0, %s276
      %s278 = sphi 0, %s276
      %s279 = sphi 0, %s278
      %s293 = sphi 0, %s279
      %s297 = sphi 0, %s297
      %s299 = sphi 0, %s297
      %s300 = sphi 0, %s299
      %s314 = sphi 0, %s300
      %s318 = sphi 0, %s318
      %s320 = sphi 0, %s318
      %s321 = sphi 0, %s320
      %s335 = sphi 0, %s321
      %s339 = sphi 0, %s339
      %s341 = sphi 0, %s339
      %s342 = sphi 0, %s341
      %s356 = sphi 0, %s342
      %s360 = sphi 0, %s360
      %s362 = sphi 0, %s360
      %s363 = sphi 0, %s362
      %s377 = sphi 0, %s363
      %s381 = sphi 0, %s381
      %s383 = sphi 0, %s381
      %s384 = sphi 0, %s383
      %s398 = sphi 0, %s384
      %s402 = sphi 0, %s402
      %s404 = sphi 0, %s402
      %s405 = sphi 0, %s404
      %s419 = sphi 0, %s405
      %s423 = sphi 0, %s423
      %s425 = sphi 0, %s423
      %s426 = sphi 0, %s425
      %s440 = sphi 0, %s426
    $region4: #{dehnn_forward.7} parent=1 // loop_header_branch
      %30 = sbr.rel (%p28) target = $region8
    $region5: #{dehnn_forward.7} parent=1 // loop_body
      %s32 = ssub.s32 %s27, 1
      %s33 = ssub.s32 %s27, 2
      %s34 = sadd.s32 %s27, 1
      %s35 = ssub.s32 %s27, %s34
      %p36 = scmp.eq.s32.totalorder %s35, 0
      %s38 = sadd.s32 %s37, 1
      %s39 = scalar_select %p36, %s37, %s38
      %p42 = pneg %p36
      %p43 = scmp.eq.s32.totalorder %s27, 1
      %p44 = por %p42, %p43
      %p45 = scmp.ne.s32.totalorder %s37, %s40
      %p46 = scmp.eq.s32.totalorder %s27, 0
      %p47 = por %p45, %p46
      %p48 = scmp.ne.s32.totalorder %s37, %s40
      %p49 = scmp.eq.s32.totalorder %s32, 1
      %p50 = por %p48, %p49
      %p51 = scmp.ne.s32.totalorder %s40, %s41
      %p52 = scmp.eq.s32.totalorder %s32, 0
      %p53 = por %p51, %p52
      %p54 = scmp.ne.s32.totalorder %s40, %s41
      %p55 = scmp.eq.s32.totalorder %s33, 1
      %p56 = por %p54, %p55
      %p58 = scmp.ne.s32.totalorder %s41, %s57
      %p59 = scmp.eq.s32.totalorder %s33, 0
      %p60 = por %p58, %p59
      %s61 = ssub.s32 %s27, %s34
      %p62 = scmp.eq.s32.totalorder %s61, 0
      %s64 = sadd.s32 %s63, 1
      %s65 = scalar_select %p62, %s63, %s64
      %p68 = pneg %p62
      %p69 = scmp.eq.s32.totalorder %s27, 1
      %p70 = por %p68, %p69
      %p71 = scmp.ne.s32.totalorder %s63, %s66
      %p72 = scmp.eq.s32.totalorder %s27, 0
      %p73 = por %p71, %p72
      %p74 = scmp.ne.s32.totalorder %s63, %s66
      %p75 = scmp.eq.s32.totalorder %s32, 1
      %p76 = por %p74, %p75
      %p77 = scmp.ne.s32.totalorder %s66, %s67
      %p78 = scmp.eq.s32.totalorder %s32, 0
      %p79 = por %p77, %p78
      %p80 = scmp.ne.s32.totalorder %s66, %s67
      %p81 = scmp.eq.s32.totalorder %s33, 1
      %p82 = por %p80, %p81
      %p84 = scmp.ne.s32.totalorder %s67, %s83
      %p85 = scmp.eq.s32.totalorder %s33, 0
      %p86 = por %p84, %p85
      %s88 = sadd.s32 %s87, 1
      %p91 = scmp.eq.s32.totalorder %s27, 1
      %p92 = scmp.ne.s32.totalorder %s87, %s89
      %p93 = scmp.eq.s32.totalorder %s27, 0
      %p94 = por %p92, %p93
      %p95 = scmp.ne.s32.totalorder %s87, %s89
      %p96 = scmp.eq.s32.totalorder %s32, 1
      %p97 = por %p95, %p96
      %p98 = scmp.ne.s32.totalorder %s89, %s90
      %p99 = scmp.eq.s32.totalorder %s32, 0
      %p100 = por %p98, %p99
      %p101 = scmp.ne.s32.totalorder %s89, %s90
      %p102 = scmp.eq.s32.totalorder %s33, 1
      %p103 = por %p101, %p102
      %p105 = scmp.ne.s32.totalorder %s90, %s104
      %p106 = scmp.eq.s32.totalorder %s33, 0
      %p107 = por %p105, %p106
      %s109 = sadd.s32 %s108, 1
      %p112 = scmp.eq.s32.totalorder %s27, 1
      %p113 = scmp.ne.s32.totalorder %s108, %s110
      %p114 = scmp.eq.s32.totalorder %s27, 0
      %p115 = por %p113, %p114
      %p116 = scmp.ne.s32.totalorder %s108, %s110
      %p117 = scmp.eq.s32.totalorder %s32, 1
      %p118 = por %p116, %p117
      %p119 = scmp.ne.s32.totalorder %s110, %s111
      %p120 = scmp.eq.s32.totalorder %s32, 0
      %p121 = por %p119, %p120
      %p122 = scmp.ne.s32.totalorder %s110, %s111
      %p123 = scmp.eq.s32.totalorder %s33, 1
      %p124 = por %p122, %p123
      %p126 = scmp.ne.s32.totalorder %s111, %s125
      %p127 = scmp.eq.s32.totalorder %s33, 0
      %p128 = por %p126, %p127
      %s130 = sadd.s32 %s129, 1
      %p133 = scmp.eq.s32.totalorder %s27, 1
      %p134 = scmp.ne.s32.totalorder %s129, %s131
      %p135 = scmp.eq.s32.totalorder %s27, 0
      %p136 = por %p134, %p135
      %p137 = scmp.ne.s32.totalorder %s129, %s131
      %p138 = scmp.eq.s32.totalorder %s32, 1
      %p139 = por %p137, %p138
      %p140 = scmp.ne.s32.totalorder %s131, %s132
      %p141 = scmp.eq.s32.totalorder %s32, 0
      %p142 = por %p140, %p141
      %p143 = scmp.ne.s32.totalorder %s131, %s132
      %p144 = scmp.eq.s32.totalorder %s33, 1
      %p145 = por %p143, %p144
      %p147 = scmp.ne.s32.totalorder %s132, %s146
      %p148 = scmp.eq.s32.totalorder %s33, 0
      %p149 = por %p147, %p148
      %s151 = sadd.s32 %s150, 1
      %p154 = scmp.eq.s32.totalorder %s27, 1
      %p155 = scmp.ne.s32.totalorder %s150, %s152
      %p156 = scmp.eq.s32.totalorder %s27, 0
      %p157 = por %p155, %p156
      %p158 = scmp.ne.s32.totalorder %s150, %s152
      %p159 = scmp.eq.s32.totalorder %s32, 1
      %p160 = por %p158, %p159
      %p161 = scmp.ne.s32.totalorder %s152, %s153
      %p162 = scmp.eq.s32.totalorder %s32, 0
      %p163 = por %p161, %p162
      %p164 = scmp.ne.s32.totalorder %s152, %s153
      %p165 = scmp.eq.s32.totalorder %s33, 1
      %p166 = por %p164, %p165
      %p168 = scmp.ne.s32.totalorder %s153, %s167
      %p169 = scmp.eq.s32.totalorder %s33, 0
      %p170 = por %p168, %p169
      %s172 = sadd.s32 %s171, 1
      %p175 = scmp.eq.s32.totalorder %s27, 1
      %p176 = scmp.ne.s32.totalorder %s171, %s173
      %p177 = scmp.eq.s32.totalorder %s27, 0
      %p178 = por %p176, %p177
      %p179 = scmp.ne.s32.totalorder %s171, %s173
      %p180 = scmp.eq.s32.totalorder %s32, 1
      %p181 = por %p179, %p180
      %p182 = scmp.ne.s32.totalorder %s173, %s174
      %p183 = scmp.eq.s32.totalorder %s32, 0
      %p184 = por %p182, %p183
      %p185 = scmp.ne.s32.totalorder %s173, %s174
      %p186 = scmp.eq.s32.totalorder %s33, 1
      %p187 = por %p185, %p186
      %p189 = scmp.ne.s32.totalorder %s174, %s188
      %p190 = scmp.eq.s32.totalorder %s33, 0
      %p191 = por %p189, %p190
      %s193 = sadd.s32 %s192, 1
      %p196 = scmp.eq.s32.totalorder %s27, 1
      %p197 = scmp.ne.s32.totalorder %s192, %s194
      %p198 = scmp.eq.s32.totalorder %s27, 0
      %p199 = por %p197, %p198
      %p200 = scmp.ne.s32.totalorder %s192, %s194
      %p201 = scmp.eq.s32.totalorder %s32, 1
      %p202 = por %p200, %p201
      %p203 = scmp.ne.s32.totalorder %s194, %s195
      %p204 = scmp.eq.s32.totalorder %s32, 0
      %p205 = por %p203, %p204
      %p206 = scmp.ne.s32.totalorder %s194, %s195
      %p207 = scmp.eq.s32.totalorder %s33, 1
      %p208 = por %p206, %p207
      %p210 = scmp.ne.s32.totalorder %s195, %s209
      %p211 = scmp.eq.s32.totalorder %s33, 0
      %p212 = por %p210, %p211
      %s214 = sadd.s32 %s213, 1
      %p217 = scmp.eq.s32.totalorder %s27, 1
      %p218 = scmp.ne.s32.totalorder %s213, %s215
      %p219 = scmp.eq.s32.totalorder %s27, 0
      %p220 = por %p218, %p219
      %p221 = scmp.ne.s32.totalorder %s213, %s215
      %p222 = scmp.eq.s32.totalorder %s32, 1
      %p223 = por %p221, %p222
      %p224 = scmp.ne.s32.totalorder %s215, %s216
      %p225 = scmp.eq.s32.totalorder %s32, 0
      %p226 = por %p224, %p225
      %p227 = scmp.ne.s32.totalorder %s215, %s216
      %p228 = scmp.eq.s32.totalorder %s33, 1
      %p229 = por %p227, %p228
      %p231 = scmp.ne.s32.totalorder %s216, %s230
      %p232 = scmp.eq.s32.totalorder %s33, 0
      %p233 = por %p231, %p232
      %s235 = sadd.s32 %s234, 1
      %p238 = scmp.eq.s32.totalorder %s27, 1
      %p239 = scmp.ne.s32.totalorder %s234, %s236
      %p240 = scmp.eq.s32.totalorder %s27, 0
      %p241 = por %p239, %p240
      %p242 = scmp.ne.s32.totalorder %s234, %s236
      %p243 = scmp.eq.s32.totalorder %s32, 1
      %p244 = por %p242, %p243
      %p245 = scmp.ne.s32.totalorder %s236, %s237
      %p246 = scmp.eq.s32.totalorder %s32, 0
      %p247 = por %p245, %p246
      %p248 = scmp.ne.s32.totalorder %s236, %s237
      %p249 = scmp.eq.s32.totalorder %s33, 1
      %p250 = por %p248, %p249
      %p252 = scmp.ne.s32.totalorder %s237, %s251
      %p253 = scmp.eq.s32.totalorder %s33, 0
      %p254 = por %p252, %p253
      %s256 = sadd.s32 %s255, 1
      %p259 = scmp.eq.s32.totalorder %s27, 1
      %p260 = scmp.ne.s32.totalorder %s255, %s257
      %p261 = scmp.eq.s32.totalorder %s27, 0
      %p262 = por %p260, %p261
      %p263 = scmp.ne.s32.totalorder %s255, %s257
      %p264 = scmp.eq.s32.totalorder %s32, 1
      %p265 = por %p263, %p264
      %p266 = scmp.ne.s32.totalorder %s257, %s258
      %p267 = scmp.eq.s32.totalorder %s32, 0
      %p268 = por %p266, %p267
      %p269 = scmp.ne.s32.totalorder %s257, %s258
      %p270 = scmp.eq.s32.totalorder %s33, 1
      %p271 = por %p269, %p270
      %p273 = scmp.ne.s32.totalorder %s258, %s272
      %p274 = scmp.eq.s32.totalorder %s33, 0
      %p275 = por %p273, %p274
      %s277 = sadd.s32 %s276, 1
      %p280 = scmp.eq.s32.totalorder %s27, 1
      %p281 = scmp.ne.s32.totalorder %s276, %s278
      %p282 = scmp.eq.s32.totalorder %s27, 0
      %p283 = por %p281, %p282
      %p284 = scmp.ne.s32.totalorder %s276, %s278
      %p285 = scmp.eq.s32.totalorder %s32, 1
      %p286 = por %p284, %p285
      %p287 = scmp.ne.s32.totalorder %s278, %s279
      %p288 = scmp.eq.s32.totalorder %s32, 0
      %p289 = por %p287, %p288
      %p290 = scmp.ne.s32.totalorder %s278, %s279
      %p291 = scmp.eq.s32.totalorder %s33, 1
      %p292 = por %p290, %p291
      %p294 = scmp.ne.s32.totalorder %s279, %s293
      %p295 = scmp.eq.s32.totalorder %s33, 0
      %p296 = por %p294, %p295
      %s298 = sadd.s32 %s297, 1
      %p301 = scmp.eq.s32.totalorder %s27, 1
      %p302 = scmp.ne.s32.totalorder %s297, %s299
      %p303 = scmp.eq.s32.totalorder %s27, 0
      %p304 = por %p302, %p303
      %p305 = scmp.ne.s32.totalorder %s297, %s299
      %p306 = scmp.eq.s32.totalorder %s32, 1
      %p307 = por %p305, %p306
      %p308 = scmp.ne.s32.totalorder %s299, %s300
      %p309 = scmp.eq.s32.totalorder %s32, 0
      %p310 = por %p308, %p309
      %p311 = scmp.ne.s32.totalorder %s299, %s300
      %p312 = scmp.eq.s32.totalorder %s33, 1
      %p313 = por %p311, %p312
      %p315 = scmp.ne.s32.totalorder %s300, %s314
      %p316 = scmp.eq.s32.totalorder %s33, 0
      %p317 = por %p315, %p316
      %s319 = sadd.s32 %s318, 1
      %p322 = scmp.eq.s32.totalorder %s27, 1
      %p323 = scmp.ne.s32.totalorder %s318, %s320
      %p324 = scmp.eq.s32.totalorder %s27, 0
      %p325 = por %p323, %p324
      %p326 = scmp.ne.s32.totalorder %s318, %s320
      %p327 = scmp.eq.s32.totalorder %s32, 1
      %p328 = por %p326, %p327
      %p329 = scmp.ne.s32.totalorder %s320, %s321
      %p330 = scmp.eq.s32.totalorder %s32, 0
      %p331 = por %p329, %p330
      %p332 = scmp.ne.s32.totalorder %s320, %s321
      %p333 = scmp.eq.s32.totalorder %s33, 1
      %p334 = por %p332, %p333
      %p336 = scmp.ne.s32.totalorder %s321, %s335
      %p337 = scmp.eq.s32.totalorder %s33, 0
      %p338 = por %p336, %p337
      %s340 = sadd.s32 %s339, 1
      %p343 = scmp.eq.s32.totalorder %s27, 1
      %p344 = scmp.ne.s32.totalorder %s339, %s341
      %p345 = scmp.eq.s32.totalorder %s27, 0
      %p346 = por %p344, %p345
      %p347 = scmp.ne.s32.totalorder %s339, %s341
      %p348 = scmp.eq.s32.totalorder %s32, 1
      %p349 = por %p347, %p348
      %p350 = scmp.ne.s32.totalorder %s341, %s342
      %p351 = scmp.eq.s32.totalorder %s32, 0
      %p352 = por %p350, %p351
      %p353 = scmp.ne.s32.totalorder %s341, %s342
      %p354 = scmp.eq.s32.totalorder %s33, 1
      %p355 = por %p353, %p354
      %p357 = scmp.ne.s32.totalorder %s342, %s356
      %p358 = scmp.eq.s32.totalorder %s33, 0
      %p359 = por %p357, %p358
      %s361 = sadd.s32 %s360, 1
      %p364 = scmp.eq.s32.totalorder %s27, 1
      %p365 = scmp.ne.s32.totalorder %s360, %s362
      %p366 = scmp.eq.s32.totalorder %s27, 0
      %p367 = por %p365, %p366
      %p368 = scmp.ne.s32.totalorder %s360, %s362
      %p369 = scmp.eq.s32.totalorder %s32, 1
      %p370 = por %p368, %p369
      %p371 = scmp.ne.s32.totalorder %s362, %s363
      %p372 = scmp.eq.s32.totalorder %s32, 0
      %p373 = por %p371, %p372
      %p374 = scmp.ne.s32.totalorder %s362, %s363
      %p375 = scmp.eq.s32.totalorder %s33, 1
      %p376 = por %p374, %p375
      %p378 = scmp.ne.s32.totalorder %s363, %s377
      %p379 = scmp.eq.s32.totalorder %s33, 0
      %p380 = por %p378, %p379
      %s382 = sadd.s32 %s381, 1
      %p385 = scmp.eq.s32.totalorder %s27, 1
      %p386 = scmp.ne.s32.totalorder %s381, %s383
      %p387 = scmp.eq.s32.totalorder %s27, 0
      %p388 = por %p386, %p387
      %p389 = scmp.ne.s32.totalorder %s381, %s383
      %p390 = scmp.eq.s32.totalorder %s32, 1
      %p391 = por %p389, %p390
      %p392 = scmp.ne.s32.totalorder %s383, %s384
      %p393 = scmp.eq.s32.totalorder %s32, 0
      %p394 = por %p392, %p393
      %p395 = scmp.ne.s32.totalorder %s383, %s384
      %p396 = scmp.eq.s32.totalorder %s33, 1
      %p397 = por %p395, %p396
      %p399 = scmp.ne.s32.totalorder %s384, %s398
      %p400 = scmp.eq.s32.totalorder %s33, 0
      %p401 = por %p399, %p400
      %s403 = sadd.s32 %s402, 1
      %p406 = scmp.eq.s32.totalorder %s27, 1
      %p407 = scmp.ne.s32.totalorder %s402, %s404
      %p408 = scmp.eq.s32.totalorder %s27, 0
      %p409 = por %p407, %p408
      %p410 = scmp.ne.s32.totalorder %s402, %s404
      %p411 = scmp.eq.s32.totalorder %s32, 1
      %p412 = por %p410, %p411
      %p413 = scmp.ne.s32.totalorder %s404, %s405
      %p414 = scmp.eq.s32.totalorder %s32, 0
      %p415 = por %p413, %p414
      %p416 = scmp.ne.s32.totalorder %s404, %s405
      %p417 = scmp.eq.s32.totalorder %s33, 1
      %p418 = por %p416, %p417
      %p420 = scmp.ne.s32.totalorder %s405, %s419
      %p421 = scmp.eq.s32.totalorder %s33, 0
      %p422 = por %p420, %p421
      %s424 = sadd.s32 %s423, 1
      %p427 = scmp.eq.s32.totalorder %s27, 1
      %p428 = scmp.ne.s32.totalorder %s423, %s425
      %p429 = scmp.eq.s32.totalorder %s27, 0
      %p430 = por %p428, %p429
      %p431 = scmp.ne.s32.totalorder %s423, %s425
      %p432 = scmp.eq.s32.totalorder %s32, 1
      %p433 = por %p431, %p432
      %p434 = scmp.ne.s32.totalorder %s425, %s426
      %p435 = scmp.eq.s32.totalorder %s32, 0
      %p436 = por %p434, %p435
      %p437 = scmp.ne.s32.totalorder %s425, %s426
      %p438 = scmp.eq.s32.totalorder %s33, 1
      %p439 = por %p437, %p438
      %p441 = scmp.ne.s32.totalorder %s426, %s440
      %p442 = scmp.eq.s32.totalorder %s33, 0
      %p443 = por %p441, %p442
      %p444 = scmp.le.s32.totalorder 1, %s27
      %p445 = scmp.lt.s32.totalorder %s27, 3
      %p446 = pnand %p444, %p445
      %p447 = pneg %p446
      // Predicated region
      $region9: #{dehnn_forward.7} parent=5 // pred_check
        _
      $region10: #{dehnn_forward.7} parent=5 // pred_check_branch
        %449 = sbr.rel (%p446) target = $region12
      $region11: #{dehnn_forward.7} parent=5 // pred_region
        %s450 = ssub.s32 %s27, 1
        // Predicated region
        $region13: #{dehnn_forward.7} parent=11 // pred_check
          %p451 = pneg %p100
        $region14: #{dehnn_forward.7} parent=11 // pred_check_branch
          %453 = sbr.rel (%p451) target = $region16
        $region15: #{dehnn_forward.7} parent=11 // pred_region
          _
        $region16: #{dehnn_forward.7} parent=11 // pred_fallthru
          _
        // Predicated region
        $region17: #{dehnn_forward.7} parent=11 // pred_check
          %p454 = pneg %p121
        $region18: #{dehnn_forward.7} parent=11 // pred_check_branch
          %456 = sbr.rel (%p454) target = $region20
        $region19: #{dehnn_forward.7} parent=11 // pred_region
          _
        $region20: #{dehnn_forward.7} parent=11 // pred_fallthru
          _
        // Predicated region
        $region21: #{dehnn_forward.7} parent=11 // pred_check
          %p457 = pneg %p142
        $region22: #{dehnn_forward.7} parent=11 // pred_check_branch
          %459 = sbr.rel (%p457) target = $region24
        $region23: #{dehnn_forward.7} parent=11 // pred_region
          _
        $region24: #{dehnn_forward.7} parent=11 // pred_fallthru
          _
        // Predicated region
        $region25: #{dehnn_forward.7} parent=11 // pred_check
          %p460 = pneg %p163
        $region26: #{dehnn_forward.7} parent=11 // pred_check_branch
          %462 = sbr.rel (%p460) target = $region28
        $region27: #{dehnn_forward.7} parent=11 // pred_region
          _
        $region28: #{dehnn_forward.7} parent=11 // pred_fallthru
          _
        // Predicated region
        $region29: #{dehnn_forward.7} parent=11 // pred_check
          %p463 = pneg %p184
        $region30: #{dehnn_forward.7} parent=11 // pred_check_branch
          %465 = sbr.rel (%p463) target = $region32
        $region31: #{dehnn_forward.7} parent=11 // pred_region
          _
        $region32: #{dehnn_forward.7} parent=11 // pred_fallthru
          _
        // Predicated region
        $region33: #{dehnn_forward.7} parent=11 // pred_check
          %p466 = pneg %p205
        $region34: #{dehnn_forward.7} parent=11 // pred_check_branch
          %468 = sbr.rel (%p466) target = $region36
        $region35: #{dehnn_forward.7} parent=11 // pred_region
          _
        $region36: #{dehnn_forward.7} parent=11 // pred_fallthru
          _
        // Predicated region
        $region37: #{dehnn_forward.7} parent=11 // pred_check
          %p469 = pneg %p226
        $region38: #{dehnn_forward.7} parent=11 // pred_check_branch
          %471 = sbr.rel (%p469) target = $region40
        $region39: #{dehnn_forward.7} parent=11 // pred_region
          _
        $region40: #{dehnn_forward.7} parent=11 // pred_fallthru
          _
        // Predicated region
        $region41: #{dehnn_forward.7} parent=11 // pred_check
          %p472 = pneg %p247
        $region42: #{dehnn_forward.7} parent=11 // pred_check_branch
          %474 = sbr.rel (%p472) target = $region44
        $region43: #{dehnn_forward.7} parent=11 // pred_region
          _
        $region44: #{dehnn_forward.7} parent=11 // pred_fallthru
          _
        // Predicated region
        $region45: #{dehnn_forward.7} parent=11 // pred_check
          %p475 = pneg %p268
        $region46: #{dehnn_forward.7} parent=11 // pred_check_branch
          %477 = sbr.rel (%p475) target = $region48
        $region47: #{dehnn_forward.7} parent=11 // pred_region
          _
        $region48: #{dehnn_forward.7} parent=11 // pred_fallthru
          _
        // Predicated region
        $region49: #{dehnn_forward.7} parent=11 // pred_check
          %p478 = pneg %p289
        $region50: #{dehnn_forward.7} parent=11 // pred_check_branch
          %480 = sbr.rel (%p478) target = $region52
        $region51: #{dehnn_forward.7} parent=11 // pred_region
          _
        $region52: #{dehnn_forward.7} parent=11 // pred_fallthru
          _
        // Predicated region
        $region53: #{dehnn_forward.7} parent=11 // pred_check
          %p481 = pneg %p310
        $region54: #{dehnn_forward.7} parent=11 // pred_check_branch
          %483 = sbr.rel (%p481) target = $region56
        $region55: #{dehnn_forward.7} parent=11 // pred_region
          _
        $region56: #{dehnn_forward.7} parent=11 // pred_fallthru
          _
        // Predicated region
        $region57: #{dehnn_forward.7} parent=11 // pred_check
          %p484 = pneg %p331
        $region58: #{dehnn_forward.7} parent=11 // pred_check_branch
          %486 = sbr.rel (%p484) target = $region60
        $region59: #{dehnn_forward.7} parent=11 // pred_region
          _
        $region60: #{dehnn_forward.7} parent=11 // pred_fallthru
          _
        // Predicated region
        $region61: #{dehnn_forward.7} parent=11 // pred_check
          %p487 = pneg %p352
        $region62: #{dehnn_forward.7} parent=11 // pred_check_branch
          %489 = sbr.rel (%p487) target = $region64
        $region63: #{dehnn_forward.7} parent=11 // pred_region
          _
        $region64: #{dehnn_forward.7} parent=11 // pred_fallthru
          _
        // Predicated region
        $region65: #{dehnn_forward.7} parent=11 // pred_check
          %p490 = pneg %p373
        $region66: #{dehnn_forward.7} parent=11 // pred_check_branch
          %492 = sbr.rel (%p490) target = $region68
        $region67: #{dehnn_forward.7} parent=11 // pred_region
          _
        $region68: #{dehnn_forward.7} parent=11 // pred_fallthru
          _
      $region12: #{dehnn_forward.7} parent=5 // pred_fallthru
        _
      %p493 = scmp.lt.s32.totalorder %s27, 2
      // Predicated region
      $region69: #{dehnn_forward.7} parent=5 // pred_check
        %p494 = pneg %p493
      $region70: #{dehnn_forward.7} parent=5 // pred_check_branch
        %496 = sbr.rel (%p494) target = $region72
      $region71: #{dehnn_forward.7} parent=5 // pred_region
        // Predicated region
        $region73: #{dehnn_forward.7} parent=71 // pred_check
          %p497 = pneg %p47
        $region74: #{dehnn_forward.7} parent=71 // pred_check_branch
          %499 = sbr.rel (%p497) target = $region76
        $region75: #{dehnn_forward.7} parent=71 // pred_region
          %p500 = scmp.lt.s32.totalorder %s27, 1
          %s501 = scalar_select %p500, %s27, 1
          %s502 = smul.addr %s501, 4
          %s503 = scalar_lea.vmem %s0, %s502
        $region76: #{dehnn_forward.7} parent=71 // pred_fallthru
          _
        // Predicated region
        $region77: #{dehnn_forward.7} parent=71 // pred_check
          %p504 = pneg %p73
        $region78: #{dehnn_forward.7} parent=71 // pred_check_branch
          %506 = sbr.rel (%p504) target = $region80
        $region79: #{dehnn_forward.7} parent=71 // pred_region
          %s507 = smul.u32 16, %s27
          %p508 = scmp.lt.s32.totalorder %s507, 31
          %s509 = scalar_select %p508, %s507, 31
          %s510 = smul.addr %s509, 4
          %s511 = scalar_lea.vmem %s1, %s510
          %s512 = smul.u32 16, %s27
        $region80: #{dehnn_forward.7} parent=71 // pred_fallthru
          _
      $region72: #{dehnn_forward.7} parent=5 // pred_fallthru
        _
      %p513 = scmp.le.s32.totalorder 1, %s27
      %p514 = scmp.lt.s32.totalorder %s27, 3
      %p515 = pnand %p513, %p514
      %p516 = pneg %p515
      // Predicated region
      $region81: #{dehnn_forward.7} parent=5 // pred_check
        _
      $region82: #{dehnn_forward.7} parent=5 // pred_check_branch
        %518 = sbr.rel (%p515) target = $region84
      $region83: #{dehnn_forward.7} parent=5 // pred_region
        %s519 = ssub.s32 %s27, 1
        %p520 = scmp.lt.s32.totalorder %s32, 1
        %s521 = scalar_select %p520, %s32, 1
        %s522 = smul.addr %s521, 4
        %s523 = scalar_lea.vmem %s0, %s522
        %p524 = pneg %p53
        %p525 = pneg %p50
        %s526 = smul.u32 16, %s32
        %p527 = scmp.lt.s32.totalorder %s526, 31
        %s528 = scalar_select %p527, %s526, 31
        %s529 = smul.addr %s528, 4
        %s530 = scalar_lea.vmem %s1, %s529
        %p531 = pneg %p79
        %p532 = pneg %p76
        %p533 = pneg %p100
        %p534 = pneg %p97
        %p535 = pneg %p121
        %p536 = pneg %p118
        %p537 = pneg %p142
        %p538 = pneg %p139
        %p539 = pneg %p163
        %p540 = pneg %p160
        %p541 = pneg %p184
        %p542 = pneg %p181
        %p543 = pneg %p205
        %p544 = pneg %p202
        %p545 = pneg %p226
        %p546 = pneg %p223
        %p547 = pneg %p247
        %p548 = pneg %p244
        %p549 = pneg %p268
        %p550 = pneg %p265
        %p551 = pneg %p289
        %p552 = pneg %p286
        %p553 = pneg %p310
        %p554 = pneg %p307
        %p555 = pneg %p331
        %p556 = pneg %p328
        %p557 = pneg %p352
        %p558 = pneg %p349
        %p559 = pneg %p373
        %p560 = pneg %p370
        %p561 = pneg %p394
        %p562 = pneg %p391
        %p563 = pneg %p415
        %p564 = pneg %p412
        %p565 = pneg %p436
        %p566 = pneg %p433
        %p567 = scmp.lt.s32.totalorder %s32, 1
        %s568 = scalar_select %p567, %s32, 1
        %s569 = smul.addr %s568, 4
        %s570 = scalar_lea.vmem %s0, %s569
        %s571 = smul.u32 16, %s32
        %p572 = scmp.lt.s32.totalorder %s571, 31
        %s573 = scalar_select %p572, %s571, 31
        %s574 = smul.addr %s573, 4
        %s575 = scalar_lea.vmem %s1, %s574
        %s576 = smul.u32 16, %s32
        %p578 = scmp.eq.s32.totalorder %s32, 0
        // Predicated region
        $region85: #{dehnn_forward.7} parent=83 // pred_check
          %p579 = pneg %p578
        $region86: #{dehnn_forward.7} parent=83 // pred_check_branch
          %581 = sbr.rel (%p579) target = $region88
        $region87: #{dehnn_forward.7} parent=83 // pred_region
          %v582 = vld [vmem:[%s2] sm:$0x1f]
          %v583 = vpack.c.bf16 %v582, %v582
          %v584 = vld [vmem:[%s8] sm:$0xf]
          %v585 = vld [vmem:[%s9] sm:$0x1]
          %v587 = vlaneseq
          %v588 = vshrl.u32 %v587, 7
          %v589 = vsub.s32 0, %v588
          %v590 = vrot.slane %v585, %v589
          %vm592 = vcmask 64512
          %v594 = vsel %vm592, %v583, 0
          %vm596 = vcmask 1043456
          %v598 = vsel %vm596, %v584, 0
          %600 = vmatprep.subr.bf16.mxu0 0
          %601 = vmatpush1.bf16.msra.mxu0 0
          %602 = vmatprep.subr.bf16.mxu0 0
          %603 = vmatpush1.bf16.msra.mxu0 0
          %604 = vmatprep.subr.bf16.mxu0 0
          %605 = vmatpush1.bf16.msra.mxu0 0
          %606 = vmatprep.subr.bf16.mxu0 0
          %607 = vmatpush1.bf16.msra.mxu0 0
          %608 = vmatprep.subr.bf16.mxu0 0
          %609 = vmatpush1.bf16.msra.mxu0 0
          %610 = vmatprep.subr.bf16.mxu0 0
          %611 = vmatpush1.bf16.msra.mxu0 0
          %612 = vmatprep.subr.bf16.mxu0 0
          %613 = vmatpush1.bf16.msra.mxu0 0
          %614 = vmatprep.subr.bf16.mxu0 0
          %615 = vmatpush1.bf16.msra.mxu0 %v598
          %616 = vmatprep.subr.bf16.mxu0 0
          %617 = vmatpush2.bf16.msra.mxu0 0
          %618 = vmatprep.subr.bf16.mxu0 0
          %619 = vmatpush2.bf16.msra.mxu0 0
          %620 = vmatprep.subr.bf16.mxu0 0
          %621 = vmatpush2.bf16.msra.mxu0 0
          %622 = vmatprep.subr.bf16.mxu0 0
          %623 = vmatpush2.bf16.msra.mxu0 0
          %624 = vmatprep.subr.bf16.mxu0 0
          %625 = vmatpush2.bf16.msra.mxu0 0
          %626 = vmatprep.subr.bf16.mxu0 0
          %627 = vmatpush2.bf16.msra.mxu0 0
          %628 = vmatprep.subr.bf16.mxu0 0
          %629 = vmatpush2.bf16.msra.mxu0 0
          %630 = vmatprep.subr.bf16.mxu0 0
          %631 = vmatpush2.bf16.msra.mxu0 0
          %632 = vmatprep.mubr.bf16.mxu0 0
          %633 = vmatmul.mubr.bf16.gmra.mxu0 %v594
          %v634 = vpop.f32.mrf.mxu0
          %v635 = vadd.f32 %v590, %v634
          %v636 = vpop.f32.mrf.mxu0
          %v637 = vpop.f32.mrf.mxu0
          %v638 = vpop.f32.mrf.mxu0
          %639 = vdwg.mxu0
          %v640 = vmax.f32 %v635, 0.0
          %vm641 = vcmask 258048
          %v642 = vsel %vm641, %v640, 0.0
          %v643 = vrot.slane %v642, 4
          %v644 = vadd.f32 %v642, %v643
          %v645 = vrot.slane %v644, 2
          %v646 = vadd.f32 %v644, %v645
          %v647 = vrot.slane %v646, 1
          %v648 = vadd.f32 %v646, %v647
          %v649 = vpack.c.bf16 %v648, %v648
          %v650 = vld [vmem:[%s10] sm:$0xf]
          %v651 = vld [vmem:[%s10 + $0x4] sm:$0xf]
          %v652 = vld [vmem:[%s10 + $0x8] sm:$0xf]
          %v653 = vld [vmem:[%s10 + $0xc] sm:$0xf]
          %v654 = vld [vmem:[%s11] sm:$0x1]
          %v655 = vmul.f32 %v654, 5.0
          %v660 = vunpack.c.l.b16 %v650
          %v661 = vunpack.c.l.b16 %v651
          %v662 = vunpack.c.l.b16 %v652
          %v663 = vunpack.c.l.b16 %v653
          %v664 = vpack.c.b16 %v661, %v660
          %v665 = vpack.c.b16 %v663, %v662
          %vm668 = vcmask 261120
          %v670 = vsel %vm668, %v649, 0
          %672 = vmatprep.subr.bf16.mxu0 0
          %673 = vmatpush1.bf16.msra.mxu0 0
          %674 = vmatprep.subr.bf16.mxu0 0
          %675 = vmatpush1.bf16.msra.mxu0 0
          %676 = vmatprep.subr.bf16.mxu0 0
          %677 = vmatpush1.bf16.msra.mxu0 0
          %678 = vmatprep.subr.bf16.mxu0 0
          %679 = vmatpush1.bf16.msra.mxu0 0
          %680 = vmatprep.subr.bf16.mxu0 0
          %681 = vmatpush1.bf16.msra.mxu0 0
          %682 = vmatprep.subr.bf16.mxu0 0
          %683 = vmatpush1.bf16.msra.mxu0 0
          %684 = vmatprep.subr.bf16.mxu0 0
          %685 = vmatpush1.bf16.msra.mxu0 %v665
          %686 = vmatprep.subr.bf16.mxu0 0
          %687 = vmatpush1.bf16.msra.mxu0 %v664
          %688 = vmatprep.subr.bf16.mxu0 0
          %689 = vmatpush2.bf16.msra.mxu0 0
          %690 = vmatprep.subr.bf16.mxu0 0
          %691 = vmatpush2.bf16.msra.mxu0 0
          %692 = vmatprep.subr.bf16.mxu0 0
          %693 = vmatpush2.bf16.msra.mxu0 0
          %694 = vmatprep.subr.bf16.mxu0 0
          %695 = vmatpush2.bf16.msra.mxu0 0
          %696 = vmatprep.subr.bf16.mxu0 0
          %697 = vmatpush2.bf16.msra.mxu0 0
          %698 = vmatprep.subr.bf16.mxu0 0
          %699 = vmatpush2.bf16.msra.mxu0 0
          %700 = vmatprep.subr.bf16.mxu0 0
          %701 = vmatpush2.bf16.msra.mxu0 0
          %702 = vmatprep.subr.bf16.mxu0 0
          %703 = vmatpush2.bf16.msra.mxu0 0
          %704 = vmatprep.mubr.bf16.mxu0 0
          %705 = vmatmul.mubr.bf16.gmra.mxu0 %v670
          %v706 = vpop.f32.mrf.mxu0
          %v707 = vadd.f32 %v655, %v706
          %v708 = vpop.f32.mrf.mxu0
          %v709 = vpop.f32.mrf.mxu0
          %v710 = vpop.f32.mrf.mxu0
          %711 = vdwg.mxu0
          %vm712 = vcmask 57344
          %713 = vst.msk [vmem:[#allocation4] sm:$0x1] %vm712, %v707
          %v714 = vld [vmem:[%s12] sm:$0xf]
          %v715 = vld [vmem:[%s13] sm:$0x1]
          %v717 = vlaneseq
          %v718 = vshrl.u32 %v717, 7
          %v719 = vsub.s32 0, %v718
          %v720 = vrot.slane %v715, %v719
          %v723 = vsel %vm596, %v714, 0
          %725 = vmatprep.subr.bf16.mxu0 0
          %726 = vmatpush1.bf16.msra.mxu0 0
          %727 = vmatprep.subr.bf16.mxu0 0
          %728 = vmatpush1.bf16.msra.mxu0 0
          %729 = vmatprep.subr.bf16.mxu0 0
          %730 = vmatpush1.bf16.msra.mxu0 0
          %731 = vmatprep.subr.bf16.mxu0 0
          %732 = vmatpush1.bf16.msra.mxu0 0
          %733 = vmatprep.subr.bf16.mxu0 0
          %734 = vmatpush1.bf16.msra.mxu0 0
          %735 = vmatprep.subr.bf16.mxu0 0
          %736 = vmatpush1.bf16.msra.mxu0 0
          %737 = vmatprep.subr.bf16.mxu0 0
          %738 = vmatpush1.bf16.msra.mxu0 0
          %739 = vmatprep.subr.bf16.mxu0 0
          %740 = vmatpush1.bf16.msra.mxu0 %v723
          %741 = vmatprep.subr.bf16.mxu0 0
          %742 = vmatpush2.bf16.msra.mxu0 0
          %743 = vmatprep.subr.bf16.mxu0 0
          %744 = vmatpush2.bf16.msra.mxu0 0
          %745 = vmatprep.subr.bf16.mxu0 0
          %746 = vmatpush2.bf16.msra.mxu0 0
          %747 = vmatprep.subr.bf16.mxu0 0
          %748 = vmatpush2.bf16.msra.mxu0 0
          %749 = vmatprep.subr.bf16.mxu0 0
          %750 = vmatpush2.bf16.msra.mxu0 0
          %751 = vmatprep.subr.bf16.mxu0 0
          %752 = vmatpush2.bf16.msra.mxu0 0
          %753 = vmatprep.subr.bf16.mxu0 0
          %754 = vmatpush2.bf16.msra.mxu0 0
          %755 = vmatprep.subr.bf16.mxu0 0
          %756 = vmatpush2.bf16.msra.mxu0 0
          %757 = vmatprep.mubr.bf16.mxu0 0
          %758 = vmatmul.mubr.bf16.gmra.mxu0 %v594
          %v759 = vpop.f32.mrf.mxu0
          %v760 = vadd.f32 %v720, %v759
          %v761 = vpop.f32.mrf.mxu0
          %v762 = vpop.f32.mrf.mxu0
          %v763 = vpop.f32.mrf.mxu0
          %764 = vdwg.mxu0
          %v765 = vmax.f32 %v760, 0.0
          %v766 = vpack.c.bf16 %v765, %v765
          %v767 = vld [vmem:[%s14] sm:$0xf]
          %v768 = vld [vmem:[%s14 + $0x4] sm:$0xf]
          %v769 = vld [vmem:[%s14 + $0x8] sm:$0xf]
          %v770 = vld [vmem:[%s14 + $0xc] sm:$0xf]
          %v771 = vld [vmem:[%s15] sm:$0x1]
          %v773 = vlaneseq
          %v774 = vshrl.u32 %v773, 7
          %v775 = vsub.s32 0, %v774
          %v776 = vrot.slane %v771, %v775
          %v782 = vunpack.c.l.b16 %v767
          %v783 = vunpack.c.l.b16 %v768
          %v784 = vunpack.c.l.b16 %v769
          %v785 = vunpack.c.l.b16 %v770
          %v786 = vpack.c.b16 %v783, %v782
          %v787 = vpack.c.b16 %v785, %v784
          %v791 = vsel %vm668, %v766, 0
          %793 = vmatprep.subr.bf16.mxu0 0
          %794 = vmatpush1.bf16.msra.mxu0 0
          %795 = vmatprep.subr.bf16.mxu0 0
          %796 = vmatpush1.bf16.msra.mxu0 0
          %797 = vmatprep.subr.bf16.mxu0 0
          %798 = vmatpush1.bf16.msra.mxu0 0
          %799 = vmatprep.subr.bf16.mxu0 0
          %800 = vmatpush1.bf16.msra.mxu0 0
          %801 = vmatprep.subr.bf16.mxu0 0
          %802 = vmatpush1.bf16.msra.mxu0 0
          %803 = vmatprep.subr.bf16.mxu0 0
          %804 = vmatpush1.bf16.msra.mxu0 0
          %805 = vmatprep.subr.bf16.mxu0 0
          %806 = vmatpush1.bf16.msra.mxu0 %v787
          %807 = vmatprep.subr.bf16.mxu0 0
          %808 = vmatpush1.bf16.msra.mxu0 %v786
          %809 = vmatprep.subr.bf16.mxu0 0
          %810 = vmatpush2.bf16.msra.mxu0 0
          %811 = vmatprep.subr.bf16.mxu0 0
          %812 = vmatpush2.bf16.msra.mxu0 0
          %813 = vmatprep.subr.bf16.mxu0 0
          %814 = vmatpush2.bf16.msra.mxu0 0
          %815 = vmatprep.subr.bf16.mxu0 0
          %816 = vmatpush2.bf16.msra.mxu0 0
          %817 = vmatprep.subr.bf16.mxu0 0
          %818 = vmatpush2.bf16.msra.mxu0 0
          %819 = vmatprep.subr.bf16.mxu0 0
          %820 = vmatpush2.bf16.msra.mxu0 0
          %821 = vmatprep.subr.bf16.mxu0 0
          %822 = vmatpush2.bf16.msra.mxu0 0
          %823 = vmatprep.subr.bf16.mxu0 0
          %824 = vmatpush2.bf16.msra.mxu0 0
          %825 = vmatprep.mubr.bf16.mxu0 0
          %826 = vmatmul.mubr.bf16.gmra.mxu0 %v791
          %v827 = vpop.f32.mrf.mxu0
          %v828 = vadd.f32 %v776, %v827
          %v829 = vpop.f32.mrf.mxu0
          %v830 = vpop.f32.mrf.mxu0
          %v831 = vpop.f32.mrf.mxu0
          %832 = vdwg.mxu0
          %v833 = vpack.c.bf16 %v828, %v828
          %vm834 = vcmask 124928
          %vm835 = vsmask.f32 2304
          %vm836 = vmand %vm834, %vm835
          %v837 = vld [vmem:[%s18] sm:$0x7]
          %v838 = vsel %vm836, %v833, %v837
          %839 = vst [vmem:[%s18] sm:$0x7] %v838
          %v840 = vld [vmem:[%s3] sm:$0x1]
          %v841 = vpack.c.bf16 %v840, %v840
          %v842 = vld [vmem:[%s4] sm:$0xf]
          %v843 = vld [vmem:[%s5] sm:$0x1]
          %v845 = vsel %vm592, %v841, 0
          %v848 = vsel %vm596, %v842, 0
          %850 = vmatprep.subr.bf16.mxu0 0
          %851 = vmatpush1.bf16.msra.mxu0 0
          %852 = vmatprep.subr.bf16.mxu0 0
          %853 = vmatpush1.bf16.msra.mxu0 0
          %854 = vmatprep.subr.bf16.mxu0 0
          %855 = vmatpush1.bf16.msra.mxu0 0
          %856 = vmatprep.subr.bf16.mxu0 0
          %857 = vmatpush1.bf16.msra.mxu0 0
          %858 = vmatprep.subr.bf16.mxu0 0
          %859 = vmatpush1.bf16.msra.mxu0 0
          %860 = vmatprep.subr.bf16.mxu0 0
          %861 = vmatpush1.bf16.msra.mxu0 0
          %862 = vmatprep.subr.bf16.mxu0 0
          %863 = vmatpush1.bf16.msra.mxu0 0
          %864 = vmatprep.subr.bf16.mxu0 0
          %865 = vmatpush1.bf16.msra.mxu0 %v848
          %866 = vmatprep.subr.bf16.mxu0 0
          %867 = vmatpush2.bf16.msra.mxu0 0
          %868 = vmatprep.subr.bf16.mxu0 0
          %869 = vmatpush2.bf16.msra.mxu0 0
          %870 = vmatprep.subr.bf16.mxu0 0
          %871 = vmatpush2.bf16.msra.mxu0 0
          %872 = vmatprep.subr.bf16.mxu0 0
          %873 = vmatpush2.bf16.msra.mxu0 0
          %874 = vmatprep.subr.bf16.mxu0 0
          %875 = vmatpush2.bf16.msra.mxu0 0
          %876 = vmatprep.subr.bf16.mxu0 0
          %877 = vmatpush2.bf16.msra.mxu0 0
          %878 = vmatprep.subr.bf16.mxu0 0
          %879 = vmatpush2.bf16.msra.mxu0 0
          %880 = vmatprep.subr.bf16.mxu0 0
          %881 = vmatpush2.bf16.msra.mxu0 0
          %882 = vmatprep.mubr.bf16.mxu0 0
          %883 = vmatmul.mubr.bf16.gmra.mxu0 %v845
          %v884 = vpop.f32.mrf.mxu0
          %v885 = vadd.f32 %v843, %v884
          %v886 = vpop.f32.mrf.mxu0
          %v887 = vpop.f32.mrf.mxu0
          %v888 = vpop.f32.mrf.mxu0
          %889 = vdwg.mxu0
          %v890 = vmax.f32 %v885, 0.0
          %v891 = vpack.c.bf16 %v890, %v890
          %v892 = vld [vmem:[%s6] sm:$0xf]
          %v893 = vld [vmem:[%s6 + $0x4] sm:$0xf]
          %v894 = vld [vmem:[%s6 + $0x8] sm:$0xf]
          %v895 = vld [vmem:[%s6 + $0xc] sm:$0xf]
          %v896 = vld [vmem:[%s7] sm:$0x1]
          %v901 = vunpack.c.l.b16 %v892
          %v902 = vunpack.c.l.b16 %v893
          %v903 = vunpack.c.l.b16 %v894
          %v904 = vunpack.c.l.b16 %v895
          %v905 = vpack.c.b16 %v902, %v901
          %v906 = vpack.c.b16 %v904, %v903
          %v910 = vsel %vm668, %v891, 0
          %912 = vmatprep.subr.bf16.mxu0 0
          %913 = vmatpush1.bf16.msra.mxu0 0
          %914 = vmatprep.subr.bf16.mxu0 0
          %915 = vmatpush1.bf16.msra.mxu0 0
          %916 = vmatprep.subr.bf16.mxu0 0
          %917 = vmatpush1.bf16.msra.mxu0 0
          %918 = vmatprep.subr.bf16.mxu0 0
          %919 = vmatpush1.bf16.msra.mxu0 0
          %920 = vmatprep.subr.bf16.mxu0 0
          %921 = vmatpush1.bf16.msra.mxu0 0
          %922 = vmatprep.subr.bf16.mxu0 0
          %923 = vmatpush1.bf16.msra.mxu0 0
          %924 = vmatprep.subr.bf16.mxu0 0
          %925 = vmatpush1.bf16.msra.mxu0 %v906
          %926 = vmatprep.subr.bf16.mxu0 0
          %927 = vmatpush1.bf16.msra.mxu0 %v905
          %928 = vmatprep.subr.bf16.mxu0 0
          %929 = vmatpush2.bf16.msra.mxu0 0
          %930 = vmatprep.subr.bf16.mxu0 0
          %931 = vmatpush2.bf16.msra.mxu0 0
          %932 = vmatprep.subr.bf16.mxu0 0
          %933 = vmatpush2.bf16.msra.mxu0 0
          %934 = vmatprep.subr.bf16.mxu0 0
          %935 = vmatpush2.bf16.msra.mxu0 0
          %936 = vmatprep.subr.bf16.mxu0 0
          %937 = vmatpush2.bf16.msra.mxu0 0
          %938 = vmatprep.subr.bf16.mxu0 0
          %939 = vmatpush2.bf16.msra.mxu0 0
          %940 = vmatprep.subr.bf16.mxu0 0
          %941 = vmatpush2.bf16.msra.mxu0 0
          %942 = vmatprep.subr.bf16.mxu0 0
          %943 = vmatpush2.bf16.msra.mxu0 0
          %944 = vmatprep.mubr.bf16.mxu0 0
          %945 = vmatmul.mubr.bf16.gmra.mxu0 %v910
          %v946 = vpop.f32.mrf.mxu0
          %v947 = vadd.f32 %v896, %v946
          %v948 = vpop.f32.mrf.mxu0
          %v949 = vpop.f32.mrf.mxu0
          %v950 = vpop.f32.mrf.mxu0
          %951 = vdwg.mxu0
          %v952 = vlaneseq
          %v953 = vshrl.u32 %v952, 7
          %v954 = vsub.s32 0, %v953
          %v955 = vrot.slane %v947, %v954
          %vm956 = vcmask 61440
          %957 = vst.msk [vmem:[#allocation2] sm:$0x1f] %vm956, %v955
        $region88: #{dehnn_forward.7} parent=83 // pred_fallthru
          _
        %v958 = vld [vmem:[#allocation2] sm:$0x1f]
        %v959 = vld [vmem:[%s570] sm:$0x7]
        %v960 = vld [vmem:[%s575] sm:$0xf]
        %v961 = vld [vmem:[%s575 + $0x4] sm:$0xf]
        %v962 = vld [vmem:[%s575 + $0x8] sm:$0xf]
        %v963 = vld [vmem:[%s575 + $0xc] sm:$0xf]
        %v964 = vld [vmem:[%s575 + $0x10] sm:$0xf]
        %v965 = vld [vmem:[%s575 + $0x14] sm:$0xf]
        %v966 = vld [vmem:[%s575 + $0x18] sm:$0xf]
        %v967 = vld [vmem:[%s575 + $0x1c] sm:$0xf]
        %v968 = vld [vmem:[%s575 + $0x20] sm:$0xf]
        %v969 = vld [vmem:[%s575 + $0x24] sm:$0xf]
        %v970 = vld [vmem:[%s575 + $0x28] sm:$0xf]
        %v971 = vld [vmem:[%s575 + $0x2c] sm:$0xf]
        %v972 = vld [vmem:[%s575 + $0x30] sm:$0xf]
        %v973 = vld [vmem:[%s575 + $0x34] sm:$0xf]
        %v974 = vld [vmem:[%s575 + $0x38] sm:$0xf]
        %v975 = vld [vmem:[%s575 + $0x3c] sm:$0xf]
        %v992 = vunpack.c.l.b16 %v960
        %v993 = vunpack.c.l.b16 %v961
        %v994 = vunpack.c.l.b16 %v962
        %v995 = vunpack.c.l.b16 %v963
        %v996 = vunpack.c.l.b16 %v964
        %v997 = vunpack.c.l.b16 %v965
        %v998 = vunpack.c.l.b16 %v966
        %v999 = vunpack.c.l.b16 %v967
        %v1000 = vunpack.c.l.b16 %v968
        %v1001 = vunpack.c.l.b16 %v969
        %v1002 = vunpack.c.l.b16 %v970
        %v1003 = vunpack.c.l.b16 %v971
        %v1004 = vunpack.c.l.b16 %v972
        %v1005 = vunpack.c.l.b16 %v973
        %v1006 = vunpack.c.l.b16 %v974
        %v1007 = vunpack.c.l.b16 %v975
        %v1008 = vpack.c.b16 %v993, %v992
        %v1009 = vpack.c.b16 %v995, %v994
        %v1010 = vpack.c.b16 %v997, %v996
        %v1011 = vpack.c.b16 %v999, %v998
        %v1012 = vpack.c.b16 %v1001, %v1000
        %v1013 = vpack.c.b16 %v1003, %v1002
        %v1014 = vpack.c.b16 %v1005, %v1004
        %v1015 = vpack.c.b16 %v1007, %v1006
        %1024 = vmatprep.subr.bf16.mxu0 0
        %1025 = vmatpush1.bf16.msra.mxu0 %v1015
        %1026 = vmatprep.subr.bf16.mxu0 0
        %1027 = vmatpush1.bf16.msra.mxu0 %v1014
        %1028 = vmatprep.subr.bf16.mxu0 0
        %1029 = vmatpush1.bf16.msra.mxu0 %v1013
        %1030 = vmatprep.subr.bf16.mxu0 0
        %1031 = vmatpush1.bf16.msra.mxu0 %v1012
        %1032 = vmatprep.subr.bf16.mxu0 0
        %1033 = vmatpush1.bf16.msra.mxu0 %v1011
        %1034 = vmatprep.subr.bf16.mxu0 0
        %1035 = vmatpush1.bf16.msra.mxu0 %v1010
        %1036 = vmatprep.subr.bf16.mxu0 0
        %1037 = vmatpush1.bf16.msra.mxu0 %v1009
        %1038 = vmatprep.subr.bf16.mxu0 0
        %1039 = vmatpush1.bf16.msra.mxu0 %v1008
        %1040 = vmatprep.subr.bf16.mxu0 0
        %1041 = vmatpush2.bf16.msra.mxu0 0
        %1042 = vmatprep.subr.bf16.mxu0 0
        %1043 = vmatpush2.bf16.msra.mxu0 0
        %1044 = vmatprep.subr.bf16.mxu0 0
        %1045 = vmatpush2.bf16.msra.mxu0 0
        %1046 = vmatprep.subr.bf16.mxu0 0
        %1047 = vmatpush2.bf16.msra.mxu0 0
        %1048 = vmatprep.subr.bf16.mxu0 0
        %1049 = vmatpush2.bf16.msra.mxu0 0
        %1050 = vmatprep.subr.bf16.mxu0 0
        %1051 = vmatpush2.bf16.msra.mxu0 0
        %1052 = vmatprep.subr.bf16.mxu0 0
        %1053 = vmatpush2.bf16.msra.mxu0 0
        %1054 = vmatprep.subr.bf16.mxu0 0
        %1055 = vmatpush2.bf16.msra.mxu0 0
        %1056 = vmatprep.mubr.bf16.mxu0 0
        %1057 = vmatmul.mubr.bf16.gmra.mxu0 %v959
        %v1058 = vpop.f32.mrf.mxu0
        %v1059 = vadd.f32 0.0, %v1058
        %v1060 = vpop.f32.mrf.mxu0
        %v1061 = vpop.f32.mrf.mxu0
        %v1062 = vpop.f32.mrf.mxu0
        %1063 = vdwg.mxu0
        %v1064 = vadd.f32 %v958, %v1059
        %vm1065 = vcmask 61440
        %1066 = vst.msk [vmem:[#allocation2] sm:$0x1f] %vm1065, %v1064
        // Predicated region
        $region89: #{dehnn_forward.7} parent=83 // pred_check
          %p1067 = pneg %p391
        $region90: #{dehnn_forward.7} parent=83 // pred_check_branch
          %1069 = sbr.rel (%p1067) target = $region92
        $region91: #{dehnn_forward.7} parent=83 // pred_region
          %s1071 = ssub.s32 128, 128
          %1072 = vsyncadd [#allocation3], %s1071
          %s1074 = sshll.u32 [#allocation2], 4
          %s1075 = int_to_ptr.vmem [resolvable:$true] %s1074
          %1077 = dma.vmem_to_hbm [thread:$0]  %s1075, 128, %s16, [#allocation3]
        $region92: #{dehnn_forward.7} parent=83 // pred_fallthru
          _
        // Predicated region
        $region93: #{dehnn_forward.7} parent=83 // pred_check
          %p1078 = pneg %p412
        $region94: #{dehnn_forward.7} parent=83 // pred_check_branch
          %1080 = sbr.rel (%p1078) target = $region96
        $region95: #{dehnn_forward.7} parent=83 // pred_region
          %s1082 = ssub.s32 16, 16
          %1083 = vsyncadd [#allocation5], %s1082
          %s1085 = sshll.u32 [#allocation4], 4
          %s1086 = int_to_ptr.vmem [resolvable:$true] %s1085
          %1088 = dma.vmem_to_hbm [thread:$0]  %s1086, 16, %s17, [#allocation5]
        $region96: #{dehnn_forward.7} parent=83 // pred_fallthru
          _
        // Predicated region
        $region97: #{dehnn_forward.7} parent=83 // pred_check
          %p1089 = pneg %p433
        $region98: #{dehnn_forward.7} parent=83 // pred_check_branch
          %1091 = sbr.rel (%p1089) target = $region100
        $region99: #{dehnn_forward.7} parent=83 // pred_region
          _
        $region100: #{dehnn_forward.7} parent=83 // pred_fallthru
          _
        // Predicated region
        $region101: #{dehnn_forward.7} parent=83 // pred_check
          %p1092 = pneg %p391
        $region102: #{dehnn_forward.7} parent=83 // pred_check_branch
          %1094 = sbr.rel (%p1092) target = $region104
        $region103: #{dehnn_forward.7} parent=83 // pred_region
          %1095 = dma.done [#allocation3], 128
        $region104: #{dehnn_forward.7} parent=83 // pred_fallthru
          _
        // Predicated region
        $region105: #{dehnn_forward.7} parent=83 // pred_check
          %p1096 = pneg %p412
        $region106: #{dehnn_forward.7} parent=83 // pred_check_branch
          %1098 = sbr.rel (%p1096) target = $region108
        $region107: #{dehnn_forward.7} parent=83 // pred_region
          %1099 = dma.done [#allocation5], 16
        $region108: #{dehnn_forward.7} parent=83 // pred_fallthru
          _
        // Predicated region
        $region109: #{dehnn_forward.7} parent=83 // pred_check
          %p1100 = pneg %p433
        $region110: #{dehnn_forward.7} parent=83 // pred_check_branch
          %1102 = sbr.rel (%p1100) target = $region112
        $region111: #{dehnn_forward.7} parent=83 // pred_region
          _
        $region112: #{dehnn_forward.7} parent=83 // pred_fallthru
          _
      $region84: #{dehnn_forward.7} parent=5 // pred_fallthru
        _
      %p1103 = scmp.le.s32.totalorder 2, %s27
      // Predicated region
      $region113: #{dehnn_forward.7} parent=5 // pred_check
        %p1104 = pneg %p1103
      $region114: #{dehnn_forward.7} parent=5 // pred_check_branch
        %1106 = sbr.rel (%p1104) target = $region116
      $region115: #{dehnn_forward.7} parent=5 // pred_region
        %s1107 = ssub.s32 %s27, 2
      $region116: #{dehnn_forward.7} parent=5 // pred_fallthru
        _
    $region6: #{dehnn_forward.7} parent=1 // loop_footer
      %s31 = sadd.s32 1, %s27
    $region7: #{dehnn_forward.7} parent=1 // loop_footer_branch
      %26 = sbr.rel target = $region3
    $region8: #{dehnn_forward.7} parent=1 // loop_exit
      _
    %1108 = vsyncpa [#allocation3], 1
    %s1109 = scalar_lea.sflag [#allocation3], 1
    %1110 = vsyncpa %s1109, 1
    %1111 = vsyncpa [#allocation5], 1

// kernel: dehnn_forward.6
$region0: #{dehnn_forward.6}
  #allocation0 [shape = 'u32[]', space=smem, size = 0x4, offset = 0x4, fixed_abs, tag = 'smem constant byte address 0x4 - core index']
  #allocation1 [shape = 'u32[144,128]{1,0:T(1,128)}', space=vmem, size = 0x12000, scoped, tag = 'internal scratch']
  %s0 = inlined_call_operand.vmem [shape: f32[256,16], index: 0, kind: input, shape index: {}]
  %s1 = inlined_call_operand.vmem [shape: bf16[16,32], index: 1, kind: input, shape index: {}]
  %s2 = inlined_call_operand.vmem [shape: f32[1,32], index: 2, kind: input, shape index: {}]
  %s3 = inlined_call_operand.vmem [shape: bf16[32,16], index: 3, kind: input, shape index: {}]
  %s4 = inlined_call_operand.vmem [shape: f32[1,16], index: 4, kind: input, shape index: {}]
  %s5 = inlined_call_operand.vmem [shape: bf16[256,16], index: 5, kind: output, shape index: {}]
  %s6 = sld [smem:[#allocation0]]
  $region53: #{dehnn_forward.6} parent=0
    _
  %s8 = ssub.s32 1, %s6
  %s9 = scalar_select 0, %s8, %s6
  loop: start=0, step=1, limit=18
  $region2: #{dehnn_forward.6} parent=0 // loop_pre_header
    _
  $region3: #{dehnn_forward.6} parent=0 // loop_header
    %s11 = sphi 0, %s15
    %p12 = scmp.ge.s32.totalorder %s11, 18
    %s21 = sphi 0, %s23
    %s24 = sphi 0, %s21
    %s25 = sphi 0, %s24
    %s41 = sphi 0, %s25
    %s45 = sphi 0, %s45
    %s47 = sphi 0, %s45
    %s48 = sphi 0, %s47
    %s62 = sphi 0, %s48
    %s66 = sphi 0, %s66
    %s68 = sphi 0, %s66
    %s69 = sphi 0, %s68
    %s83 = sphi 0, %s69
    %s87 = sphi 0, %s87
    %s89 = sphi 0, %s87
    %s90 = sphi 0, %s89
    %s104 = sphi 0, %s90
    %s108 = sphi 0, %s108
    %s110 = sphi 0, %s108
    %s111 = sphi 0, %s110
    %s125 = sphi 0, %s111
    %s131 = sphi 0, %s133
    %s134 = sphi 0, %s131
    %s135 = sphi 0, %s134
    %s151 = sphi 0, %s135
  $region4: #{dehnn_forward.6} parent=0 // loop_header_branch
    %14 = sbr.rel (%p12) target = $region8
  $region5: #{dehnn_forward.6} parent=0 // loop_body
    %s16 = ssub.s32 %s11, 1
    %s17 = ssub.s32 %s11, 2
    %s18 = sadd.s32 %s11, 1
    %s19 = ssub.s32 %s11, %s18
    %p20 = scmp.eq.s32.totalorder %s19, 0
    %s22 = sadd.s32 %s21, 1
    %s23 = scalar_select %p20, %s21, %s22
    %p26 = pneg %p20
    %p27 = scmp.eq.s32.totalorder %s11, 15
    %p28 = por %p26, %p27
    %p29 = scmp.ne.s32.totalorder %s21, %s24
    %p30 = scmp.eq.s32.totalorder %s11, 0
    %p31 = por %p29, %p30
    %p32 = scmp.ne.s32.totalorder %s21, %s24
    %p33 = scmp.eq.s32.totalorder %s16, 15
    %p34 = por %p32, %p33
    %p35 = scmp.ne.s32.totalorder %s24, %s25
    %p36 = scmp.eq.s32.totalorder %s16, 0
    %p37 = por %p35, %p36
    %p38 = scmp.ne.s32.totalorder %s24, %s25
    %p39 = scmp.eq.s32.totalorder %s17, 15
    %p40 = por %p38, %p39
    %p42 = scmp.ne.s32.totalorder %s25, %s41
    %p43 = scmp.eq.s32.totalorder %s17, 0
    %p44 = por %p42, %p43
    %s46 = sadd.s32 %s45, 1
    %p49 = scmp.eq.s32.totalorder %s11, 15
    %p50 = scmp.ne.s32.totalorder %s45, %s47
    %p51 = scmp.eq.s32.totalorder %s11, 0
    %p52 = por %p50, %p51
    %p53 = scmp.ne.s32.totalorder %s45, %s47
    %p54 = scmp.eq.s32.totalorder %s16, 15
    %p55 = por %p53, %p54
    %p56 = scmp.ne.s32.totalorder %s47, %s48
    %p57 = scmp.eq.s32.totalorder %s16, 0
    %p58 = por %p56, %p57
    %p59 = scmp.ne.s32.totalorder %s47, %s48
    %p60 = scmp.eq.s32.totalorder %s17, 15
    %p61 = por %p59, %p60
    %p63 = scmp.ne.s32.totalorder %s48, %s62
    %p64 = scmp.eq.s32.totalorder %s17, 0
    %p65 = por %p63, %p64
    %s67 = sadd.s32 %s66, 1
    %p70 = scmp.eq.s32.totalorder %s11, 15
    %p71 = scmp.ne.s32.totalorder %s66, %s68
    %p72 = scmp.eq.s32.totalorder %s11, 0
    %p73 = por %p71, %p72
    %p74 = scmp.ne.s32.totalorder %s66, %s68
    %p75 = scmp.eq.s32.totalorder %s16, 15
    %p76 = por %p74, %p75
    %p77 = scmp.ne.s32.totalorder %s68, %s69
    %p78 = scmp.eq.s32.totalorder %s16, 0
    %p79 = por %p77, %p78
    %p80 = scmp.ne.s32.totalorder %s68, %s69
    %p81 = scmp.eq.s32.totalorder %s17, 15
    %p82 = por %p80, %p81
    %p84 = scmp.ne.s32.totalorder %s69, %s83
    %p85 = scmp.eq.s32.totalorder %s17, 0
    %p86 = por %p84, %p85
    %s88 = sadd.s32 %s87, 1
    %p91 = scmp.eq.s32.totalorder %s11, 15
    %p92 = scmp.ne.s32.totalorder %s87, %s89
    %p93 = scmp.eq.s32.totalorder %s11, 0
    %p94 = por %p92, %p93
    %p95 = scmp.ne.s32.totalorder %s87, %s89
    %p96 = scmp.eq.s32.totalorder %s16, 15
    %p97 = por %p95, %p96
    %p98 = scmp.ne.s32.totalorder %s89, %s90
    %p99 = scmp.eq.s32.totalorder %s16, 0
    %p100 = por %p98, %p99
    %p101 = scmp.ne.s32.totalorder %s89, %s90
    %p102 = scmp.eq.s32.totalorder %s17, 15
    %p103 = por %p101, %p102
    %p105 = scmp.ne.s32.totalorder %s90, %s104
    %p106 = scmp.eq.s32.totalorder %s17, 0
    %p107 = por %p105, %p106
    %s109 = sadd.s32 %s108, 1
    %p112 = scmp.eq.s32.totalorder %s11, 15
    %p113 = scmp.ne.s32.totalorder %s108, %s110
    %p114 = scmp.eq.s32.totalorder %s11, 0
    %p115 = por %p113, %p114
    %p116 = scmp.ne.s32.totalorder %s108, %s110
    %p117 = scmp.eq.s32.totalorder %s16, 15
    %p118 = por %p116, %p117
    %p119 = scmp.ne.s32.totalorder %s110, %s111
    %p120 = scmp.eq.s32.totalorder %s16, 0
    %p121 = por %p119, %p120
    %p122 = scmp.ne.s32.totalorder %s110, %s111
    %p123 = scmp.eq.s32.totalorder %s17, 15
    %p124 = por %p122, %p123
    %p126 = scmp.ne.s32.totalorder %s111, %s125
    %p127 = scmp.eq.s32.totalorder %s17, 0
    %p128 = por %p126, %p127
    %s129 = ssub.s32 %s11, %s18
    %p130 = scmp.eq.s32.totalorder %s129, 0
    %s132 = sadd.s32 %s131, 1
    %s133 = scalar_select %p130, %s131, %s132
    %p136 = pneg %p130
    %p137 = scmp.eq.s32.totalorder %s11, 15
    %p138 = por %p136, %p137
    %p139 = scmp.ne.s32.totalorder %s131, %s134
    %p140 = scmp.eq.s32.totalorder %s11, 0
    %p141 = por %p139, %p140
    %p142 = scmp.ne.s32.totalorder %s131, %s134
    %p143 = scmp.eq.s32.totalorder %s16, 15
    %p144 = por %p142, %p143
    %p145 = scmp.ne.s32.totalorder %s134, %s135
    %p146 = scmp.eq.s32.totalorder %s16, 0
    %p147 = por %p145, %p146
    %p148 = scmp.ne.s32.totalorder %s134, %s135
    %p149 = scmp.eq.s32.totalorder %s17, 15
    %p150 = por %p148, %p149
    %p152 = scmp.ne.s32.totalorder %s135, %s151
    %p153 = scmp.eq.s32.totalorder %s17, 0
    %p154 = por %p152, %p153
    %p155 = scmp.le.s32.totalorder 1, %s11
    %p156 = scmp.lt.s32.totalorder %s11, 17
    %p157 = pnand %p155, %p156
    %p158 = pneg %p157
    // Predicated region
    $region9: #{dehnn_forward.6} parent=5 // pred_check
      _
    $region10: #{dehnn_forward.6} parent=5 // pred_check_branch
      %160 = sbr.rel (%p157) target = $region12
    $region11: #{dehnn_forward.6} parent=5 // pred_region
      %s161 = ssub.s32 %s11, 1
      // Predicated region
      $region13: #{dehnn_forward.6} parent=11 // pred_check
        %p162 = pneg %p58
      $region14: #{dehnn_forward.6} parent=11 // pred_check_branch
        %164 = sbr.rel (%p162) target = $region16
      $region15: #{dehnn_forward.6} parent=11 // pred_region
        _
      $region16: #{dehnn_forward.6} parent=11 // pred_fallthru
        _
      // Predicated region
      $region17: #{dehnn_forward.6} parent=11 // pred_check
        %p165 = pneg %p79
      $region18: #{dehnn_forward.6} parent=11 // pred_check_branch
        %167 = sbr.rel (%p165) target = $region20
      $region19: #{dehnn_forward.6} parent=11 // pred_region
        _
      $region20: #{dehnn_forward.6} parent=11 // pred_fallthru
        _
      // Predicated region
      $region21: #{dehnn_forward.6} parent=11 // pred_check
        %p168 = pneg %p100
      $region22: #{dehnn_forward.6} parent=11 // pred_check_branch
        %170 = sbr.rel (%p168) target = $region24
      $region23: #{dehnn_forward.6} parent=11 // pred_region
        _
      $region24: #{dehnn_forward.6} parent=11 // pred_fallthru
        _
      // Predicated region
      $region25: #{dehnn_forward.6} parent=11 // pred_check
        %p171 = pneg %p121
      $region26: #{dehnn_forward.6} parent=11 // pred_check_branch
        %173 = sbr.rel (%p171) target = $region28
      $region27: #{dehnn_forward.6} parent=11 // pred_region
        _
      $region28: #{dehnn_forward.6} parent=11 // pred_fallthru
        _
    $region12: #{dehnn_forward.6} parent=5 // pred_fallthru
      _
    %p174 = scmp.lt.s32.totalorder %s11, 16
    // Predicated region
    $region29: #{dehnn_forward.6} parent=5 // pred_check
      %p175 = pneg %p174
    $region30: #{dehnn_forward.6} parent=5 // pred_check_branch
      %177 = sbr.rel (%p175) target = $region32
    $region31: #{dehnn_forward.6} parent=5 // pred_region
      // Predicated region
      $region33: #{dehnn_forward.6} parent=31 // pred_check
        %p178 = pneg %p31
      $region34: #{dehnn_forward.6} parent=31 // pred_check_branch
        %180 = sbr.rel (%p178) target = $region36
      $region35: #{dehnn_forward.6} parent=31 // pred_region
        %s181 = smul.u32 2, %s11
        %p182 = scmp.lt.s32.totalorder %s181, 31
        %s183 = scalar_select %p182, %s181, 31
        %s184 = smul.addr %s183, 8
        %s185 = scalar_lea.vmem %s0, %s184
        %s186 = smul.u32 2, %s11
      $region36: #{dehnn_forward.6} parent=31 // pred_fallthru
        _
    $region32: #{dehnn_forward.6} parent=5 // pred_fallthru
      _
    %p187 = scmp.le.s32.totalorder 1, %s11
    %p188 = scmp.lt.s32.totalorder %s11, 17
    %p189 = pnand %p187, %p188
    %p190 = pneg %p189
    // Predicated region
    $region37: #{dehnn_forward.6} parent=5 // pred_check
      _
    $region38: #{dehnn_forward.6} parent=5 // pred_check_branch
      %192 = sbr.rel (%p189) target = $region40
    $region39: #{dehnn_forward.6} parent=5 // pred_region
      %s193 = ssub.s32 %s11, 1
      %s194 = smul.u32 2, %s16
      %p195 = scmp.lt.s32.totalorder %s194, 31
      %s196 = scalar_select %p195, %s194, 31
      %s197 = smul.addr %s196, 8
      %s198 = scalar_lea.vmem %s0, %s197
      %p199 = pneg %p37
      %p200 = pneg %p34
      %p201 = pneg %p58
      %p202 = pneg %p55
      %p203 = pneg %p79
      %p204 = pneg %p76
      %p205 = pneg %p100
      %p206 = pneg %p97
      %p207 = pneg %p121
      %p208 = pneg %p118
      %p209 = pneg %p147
      %p210 = pneg %p144
      %s211 = smul.u32 2, %s16
      %p212 = scmp.lt.s32.totalorder %s211, 31
      %s213 = scalar_select %p212, %s211, 31
      %s214 = smul.addr %s213, 4
      %s215 = scalar_lea.vmem %s5, %s214
      %s216 = smul.u32 2, %s16
      %p217 = scmp.lt.s32.totalorder %s216, 31
      %s218 = scalar_select %p217, %s216, 31
      %s219 = smul.addr %s218, 8
      %s220 = scalar_lea.vmem %s0, %s219
      %s221 = smul.u32 2, %s16
      %s222 = smul.u32 2, %s16
      %p223 = scmp.lt.s32.totalorder %s222, 31
      %s224 = scalar_select %p223, %s222, 31
      %s225 = smul.addr %s224, 4
      %s226 = scalar_lea.vmem %s5, %s225
      %s227 = smul.u32 2, %s16
      %v229 = vld [vmem:[%s220] sm:$0xff]
      %v230 = vld [vmem:[%s220 + $0x8] sm:$0xff]
      %v231 = vpack.c.bf16 %v230, %v229
      %v232 = vld [vmem:[%s1] sm:$0xf]
      %v233 = vld [vmem:[%s1 + $0x4] sm:$0xf]
      %v234 = vld [vmem:[%s2] sm:$0x1]
      %v236 = vlaneseq
      %v237 = vshrl.u32 %v236, 7
      %v238 = vsub.s32 0, %v237
      %v239 = vrot.slane %v234, %v238
      %v243 = vunpack.c.l.b16 %v232
      %v244 = vunpack.c.l.b16 %v233
      %v245 = vpack.c.b16 %v244, %v243
      %vm247 = vcmask 130048
      %v249 = vsel %vm247, %v231, 0
      %251 = vmatprep.subr.bf16.mxu0 0
      %252 = vmatpush1.bf16.msra.mxu0 0
      %253 = vmatprep.subr.bf16.mxu0 0
      %254 = vmatpush1.bf16.msra.mxu0 0
      %255 = vmatprep.subr.bf16.mxu0 0
      %256 = vmatpush1.bf16.msra.mxu0 0
      %257 = vmatprep.subr.bf16.mxu0 0
      %258 = vmatpush1.bf16.msra.mxu0 0
      %259 = vmatprep.subr.bf16.mxu0 0
      %260 = vmatpush1.bf16.msra.mxu0 0
      %261 = vmatprep.subr.bf16.mxu0 0
      %262 = vmatpush1.bf16.msra.mxu0 0
      %263 = vmatprep.subr.bf16.mxu0 0
      %264 = vmatpush1.bf16.msra.mxu0 0
      %265 = vmatprep.subr.bf16.mxu0 0
      %266 = vmatpush1.bf16.msra.mxu0 %v245
      %267 = vmatprep.subr.bf16.mxu0 0
      %268 = vmatpush2.bf16.msra.mxu0 0
      %269 = vmatprep.subr.bf16.mxu0 0
      %270 = vmatpush2.bf16.msra.mxu0 0
      %271 = vmatprep.subr.bf16.mxu0 0
      %272 = vmatpush2.bf16.msra.mxu0 0
      %273 = vmatprep.subr.bf16.mxu0 0
      %274 = vmatpush2.bf16.msra.mxu0 0
      %275 = vmatprep.subr.bf16.mxu0 0
      %276 = vmatpush2.bf16.msra.mxu0 0
      %277 = vmatprep.subr.bf16.mxu0 0
      %278 = vmatpush2.bf16.msra.mxu0 0
      %279 = vmatprep.subr.bf16.mxu0 0
      %280 = vmatpush2.bf16.msra.mxu0 0
      %281 = vmatprep.subr.bf16.mxu0 0
      %282 = vmatpush2.bf16.msra.mxu0 0
      %283 = vmatprep.mubr.bf16.mxu0 0
      %284 = vmatmul.mubr.bf16.gmra.mxu0 %v249
      %v285 = vpop.f32.mrf.mxu0
      %v286 = vadd.f32 %v239, %v285
      %v287 = vpop.f32.mrf.mxu0
      %v288 = vpop.f32.mrf.mxu0
      %v289 = vadd.f32 %v239, %v288
      %v290 = vpop.f32.mrf.mxu0
      %291 = vdwg.mxu0
      %v292 = vmax.f32 %v286, 0.0
      %v293 = vmax.f32 %v289, 0.0
      %v294 = vpack.c.bf16 %v293, %v292
      %v295 = vld [vmem:[%s3] sm:$0xf]
      %v296 = vld [vmem:[%s3 + $0x4] sm:$0xf]
      %v297 = vld [vmem:[%s3 + $0x8] sm:$0xf]
      %v298 = vld [vmem:[%s3 + $0xc] sm:$0xf]
      %v299 = vld [vmem:[%s4] sm:$0x1]
      %v301 = vlaneseq
      %v302 = vshrl.u32 %v301, 7
      %v303 = vsub.s32 0, %v302
      %v304 = vrot.slane %v299, %v303
      %v310 = vunpack.c.l.b16 %v295
      %v311 = vunpack.c.l.b16 %v296
      %v312 = vunpack.c.l.b16 %v297
      %v313 = vunpack.c.l.b16 %v298
      %v314 = vpack.c.b16 %v311, %v310
      %v315 = vpack.c.b16 %v313, %v312
      %vm318 = vcmask 261120
      %v320 = vsel %vm318, %v294, 0
      %322 = vmatprep.subr.bf16.mxu0 0
      %323 = vmatpush1.bf16.msra.mxu0 0
      %324 = vmatprep.subr.bf16.mxu0 0
      %325 = vmatpush1.bf16.msra.mxu0 0
      %326 = vmatprep.subr.bf16.mxu0 0
      %327 = vmatpush1.bf16.msra.mxu0 0
      %328 = vmatprep.subr.bf16.mxu0 0
      %329 = vmatpush1.bf16.msra.mxu0 0
      %330 = vmatprep.subr.bf16.mxu0 0
      %331 = vmatpush1.bf16.msra.mxu0 0
      %332 = vmatprep.subr.bf16.mxu0 0
      %333 = vmatpush1.bf16.msra.mxu0 0
      %334 = vmatprep.subr.bf16.mxu0 0
      %335 = vmatpush1.bf16.msra.mxu0 %v315
      %336 = vmatprep.subr.bf16.mxu0 0
      %337 = vmatpush1.bf16.msra.mxu0 %v314
      %338 = vmatprep.subr.bf16.mxu0 0
      %339 = vmatpush2.bf16.msra.mxu0 0
      %340 = vmatprep.subr.bf16.mxu0 0
      %341 = vmatpush2.bf16.msra.mxu0 0
      %342 = vmatprep.subr.bf16.mxu0 0
      %343 = vmatpush2.bf16.msra.mxu0 0
      %344 = vmatprep.subr.bf16.mxu0 0
      %345 = vmatpush2.bf16.msra.mxu0 0
      %346 = vmatprep.subr.bf16.mxu0 0
      %347 = vmatpush2.bf16.msra.mxu0 0
      %348 = vmatprep.subr.bf16.mxu0 0
      %349 = vmatpush2.bf16.msra.mxu0 0
      %350 = vmatprep.subr.bf16.mxu0 0
      %351 = vmatpush2.bf16.msra.mxu0 0
      %352 = vmatprep.subr.bf16.mxu0 0
      %353 = vmatpush2.bf16.msra.mxu0 0
      %354 = vmatprep.mubr.bf16.mxu0 0
      %355 = vmatmul.mubr.bf16.gmra.mxu0 %v320
      %v356 = vpop.f32.mrf.mxu0
      %v357 = vadd.f32 %v304, %v356
      %v358 = vpop.f32.mrf.mxu0
      %v359 = vpop.f32.mrf.mxu0
      %v360 = vadd.f32 %v304, %v359
      %v361 = vpop.f32.mrf.mxu0
      %362 = vdwg.mxu0
      %v363 = vpack.c.bf16 %v360, %v357
      %v365 = vunpack.c.l.b16 %v363
      %v366 = vunpack.c.h.b16 %v363
      %v367 = vpack.c.b16 %v365, %v365
      %v368 = vpack.c.b16 %v366, %v366
      %vm371 = vcmask 125952
      %372 = vst.msk [vmem:[%s226] sm:$0xf] %vm371, %v367
      %373 = vst.msk [vmem:[%s226 + $0x4] sm:$0xf] %vm371, %v368
      %s374 = smul.u32 2, %s16
      %p375 = scmp.lt.s32.totalorder %s374, 31
      %s376 = scalar_select %p375, %s374, 31
      %s377 = smul.addr %s376, 4
      %s378 = scalar_lea.vmem %s5, %s377
      // Predicated region
      $region41: #{dehnn_forward.6} parent=39 // pred_check
        %p379 = pneg %p144
      $region42: #{dehnn_forward.6} parent=39 // pred_check_branch
        %381 = sbr.rel (%p379) target = $region44
      $region43: #{dehnn_forward.6} parent=39 // pred_region
        %s382 = smul.u32 2, %s16
      $region44: #{dehnn_forward.6} parent=39 // pred_fallthru
        _
    $region40: #{dehnn_forward.6} parent=5 // pred_fallthru
      _
    %p383 = scmp.le.s32.totalorder 2, %s11
    // Predicated region
    $region45: #{dehnn_forward.6} parent=5 // pred_check
      %p384 = pneg %p383
    $region46: #{dehnn_forward.6} parent=5 // pred_check_branch
      %386 = sbr.rel (%p384) target = $region48
    $region47: #{dehnn_forward.6} parent=5 // pred_region
      %s387 = ssub.s32 %s11, 2
      // Predicated region
      $region49: #{dehnn_forward.6} parent=47 // pred_check
        %p388 = pneg %p150
      $region50: #{dehnn_forward.6} parent=47 // pred_check_branch
        %390 = sbr.rel (%p388) target = $region52
      $region51: #{dehnn_forward.6} parent=47 // pred_region
        %s391 = smul.u32 2, %s17
        %p392 = scmp.lt.s32.totalorder %s391, 31
        %s393 = scalar_select %p392, %s391, 31
        %s394 = smul.addr %s393, 4
        %s395 = scalar_lea.vmem %s5, %s394
      $region52: #{dehnn_forward.6} parent=47 // pred_fallthru
        _
    $region48: #{dehnn_forward.6} parent=5 // pred_fallthru
      _
  $region6: #{dehnn_forward.6} parent=0 // loop_footer
    %s15 = sadd.s32 1, %s11
  $region7: #{dehnn_forward.6} parent=0 // loop_footer_branch
    %10 = sbr.rel target = $region3
  $region8: #{dehnn_forward.6} parent=0 // loop_exit
    _

// kernel: dehnn_forward.9
$region0: #{dehnn_forward.9}
  #allocation0 [shape = 'u32[]', space=smem, size = 0x4, offset = 0x4, fixed_abs, tag = 'smem constant byte address 0x4 - core index']
  #allocation1 [shape = 'u32[144,128]{1,0:T(1,128)}', space=vmem, size = 0x12000, scoped, tag = 'internal scratch']
  %s0 = inlined_call_operand.vmem [shape: bf16[256,256], index: 0, kind: input, shape index: {}]
  %s1 = inlined_call_operand.vmem [shape: bf16[256,16], index: 1, kind: input, shape index: {}]
  %s2 = inlined_call_operand.vmem [shape: bf16[256,5], index: 2, kind: input, shape index: {}]
  %s3 = inlined_call_operand.vmem [shape: bf16[5,16], index: 3, kind: input, shape index: {}]
  %s4 = inlined_call_operand.vmem [shape: f32[256,16], index: 4, kind: output, shape index: {}]
  %s5 = sld [smem:[#allocation0]]
  $region94: #{dehnn_forward.9} parent=0
    _
  %s7 = ssub.s32 1, %s5
  %s8 = scalar_select 0, %s7, %s5
  $region1: #{dehnn_forward.9} parent=0
    #allocation2 [shape = 'u8[8192]{0}', space=vmem, size = 0x2000, scoped, tag = 'input window, operand 0']
    loop: start=0, step=1, limit=34
    $region2: #{dehnn_forward.9} parent=1 // loop_pre_header
      _
    $region3: #{dehnn_forward.9} parent=1 // loop_header
      %s10 = sphi 0, %s14
      %p11 = scmp.ge.s32.totalorder %s10, 34
      %s17 = sphi 0, %s29
      %s18 = sphi 0, %s25
      %s19 = sphi 0, %s17
      %s20 = sphi 0, %s18
      %s21 = sphi 0, %s19
      %s22 = sphi 0, %s20
      %s34 = sphi 0, %s36
      %s37 = sphi 0, %s34
      %s38 = sphi 0, %s37
      %s54 = sphi 0, %s38
      %s60 = sphi 0, %s62
      %s63 = sphi 0, %s60
      %s64 = sphi 0, %s63
      %s80 = sphi 0, %s64
      %s86 = sphi 0, %s88
      %s89 = sphi 0, %s86
      %s90 = sphi 0, %s89
      %s106 = sphi 0, %s90
      %s110 = sphi 0, %s110
      %s112 = sphi 0, %s110
      %s113 = sphi 0, %s112
      %s127 = sphi 0, %s113
      %s133 = sphi 0, %s135
      %s136 = sphi 0, %s133
      %s137 = sphi 0, %s136
      %s153 = sphi 0, %s137
    $region4: #{dehnn_forward.9} parent=1 // loop_header_branch
      %13 = sbr.rel (%p11) target = $region8
    $region5: #{dehnn_forward.9} parent=1 // loop_body
      %s15 = ssub.s32 %s10, 1
      %s16 = ssub.s32 %s10, 2
      %s23 = sadd.s32 1, %s18
      %p24 = scmp.ge.s32.totalorder %s23, 2
      %s25 = scalar_select %p24, 0, %s23
      %s26 = sadd.s32 1, %s17
      %s27 = scalar_select %p24, %s26, %s17
      %p28 = scmp.ge.s32.totalorder %s27, 16
      %s29 = scalar_select %p28, 0, %s27
      %s30 = ssub.s32 %s17, %s29
      %s31 = ssub.s32 %s18, %s25
      %s32 = sor.u32 %s30, %s31
      %p33 = scmp.eq.s32.totalorder %s32, 0
      %s35 = sadd.s32 %s34, 1
      %s36 = scalar_select %p33, %s34, %s35
      %p39 = pneg %p33
      %p40 = scmp.eq.s32.totalorder %s10, 31
      %p41 = por %p39, %p40
      %p42 = scmp.ne.s32.totalorder %s34, %s37
      %p43 = scmp.eq.s32.totalorder %s10, 0
      %p44 = por %p42, %p43
      %p45 = scmp.ne.s32.totalorder %s34, %s37
      %p46 = scmp.eq.s32.totalorder %s15, 31
      %p47 = por %p45, %p46
      %p48 = scmp.ne.s32.totalorder %s37, %s38
      %p49 = scmp.eq.s32.totalorder %s15, 0
      %p50 = por %p48, %p49
      %p51 = scmp.ne.s32.totalorder %s37, %s38
      %p52 = scmp.eq.s32.totalorder %s16, 31
      %p53 = por %p51, %p52
      %p55 = scmp.ne.s32.totalorder %s38, %s54
      %p56 = scmp.eq.s32.totalorder %s16, 0
      %p57 = por %p55, %p56
      %s58 = ssub.s32 %s18, %s25
      %p59 = scmp.eq.s32.totalorder %s58, 0
      %s61 = sadd.s32 %s60, 1
      %s62 = scalar_select %p59, %s60, %s61
      %p65 = pneg %p59
      %p66 = scmp.eq.s32.totalorder %s10, 31
      %p67 = por %p65, %p66
      %p68 = scmp.ne.s32.totalorder %s60, %s63
      %p69 = scmp.eq.s32.totalorder %s10, 0
      %p70 = por %p68, %p69
      %p71 = scmp.ne.s32.totalorder %s60, %s63
      %p72 = scmp.eq.s32.totalorder %s15, 31
      %p73 = por %p71, %p72
      %p74 = scmp.ne.s32.totalorder %s63, %s64
      %p75 = scmp.eq.s32.totalorder %s15, 0
      %p76 = por %p74, %p75
      %p77 = scmp.ne.s32.totalorder %s63, %s64
      %p78 = scmp.eq.s32.totalorder %s16, 31
      %p79 = por %p77, %p78
      %p81 = scmp.ne.s32.totalorder %s64, %s80
      %p82 = scmp.eq.s32.totalorder %s16, 0
      %p83 = por %p81, %p82
      %s84 = ssub.s32 %s17, %s29
      %p85 = scmp.eq.s32.totalorder %s84, 0
      %s87 = sadd.s32 %s86, 1
      %s88 = scalar_select %p85, %s86, %s87
      %p91 = pneg %p85
      %p92 = scmp.eq.s32.totalorder %s10, 31
      %p93 = por %p91, %p92
      %p94 = scmp.ne.s32.totalorder %s86, %s89
      %p95 = scmp.eq.s32.totalorder %s10, 0
      %p96 = por %p94, %p95
      %p97 = scmp.ne.s32.totalorder %s86, %s89
      %p98 = scmp.eq.s32.totalorder %s15, 31
      %p99 = por %p97, %p98
      %p100 = scmp.ne.s32.totalorder %s89, %s90
      %p101 = scmp.eq.s32.totalorder %s15, 0
      %p102 = por %p100, %p101
      %p103 = scmp.ne.s32.totalorder %s89, %s90
      %p104 = scmp.eq.s32.totalorder %s16, 31
      %p105 = por %p103, %p104
      %p107 = scmp.ne.s32.totalorder %s90, %s106
      %p108 = scmp.eq.s32.totalorder %s16, 0
      %p109 = por %p107, %p108
      %s111 = sadd.s32 %s110, 1
      %p114 = scmp.eq.s32.totalorder %s10, 31
      %p115 = scmp.ne.s32.totalorder %s110, %s112
      %p116 = scmp.eq.s32.totalorder %s10, 0
      %p117 = por %p115, %p116
      %p118 = scmp.ne.s32.totalorder %s110, %s112
      %p119 = scmp.eq.s32.totalorder %s15, 31
      %p120 = por %p118, %p119
      %p121 = scmp.ne.s32.totalorder %s112, %s113
      %p122 = scmp.eq.s32.totalorder %s15, 0
      %p123 = por %p121, %p122
      %p124 = scmp.ne.s32.totalorder %s112, %s113
      %p125 = scmp.eq.s32.totalorder %s16, 31
      %p126 = por %p124, %p125
      %p128 = scmp.ne.s32.totalorder %s113, %s127
      %p129 = scmp.eq.s32.totalorder %s16, 0
      %p130 = por %p128, %p129
      %s131 = ssub.s32 %s17, %s29
      %p132 = scmp.eq.s32.totalorder %s131, 0
      %s134 = sadd.s32 %s133, 1
      %s135 = scalar_select %p132, %s133, %s134
      %p138 = pneg %p132
      %p139 = scmp.eq.s32.totalorder %s10, 31
      %p140 = por %p138, %p139
      %p141 = scmp.ne.s32.totalorder %s133, %s136
      %p142 = scmp.eq.s32.totalorder %s10, 0
      %p143 = por %p141, %p142
      %p144 = scmp.ne.s32.totalorder %s133, %s136
      %p145 = scmp.eq.s32.totalorder %s15, 31
      %p146 = por %p144, %p145
      %p147 = scmp.ne.s32.totalorder %s136, %s137
      %p148 = scmp.eq.s32.totalorder %s15, 0
      %p149 = por %p147, %p148
      %p150 = scmp.ne.s32.totalorder %s136, %s137
      %p151 = scmp.eq.s32.totalorder %s16, 31
      %p152 = por %p150, %p151
      %p154 = scmp.ne.s32.totalorder %s137, %s153
      %p155 = scmp.eq.s32.totalorder %s16, 0
      %p156 = por %p154, %p155
      %p157 = scmp.le.s32.totalorder 1, %s10
      %p158 = scmp.lt.s32.totalorder %s10, 33
      %p159 = pnand %p157, %p158
      %p160 = pneg %p159
      // Predicated region
      $region9: #{dehnn_forward.9} parent=5 // pred_check
        _
      $region10: #{dehnn_forward.9} parent=5 // pred_check_branch
        %162 = sbr.rel (%p159) target = $region12
      $region11: #{dehnn_forward.9} parent=5 // pred_region
        %s163 = ssub.s32 %s10, 1
        // Predicated region
        $region13: #{dehnn_forward.9} parent=11 // pred_check
          %p164 = pneg %p123
        $region14: #{dehnn_forward.9} parent=11 // pred_check_branch
          %166 = sbr.rel (%p164) target = $region16
        $region15: #{dehnn_forward.9} parent=11 // pred_region
          _
        $region16: #{dehnn_forward.9} parent=11 // pred_fallthru
          _
      $region12: #{dehnn_forward.9} parent=5 // pred_fallthru
        _
      %p167 = scmp.lt.s32.totalorder %s10, 32
      // Predicated region
      $region17: #{dehnn_forward.9} parent=5 // pred_check
        %p168 = pneg %p167
      $region18: #{dehnn_forward.9} parent=5 // pred_check_branch
        %170 = sbr.rel (%p168) target = $region20
      $region19: #{dehnn_forward.9} parent=5 // pred_region
        // Predicated region
        $region21: #{dehnn_forward.9} parent=19 // pred_check
          %p171 = pneg %p44
        $region22: #{dehnn_forward.9} parent=19 // pred_check_branch
          %173 = sbr.rel (%p171) target = $region24
        $region23: #{dehnn_forward.9} parent=19 // pred_region
          %s174 = sand.u32 %s34, 1
          %s175 = sand.u32 %s34, 1
          %s176 = smul.addr %s175, 8
          %s177 = scalar_lea.vmem [#allocation2], %s176
          %s178 = smul.u32 2, %s17
          %s179 = smul.addr %s178, 2
          %s180 = sadd.s32 %s18, %s179
          %s181 = smul.addr %s180, 4
          %s182 = scalar_lea.vmem %s0, %s181
          // Predicated region
          $region25: #{dehnn_forward.9} parent=23 // pred_check
            _
          $region26: #{dehnn_forward.9} parent=23 // pred_check_branch
            %184 = sbr.rel (0) target = $region28
          $region27: #{dehnn_forward.9} parent=23 // pred_region
            // Predicated region
            $region29: #{dehnn_forward.9} parent=27 // pred_check
              _
            $region30: #{dehnn_forward.9} parent=27 // pred_check_branch
              %186 = sbr.rel target = $region32
            $region31: #{dehnn_forward.9} parent=27 // pred_region
              // Predicated region
              $region44: #{dehnn_forward.9} parent=31 // pred_check
                _
              $region45: #{dehnn_forward.9} parent=31 // pred_check_branch
                %204 = sbr.rel (0) target = $region47
              $region46: #{dehnn_forward.9} parent=31 // pred_region
                loop: start=0, step=1, limit=1
                $region48: #{dehnn_forward.9} parent=46 // loop_pre_header
                  _
                $region49: #{dehnn_forward.9} parent=46 // loop_header
                  %s206 = sphi 0, %s210
                  %p207 = scmp.ge.s32.totalorder %s206, 1
                  %s211 = sphi %s182, %s182
                  %s212 = sphi %s177, %s177
                $region50: #{dehnn_forward.9} parent=46 // loop_header_branch
                  %209 = sbr.rel (%p207) target = $region54
                $region51: #{dehnn_forward.9} parent=46 // loop_body
                  _
                $region52: #{dehnn_forward.9} parent=46 // loop_footer
                  %s210 = sadd.s32 1, %s206
                $region53: #{dehnn_forward.9} parent=46 // loop_footer_branch
                  %205 = sbr.rel target = $region49
                $region54: #{dehnn_forward.9} parent=46 // loop_exit
                  _
                %s214 = ssub.s32 16, 1
                loop: start=0, step=1, limit=1
                $region55: #{dehnn_forward.9} parent=46 // loop_pre_header
                  _
                $region56: #{dehnn_forward.9} parent=46 // loop_header
                  %s216 = sphi 0, %s220
                  %p217 = scmp.ge.s32.totalorder %s216, 1
                  %s221 = sphi %s182, %s182
                  %s222 = sphi %s177, %s177
                $region57: #{dehnn_forward.9} parent=46 // loop_header_branch
                  %219 = sbr.rel (%p217) target = $region61
                $region58: #{dehnn_forward.9} parent=46 // loop_body
                  %v223 = vld [vmem:[%s221] sm:%s214]
                  %224 = vst [vmem:[%s222] sm:%s214] %v223
                  %v225 = vld [vmem:[%s221 + $0x8] sm:%s214]
                  %226 = vst [vmem:[%s222 + $0x4] sm:%s214] %v225
                $region59: #{dehnn_forward.9} parent=46 // loop_footer
                  %s220 = sadd.s32 1, %s216
                $region60: #{dehnn_forward.9} parent=46 // loop_footer_branch
                  %215 = sbr.rel target = $region56
                $region61: #{dehnn_forward.9} parent=46 // loop_exit
                  _
              $region47: #{dehnn_forward.9} parent=31 // pred_fallthru
                _
            $region32: #{dehnn_forward.9} parent=27 // pred_fallthru
              _
            // Predicated region
            $region33: #{dehnn_forward.9} parent=27 // pred_check
              _
            $region34: #{dehnn_forward.9} parent=27 // pred_check_branch
              %188 = sbr.rel (0) target = $region36
            $region35: #{dehnn_forward.9} parent=27 // pred_region
              %s190 = ssub.s32 16, 1
              loop: start=0, step=1, limit=1
              $region37: #{dehnn_forward.9} parent=35 // loop_pre_header
                _
              $region38: #{dehnn_forward.9} parent=35 // loop_header
                %s192 = sphi 0, %s196
                %p193 = scmp.ge.s32.totalorder %s192, 1
                %s197 = sphi %s182, %s182
                %s198 = sphi %s177, %s177
              $region39: #{dehnn_forward.9} parent=35 // loop_header_branch
                %195 = sbr.rel (%p193) target = $region43
              $region40: #{dehnn_forward.9} parent=35 // loop_body
                %v199 = vld [vmem:[%s197] sm:%s190]
                %200 = vst [vmem:[%s198] sm:%s190] %v199
                %v201 = vld [vmem:[%s197 + $0x8] sm:%s190]
                %202 = vst [vmem:[%s198 + $0x4] sm:%s190] %v201
              $region41: #{dehnn_forward.9} parent=35 // loop_footer
                %s196 = sadd.s32 1, %s192
              $region42: #{dehnn_forward.9} parent=35 // loop_footer_branch
                %191 = sbr.rel target = $region38
              $region43: #{dehnn_forward.9} parent=35 // loop_exit
                _
            $region36: #{dehnn_forward.9} parent=27 // pred_fallthru
              _
          $region28: #{dehnn_forward.9} parent=23 // pred_fallthru
            _
          %227 = vnop
        $region24: #{dehnn_forward.9} parent=19 // pred_fallthru
          _
        // Predicated region
        $region62: #{dehnn_forward.9} parent=19 // pred_check
          %p228 = pneg %p70
        $region63: #{dehnn_forward.9} parent=19 // pred_check_branch
          %230 = sbr.rel (%p228) target = $region65
        $region64: #{dehnn_forward.9} parent=19 // pred_region
          %s231 = smul.u32 16, %s18
          %p232 = scmp.lt.s32.totalorder %s231, 31
          %s233 = scalar_select %p232, %s231, 31
          %s234 = smul.addr %s233, 4
          %s235 = scalar_lea.vmem %s1, %s234
          %s236 = smul.u32 16, %s18
        $region65: #{dehnn_forward.9} parent=19 // pred_fallthru
          _
        // Predicated region
        $region66: #{dehnn_forward.9} parent=19 // pred_check
          %p237 = pneg %p96
        $region67: #{dehnn_forward.9} parent=19 // pred_check_branch
          %239 = sbr.rel (%p237) target = $region69
        $region68: #{dehnn_forward.9} parent=19 // pred_region
          %s240 = smul.u32 2, %s17
          %p241 = scmp.lt.s32.totalorder %s240, 31
          %s242 = scalar_select %p241, %s240, 31
          %s243 = smul.addr %s242, 4
          %s244 = scalar_lea.vmem %s2, %s243
          %s245 = smul.u32 2, %s17
        $region69: #{dehnn_forward.9} parent=19 // pred_fallthru
          _
      $region20: #{dehnn_forward.9} parent=5 // pred_fallthru
        _
      %p246 = scmp.le.s32.totalorder 1, %s10
      %p247 = scmp.lt.s32.totalorder %s10, 33
      %p248 = pnand %p246, %p247
      %p249 = pneg %p248
      // Predicated region
      $region70: #{dehnn_forward.9} parent=5 // pred_check
        _
      $region71: #{dehnn_forward.9} parent=5 // pred_check_branch
        %251 = sbr.rel (%p248) target = $region73
      $region72: #{dehnn_forward.9} parent=5 // pred_region
        %s252 = ssub.s32 %s10, 1
        %s253 = sand.u32 %s37, 1
        %s254 = sand.u32 %s37, 1
        %s255 = smul.addr %s254, 8
        %s256 = scalar_lea.vmem [#allocation2], %s255
        // Predicated region
        $region74: #{dehnn_forward.9} parent=72 // pred_check
          %p257 = pneg %p50
        $region75: #{dehnn_forward.9} parent=72 // pred_check_branch
          %259 = sbr.rel (%p257) target = $region77
        $region76: #{dehnn_forward.9} parent=72 // pred_region
          _
        $region77: #{dehnn_forward.9} parent=72 // pred_fallthru
          _
        %s260 = sand.u32 %s37, 1
        %s261 = sand.u32 %s37, 1
        %s262 = smul.addr %s261, 8
        %s263 = scalar_lea.vmem [#allocation2], %s262
        %p264 = pneg %p50
        %p265 = pneg %p47
        %s266 = smul.u32 16, %s20
        %p267 = scmp.lt.s32.totalorder %s266, 31
        %s268 = scalar_select %p267, %s266, 31
        %s269 = smul.addr %s268, 4
        %s270 = scalar_lea.vmem %s1, %s269
        %p271 = pneg %p76
        %p272 = pneg %p73
        %s273 = smul.u32 2, %s19
        %p274 = scmp.lt.s32.totalorder %s273, 31
        %s275 = scalar_select %p274, %s273, 31
        %s276 = smul.addr %s275, 4
        %s277 = scalar_lea.vmem %s2, %s276
        %p278 = pneg %p102
        %p279 = pneg %p99
        %p280 = pneg %p123
        %p281 = pneg %p120
        %p282 = pneg %p149
        %p283 = pneg %p146
        %s284 = smul.u32 2, %s19
        %p285 = scmp.lt.s32.totalorder %s284, 31
        %s286 = scalar_select %p285, %s284, 31
        %s287 = smul.addr %s286, 8
        %s288 = scalar_lea.vmem %s4, %s287
        %s289 = smul.u32 2, %s19
        %s290 = smul.u32 16, %s20
        %p291 = scmp.lt.s32.totalorder %s290, 31
        %s292 = scalar_select %p291, %s290, 31
        %s293 = smul.addr %s292, 4
        %s294 = scalar_lea.vmem %s1, %s293
        %s295 = smul.u32 16, %s20
        %s296 = smul.u32 2, %s19
        %p297 = scmp.lt.s32.totalorder %s296, 31
        %s298 = scalar_select %p297, %s296, 31
        %s299 = smul.addr %s298, 4
        %s300 = scalar_lea.vmem %s2, %s299
        %s301 = smul.u32 2, %s19
        %s302 = smul.u32 2, %s19
        %p303 = scmp.lt.s32.totalorder %s302, 31
        %s304 = scalar_select %p303, %s302, 31
        %s305 = smul.addr %s304, 8
        %s306 = scalar_lea.vmem %s4, %s305
        %s307 = smul.u32 2, %s19
        %p309 = scmp.eq.s32.totalorder %s20, 0
        // Predicated region
        $region78: #{dehnn_forward.9} parent=72 // pred_check
          %p310 = pneg %p309
        $region79: #{dehnn_forward.9} parent=72 // pred_check_branch
          %312 = sbr.rel (%p310) target = $region81
        $region80: #{dehnn_forward.9} parent=72 // pred_region
          %v313 = vld [vmem:[%s300] sm:$0xf]
          %v314 = vld [vmem:[%s300 + $0x4] sm:$0xf]
          %v315 = vld [vmem:[%s3] sm:$0x7]
          %v318 = vunpack.c.l.b16 %v313
          %v319 = vunpack.c.l.b16 %v314
          %v320 = vpack.c.b16 %v319, %v318
          %vm321 = vcmask 39936
          %v323 = vsel %vm321, %v320, 0
          %vm325 = vcmask 1041408
          %vm326 = vcmask 1042432
          %v327 = vsel %vm325, 4294967295, 65535
          %v328 = vsel %vm326, %v327, 0
          %v330 = vand.u32 %v315, %v328
          %332 = vmatprep.subr.bf16.mxu0 0
          %333 = vmatpush1.bf16.msra.mxu0 0
          %334 = vmatprep.subr.bf16.mxu0 0
          %335 = vmatpush1.bf16.msra.mxu0 0
          %336 = vmatprep.subr.bf16.mxu0 0
          %337 = vmatpush1.bf16.msra.mxu0 0
          %338 = vmatprep.subr.bf16.mxu0 0
          %339 = vmatpush1.bf16.msra.mxu0 0
          %340 = vmatprep.subr.bf16.mxu0 0
          %341 = vmatpush1.bf16.msra.mxu0 0
          %342 = vmatprep.subr.bf16.mxu0 0
          %343 = vmatpush1.bf16.msra.mxu0 0
          %344 = vmatprep.subr.bf16.mxu0 0
          %345 = vmatpush1.bf16.msra.mxu0 0
          %346 = vmatprep.subr.bf16.mxu0 0
          %347 = vmatpush1.bf16.msra.mxu0 %v330
          %348 = vmatprep.subr.bf16.mxu0 0
          %349 = vmatpush2.bf16.msra.mxu0 0
          %350 = vmatprep.subr.bf16.mxu0 0
          %351 = vmatpush2.bf16.msra.mxu0 0
          %352 = vmatprep.subr.bf16.mxu0 0
          %353 = vmatpush2.bf16.msra.mxu0 0
          %354 = vmatprep.subr.bf16.mxu0 0
          %355 = vmatpush2.bf16.msra.mxu0 0
          %356 = vmatprep.subr.bf16.mxu0 0
          %357 = vmatpush2.bf16.msra.mxu0 0
          %358 = vmatprep.subr.bf16.mxu0 0
          %359 = vmatpush2.bf16.msra.mxu0 0
          %360 = vmatprep.subr.bf16.mxu0 0
          %361 = vmatpush2.bf16.msra.mxu0 0
          %362 = vmatprep.subr.bf16.mxu0 0
          %363 = vmatpush2.bf16.msra.mxu0 0
          %364 = vmatprep.mubr.bf16.mxu0 0
          %365 = vmatmul.mubr.bf16.gmra.mxu0 %v323
          %v366 = vpop.f32.mrf.mxu0
          %v367 = vadd.f32 0.0, %v366
          %v368 = vpop.f32.mrf.mxu0
          %v369 = vpop.f32.mrf.mxu0
          %v370 = vadd.f32 0.0, %v369
          %v371 = vpop.f32.mrf.mxu0
          %372 = vdwg.mxu0
          %vm373 = vcmask 130048
          %374 = vst.msk [vmem:[%s306] sm:$0xff] %vm373, %v367
          %375 = vst.msk [vmem:[%s306 + $0x8] sm:$0xff] %vm373, %v370
        $region81: #{dehnn_forward.9} parent=72 // pred_fallthru
          _
        %v376 = vld [vmem:[%s306] sm:$0xff]
        %v377 = vld [vmem:[%s306 + $0x8] sm:$0xff]
        %v378 = vld [vmem:[%s256] sm:$0xf]
        %v379 = vld [vmem:[%s256 + $0x4] sm:$0xf]
        %v380 = vld [vmem:[%s294] sm:$0xf]
        %v381 = vld [vmem:[%s294 + $0x4] sm:$0xf]
        %v382 = vld [vmem:[%s294 + $0x8] sm:$0xf]
        %v383 = vld [vmem:[%s294 + $0xc] sm:$0xf]
        %v384 = vld [vmem:[%s294 + $0x10] sm:$0xf]
        %v385 = vld [vmem:[%s294 + $0x14] sm:$0xf]
        %v386 = vld [vmem:[%s294 + $0x18] sm:$0xf]
        %v387 = vld [vmem:[%s294 + $0x1c] sm:$0xf]
        %v388 = vld [vmem:[%s294 + $0x20] sm:$0xf]
        %v389 = vld [vmem:[%s294 + $0x24] sm:$0xf]
        %v390 = vld [vmem:[%s294 + $0x28] sm:$0xf]
        %v391 = vld [vmem:[%s294 + $0x2c] sm:$0xf]
        %v392 = vld [vmem:[%s294 + $0x30] sm:$0xf]
        %v393 = vld [vmem:[%s294 + $0x34] sm:$0xf]
        %v394 = vld [vmem:[%s294 + $0x38] sm:$0xf]
        %v395 = vld [vmem:[%s294 + $0x3c] sm:$0xf]
        %v398 = vunpack.c.l.b16 %v378
        %v399 = vunpack.c.l.b16 %v379
        %v400 = vpack.c.b16 %v399, %v398
        %v418 = vunpack.c.l.b16 %v380
        %v419 = vunpack.c.l.b16 %v381
        %v420 = vunpack.c.l.b16 %v382
        %v421 = vunpack.c.l.b16 %v383
        %v422 = vunpack.c.l.b16 %v384
        %v423 = vunpack.c.l.b16 %v385
        %v424 = vunpack.c.l.b16 %v386
        %v425 = vunpack.c.l.b16 %v387
        %v426 = vunpack.c.l.b16 %v388
        %v427 = vunpack.c.l.b16 %v389
        %v428 = vunpack.c.l.b16 %v390
        %v429 = vunpack.c.l.b16 %v391
        %v430 = vunpack.c.l.b16 %v392
        %v431 = vunpack.c.l.b16 %v393
        %v432 = vunpack.c.l.b16 %v394
        %v433 = vunpack.c.l.b16 %v395
        %v434 = vpack.c.b16 %v419, %v418
        %v435 = vpack.c.b16 %v421, %v420
        %v436 = vpack.c.b16 %v423, %v422
        %v437 = vpack.c.b16 %v425, %v424
        %v438 = vpack.c.b16 %v427, %v426
        %v439 = vpack.c.b16 %v429, %v428
        %v440 = vpack.c.b16 %v431, %v430
        %v441 = vpack.c.b16 %v433, %v432
        %450 = vmatprep.subr.bf16.mxu0 0
        %451 = vmatpush1.bf16.msra.mxu0 %v441
        %452 = vmatprep.subr.bf16.mxu0 0
        %453 = vmatpush1.bf16.msra.mxu0 %v440
        %454 = vmatprep.subr.bf16.mxu0 0
        %455 = vmatpush1.bf16.msra.mxu0 %v439
        %456 = vmatprep.subr.bf16.mxu0 0
        %457 = vmatpush1.bf16.msra.mxu0 %v438
        %458 = vmatprep.subr.bf16.mxu0 0
        %459 = vmatpush1.bf16.msra.mxu0 %v437
        %460 = vmatprep.subr.bf16.mxu0 0
        %461 = vmatpush1.bf16.msra.mxu0 %v436
        %462 = vmatprep.subr.bf16.mxu0 0
        %463 = vmatpush1.bf16.msra.mxu0 %v435
        %464 = vmatprep.subr.bf16.mxu0 0
        %465 = vmatpush1.bf16.msra.mxu0 %v434
        %466 = vmatprep.subr.bf16.mxu0 0
        %467 = vmatpush2.bf16.msra.mxu0 0
        %468 = vmatprep.subr.bf16.mxu0 0
        %469 = vmatpush2.bf16.msra.mxu0 0
        %470 = vmatprep.subr.bf16.mxu0 0
        %471 = vmatpush2.bf16.msra.mxu0 0
        %472 = vmatprep.subr.bf16.mxu0 0
        %473 = vmatpush2.bf16.msra.mxu0 0
        %474 = vmatprep.subr.bf16.mxu0 0
        %475 = vmatpush2.bf16.msra.mxu0 0
        %476 = vmatprep.subr.bf16.mxu0 0
        %477 = vmatpush2.bf16.msra.mxu0 0
        %478 = vmatprep.subr.bf16.mxu0 0
        %479 = vmatpush2.bf16.msra.mxu0 0
        %480 = vmatprep.subr.bf16.mxu0 0
        %481 = vmatpush2.bf16.msra.mxu0 0
        %482 = vmatprep.mubr.bf16.mxu0 0
        %483 = vmatmul.mubr.bf16.gmra.mxu0 %v400
        %v484 = vpop.f32.mrf.mxu0
        %v485 = vadd.f32 0.0, %v484
        %v486 = vpop.f32.mrf.mxu0
        %v487 = vpop.f32.mrf.mxu0
        %v488 = vadd.f32 0.0, %v487
        %v489 = vpop.f32.mrf.mxu0
        %490 = vdwg.mxu0
        %v491 = vadd.f32 %v376, %v485
        %v492 = vadd.f32 %v377, %v488
        %vm493 = vcmask 130048
        %494 = vst.msk [vmem:[%s306] sm:$0xff] %vm493, %v491
        %495 = vst.msk [vmem:[%s306 + $0x8] sm:$0xff] %vm493, %v492
        %s496 = smul.u32 2, %s19
        %p497 = scmp.lt.s32.totalorder %s496, 31
        %s498 = scalar_select %p497, %s496, 31
        %s499 = smul.addr %s498, 8
        %s500 = scalar_lea.vmem %s4, %s499
        // Predicated region
        $region82: #{dehnn_forward.9} parent=72 // pred_check
          %p501 = pneg %p146
        $region83: #{dehnn_forward.9} parent=72 // pred_check_branch
          %503 = sbr.rel (%p501) target = $region85
        $region84: #{dehnn_forward.9} parent=72 // pred_region
          %s504 = smul.u32 2, %s19
        $region85: #{dehnn_forward.9} parent=72 // pred_fallthru
          _
      $region73: #{dehnn_forward.9} parent=5 // pred_fallthru
        _
      %p505 = scmp.le.s32.totalorder 2, %s10
      // Predicated region
      $region86: #{dehnn_forward.9} parent=5 // pred_check
        %p506 = pneg %p505
      $region87: #{dehnn_forward.9} parent=5 // pred_check_branch
        %508 = sbr.rel (%p506) target = $region89
      $region88: #{dehnn_forward.9} parent=5 // pred_region
        %s509 = ssub.s32 %s10, 2
        // Predicated region
        $region90: #{dehnn_forward.9} parent=88 // pred_check
          %p510 = pneg %p152
        $region91: #{dehnn_forward.9} parent=88 // pred_check_branch
          %512 = sbr.rel (%p510) target = $region93
        $region92: #{dehnn_forward.9} parent=88 // pred_region
          %s513 = smul.u32 2, %s21
          %p514 = scmp.lt.s32.totalorder %s513, 31
          %s515 = scalar_select %p514, %s513, 31
          %s516 = smul.addr %s515, 8
          %s517 = scalar_lea.vmem %s4, %s516
        $region93: #{dehnn_forward.9} parent=88 // pred_fallthru
          _
      $region89: #{dehnn_forward.9} parent=5 // pred_fallthru
        _
    $region6: #{dehnn_forward.9} parent=1 // loop_footer
      %s14 = sadd.s32 1, %s10
    $region7: #{dehnn_forward.9} parent=1 // loop_footer_branch
      %9 = sbr.rel target = $region3
    $region8: #{dehnn_forward.9} parent=1 // loop_exit
      _

</llo_original>
